<compile_context>
chip_gen: v7x
topology: tpu7x:2x2x1
jax: 0.10.0
libtpu: 0.0.40
codegen_flags: <defaults>
</compile_context>

<pallas_src>
import functools

import jax
import jax.numpy as jnp
from jax.experimental import pallas as pl
from jax.experimental.pallas import tpu as pltpu


INPUT_SIZE_PROT = 1024
INPUT_SIZE_COMP = 300
HIDDEN_PROT = 32
HIDDEN_COMP = 25

XCAT_DIM = 1408                # 1024 + 300 = 1324, lane-padded to 11 * 128
H0 = 64                        # 32 + 25 = 57, padded to 64 (fused first layer)
H1 = 1024
H2 = 1024
H3 = 512

MAX_TILE_M = 512               # cap: fits v7x's 64 MiB VMEM comfortably


def _round_up(x, m):
    return (x + m - 1) // m * m


def _choose_tile_m(batch):
    """Batch tile: multiple of 16 (bf16 sublane); >=2 grid steps when possible."""
    b16 = _round_up(max(batch, 1), 16)
    if b16 <= 32:
        return b16                                  # tiny-batch / serving path
    # Aim for at least 2 grid steps so v7x's second TensorCore gets work,
    # capped at MAX_TILE_M (per-step overhead amortization vs. VMEM).
    return min(MAX_TILE_M, _round_up((b16 + 1) // 2, 16))


def _vmem_limit_bytes(tile_m, params):
    """Tight, tile-derived VMEM request (replaces the old flat 48 MiB)."""
    weight_bytes = sum(int(p.size) * p.dtype.itemsize for p in params)
    in_bytes = tile_m * XCAT_DIM * 2                       # bf16 input tile
    out_bytes = 2 * tile_m * 128 * 4                       # 2 lane-padded f32 heads
    act_f32 = tile_m * (H0 + H1 + H2 + H3) * 4             # f32 accumulators
    act_bf16 = tile_m * (H0 + H1 + H2) * 2                 # bf16 casts fed to MXU
    est = 2 * (weight_bytes + in_bytes + out_bytes) + act_f32 + act_bf16
    return int(min(48 << 20, max(20 << 20, est * 3 // 2)))


def _pcnet_kernel(x_ref,
                  wcat_ref, bcat_ref,
                  w1_ref, b1_ref,
                  w2_ref, b2_ref,
                  w3_ref, b3_ref,
                  w4_ref, b4_ref,
                  out1_ref, out2_ref):
    f32 = jnp.float32
    bf16 = jnp.bfloat16

    # Fused block-diagonal first layer: relu([xp|xc|0] @ blockdiag(wp, wc) + [bp|bc|0])
    # == [relu(fc_prot(xp)) | relu(fc_comp(xc)) | 0]           [TM,1408]@[1408,64]
    h0 = jnp.maximum(
        jnp.dot(x_ref[...], wcat_ref[...], preferred_element_type=f32) + bcat_ref[...],
        0.0).astype(bf16)

    # fc_lin1 + relu (fc_drop1: identity, eval mode)           [TM,64]@[64,1024]
    h1 = jnp.maximum(
        jnp.dot(h0, w1_ref[...], preferred_element_type=f32) + b1_ref[...],
        0.0).astype(bf16)

    # fc_lin2 + relu (fc_drop2: identity, eval mode)           [TM,1024]@[1024,1024]
    h2 = jnp.maximum(
        jnp.dot(h1, w2_ref[...], preferred_element_type=f32) + b2_ref[...],
        0.0).astype(bf16)

    # fc_lin3 + relu                                           [TM,1024]@[1024,512]
    h3 = jnp.maximum(
        jnp.dot(h2, w3_ref[...], preferred_element_type=f32) + b3_ref[...],
        0.0)                                                   # keep f32 for the head

    # fc_lin4 (output width 1): VPU broadcast-mul + lane reduce instead of an
    # N=1 MXU matmul; both heads reuse this single projection.
    z = jnp.sum(h3 * w4_ref[...].astype(f32), axis=-1, keepdims=True) + b4_ref[...]

    out1_ref[...] = jnp.maximum(z, 0.0)        # relu head
    out2_ref[...] = jax.nn.sigmoid(z)          # sigmoid head


@functools.partial(jax.jit, static_argnames=("tile_m",))
def pcnet_rdkit_forward(x_prot, x_comp, params, *, tile_m=None):
    """Fused PcNet_RDKit forward. Returns (relu_head, sigmoid_head), each (B, 1)."""
    B = x_prot.shape[0]
    if tile_m is None:
        tile_m = _choose_tile_m(B)
    B_pad = _round_up(max(B, 1), tile_m)

    # Single fused cast + concat + pad (batch -> B_pad, features 1324 -> 1408).
    xcat = jnp.concatenate(
        [x_prot.astype(jnp.bfloat16), x_comp.astype(jnp.bfloat16)], axis=1)
    xcat = jnp.pad(xcat, ((0, B_pad - B), (0, XCAT_DIM - xcat.shape[1])))

    grid = (B_pad // tile_m,)

    def const_spec(arr):
        # Constant block index => DMA'd once, VMEM-resident across grid steps.
        return pl.BlockSpec(arr.shape, lambda i: (0, 0))

    in_specs = [pl.BlockSpec((tile_m, XCAT_DIM), lambda i: (i, 0))]
    in_specs += [const_spec(p) for p in params]

    out_specs = [pl.BlockSpec((tile_m, 1), lambda i: (i, 0)),
                 pl.BlockSpec((tile_m, 1), lambda i: (i, 0))]
    out_shape = (jax.ShapeDtypeStruct((B_pad, 1), jnp.float32),
                 jax.ShapeDtypeStruct((B_pad, 1), jnp.float32))

    flops = 2 * B_pad * (XCAT_DIM * H0 + H0 * H1 + H1 * H2 + H2 * H3 + H3)
    bytes_accessed = (sum(int(p.size) * p.dtype.itemsize for p in params)
                      + int(xcat.size) * 2 + B_pad * 2 * 4)

    out1, out2 = pl.pallas_call(
        _pcnet_kernel,
        out_shape=out_shape,
        grid=grid,
        in_specs=in_specs,
        out_specs=out_specs,
        compiler_params=pltpu.CompilerParams(
            dimension_semantics=("parallel",),
            vmem_limit_bytes=_vmem_limit_bytes(tile_m, params),
        ),
        cost_estimate=pl.CostEstimate(
            flops=flops, transcendentals=B_pad, bytes_accessed=bytes_accessed),
    )(xcat, *params)

    return out1[:B], out2[:B]


def init_params(key):
    """PyTorch-style (uniform +-1/sqrt(fan_in)) init, weights stored [in, out], biases [1, out]."""
    def linear(key, fan_in, fan_out):
        kw, kb = jax.random.split(key)
        bound = 1.0 / jnp.sqrt(jnp.float32(fan_in))
        w = jax.random.uniform(kw, (fan_in, fan_out), jnp.float32, -bound, bound)
        b = jax.random.uniform(kb, (1, fan_out), jnp.float32, -bound, bound)
        return w, b

    keys = jax.random.split(key, 6)
    wp, bp = linear(keys[0], INPUT_SIZE_PROT, HIDDEN_PROT)
    wc, bc = linear(keys[1], INPUT_SIZE_COMP, HIDDEN_COMP)
    w1, b1 = linear(keys[2], HIDDEN_PROT + HIDDEN_COMP, H1)
    w2, b2 = linear(keys[3], H1, H2)
    w3, b3 = linear(keys[4], H2, H3)
    w4, b4 = linear(keys[5], H3, 1)
    return dict(wp=wp, bp=bp, wc=wc, bc=bc, w1=w1, b1=b1,
                w2=w2, b2=b2, w3=w3, b3=b3, w4=w4, b4=b4)


def prepare_params(p):
    """Kernel-ready params: bf16 weights, block-diagonal fused first layer,
    fc_lin1 row-padded 57 -> 64, W4 as a row for the VPU head.  Biases stay f32."""
    bf16 = jnp.bfloat16
    f32 = jnp.float32

    # wcat = blockdiag(wp, wc), feature axis zero-padded 1324 -> 1408.
    wcat = jnp.zeros((XCAT_DIM, H0), f32)
    wcat = wcat.at[:INPUT_SIZE_PROT, :HIDDEN_PROT].set(p["wp"])
    wcat = wcat.at[INPUT_SIZE_PROT:INPUT_SIZE_PROT + INPUT_SIZE_COMP,
                   HIDDEN_PROT:HIDDEN_PROT + HIDDEN_COMP].set(p["wc"])
    bcat = jnp.zeros((1, H0), f32)
    bcat = bcat.at[:, :HIDDEN_PROT].set(p["bp"])
    bcat = bcat.at[:, HIDDEN_PROT:HIDDEN_PROT + HIDDEN_COMP].set(p["bc"])

    # fc_lin1 weight zero-padded on the contraction axis (57 -> 64 rows).
    w1 = jnp.zeros((H0, H1), f32).at[:HIDDEN_PROT + HIDDEN_COMP].set(p["w1"])

    w4row = p["w4"].T                      # (1, 512) for the VPU head

    return (wcat.astype(bf16), bcat,
            w1.astype(bf16), p["b1"],
            p["w2"].astype(bf16), p["b2"],
            p["w3"].astype(bf16), p["b3"],
            w4row.astype(bf16), p["b4"])


def reference_forward(x_prot, x_comp, kparams):
    """Plain-JAX reference mirroring the kernel's bf16/f32 mixed-precision path."""
    (wcat, bcat, w1, b1, w2, b2, w3, b3, w4row, b4) = kparams
    f32 = jnp.float32
    bf16 = jnp.bfloat16

    xcat = jnp.concatenate([x_prot.astype(bf16), x_comp.astype(bf16)], axis=1)
    xcat = jnp.pad(xcat, ((0, 0), (0, XCAT_DIM - xcat.shape[1])))

    h0 = jnp.maximum(jnp.dot(xcat, wcat, preferred_element_type=f32) + bcat, 0.0).astype(bf16)
    h1 = jnp.maximum(jnp.dot(h0, w1, preferred_element_type=f32) + b1, 0.0).astype(bf16)
    h2 = jnp.maximum(jnp.dot(h1, w2, preferred_element_type=f32) + b2, 0.0).astype(bf16)
    h3 = jnp.maximum(jnp.dot(h2, w3, preferred_element_type=f32) + b3, 0.0)
    z = jnp.sum(h3 * w4row.astype(f32), axis=-1, keepdims=True) + b4
    return jnp.maximum(z, 0.0), jax.nn.sigmoid(z)


if __name__ == "__main__":
    key = jax.random.PRNGKey(0)
    k_prot, k_comp, k_params = jax.random.split(key, 3)

    batch = 8
    x_prot = jax.random.normal(k_prot, (batch, INPUT_SIZE_PROT), jnp.float32)
    x_comp = jax.random.normal(k_comp, (batch, INPUT_SIZE_COMP), jnp.float32)

    params = prepare_params(init_params(k_params))

    out1, out2 = pcnet_rdkit_forward(x_prot, x_comp, params)
    jax.block_until_ready((out1, out2))

    ref1, ref2 = reference_forward(x_prot, x_comp, params)

    assert out1.shape == (batch, 1) and out2.shape == (batch, 1)
    assert jnp.allclose(out1, ref1, atol=2e-3, rtol=2e-3)
    assert jnp.allclose(out2, ref2, atol=2e-3, rtol=2e-3)

    print("KERNEL_OK")
</pallas_src>

<mosaic_0001>
module attributes {stable_mosaic.version = 11 : i64} {
  func.func @_pcnet_kernel(%arg0: i32, %arg1: memref<16x1408xbf16, #tpu.memory_space<vmem>>, %arg2: memref<1408x64xbf16, #tpu.memory_space<vmem>>, %arg3: memref<1x64xf32, #tpu.memory_space<vmem>>, %arg4: memref<64x1024xbf16, #tpu.memory_space<vmem>>, %arg5: memref<1x1024xf32, #tpu.memory_space<vmem>>, %arg6: memref<1024x1024xbf16, #tpu.memory_space<vmem>>, %arg7: memref<1x1024xf32, #tpu.memory_space<vmem>>, %arg8: memref<1024x512xbf16, #tpu.memory_space<vmem>>, %arg9: memref<1x512xf32, #tpu.memory_space<vmem>>, %arg10: memref<1x512xbf16, #tpu.memory_space<vmem>>, %arg11: memref<1x1xf32, #tpu.memory_space<vmem>>, %arg12: memref<16x1xf32, #tpu.memory_space<vmem>>, %arg13: memref<16x1xf32, #tpu.memory_space<vmem>>) attributes {dimension_semantics = [#tpu.dimension_semantics<parallel>], iteration_bounds = array<i64: 1>, scalar_prefetch = 0 : i64, scratch_operands = 0 : i64, tpu.core_type = #tpu.core_type<tc>, window_params = [{transform_indices = @transform_0, window_bounds = array<i64: 16, 1408>}, {pipeline_mode = #tpu.pipeline_mode<synchronous>, transform_indices = @transform_1, window_bounds = array<i64: 1408, 64>}, {pipeline_mode = #tpu.pipeline_mode<synchronous>, transform_indices = @transform_2, window_bounds = array<i64: 1, 64>}, {pipeline_mode = #tpu.pipeline_mode<synchronous>, transform_indices = @transform_3, window_bounds = array<i64: 64, 1024>}, {pipeline_mode = #tpu.pipeline_mode<synchronous>, transform_indices = @transform_4, window_bounds = array<i64: 1, 1024>}, {pipeline_mode = #tpu.pipeline_mode<synchronous>, transform_indices = @transform_5, window_bounds = array<i64: 1024, 1024>}, {pipeline_mode = #tpu.pipeline_mode<synchronous>, transform_indices = @transform_6, window_bounds = array<i64: 1, 1024>}, {pipeline_mode = #tpu.pipeline_mode<synchronous>, transform_indices = @transform_7, window_bounds = array<i64: 1024, 512>}, {pipeline_mode = #tpu.pipeline_mode<synchronous>, transform_indices = @transform_8, window_bounds = array<i64: 1, 512>}, {pipeline_mode = #tpu.pipeline_mode<synchronous>, transform_indices = @transform_9, window_bounds = array<i64: 1, 512>}, {pipeline_mode = #tpu.pipeline_mode<synchronous>, transform_indices = @transform_10, window_bounds = array<i64: 1, 1>}, {transform_indices = @transform_11, window_bounds = array<i64: 16, 1>}, {transform_indices = @transform_12, window_bounds = array<i64: 16, 1>}]} {
    %c0 = arith.constant 0 : index
    %c0_0 = arith.constant 0 : index
    %0 = vector.load %arg1[%c0, %c0_0] : memref<16x1408xbf16, #tpu.memory_space<vmem>>, vector<16x1408xbf16>
    %c0_1 = arith.constant 0 : index
    %c0_2 = arith.constant 0 : index
    %1 = vector.load %arg2[%c0_1, %c0_2] : memref<1408x64xbf16, #tpu.memory_space<vmem>>, vector<1408x64xbf16>
    %cst = arith.constant dense<0.000000e+00> : vector<16x64xf32>
    %2 = tpu.matmul %0, %1, %cst {dimension_numbers = #tpu.dot_dimension_numbers<[1], [0], [0], [1], [0, 0, 1, 1], [], []>} : vector<16x1408xbf16>, vector<1408x64xbf16>, vector<16x64xf32> -> vector<16x64xf32>
    %c0_3 = arith.constant 0 : index
    %c0_4 = arith.constant 0 : index
    %3 = vector.load %arg3[%c0_3, %c0_4] : memref<1x64xf32, #tpu.memory_space<vmem>>, vector<1x64xf32>
    %4 = vector.broadcast %3 : vector<1x64xf32> to vector<16x64xf32>
    %5 = arith.addf %2, %4 : vector<16x64xf32>
    %cst_5 = arith.constant 0.000000e+00 : f32
    %6 = vector.broadcast %cst_5 : f32 to vector<16x64xf32>
    %7 = arith.maximumf %5, %6 : vector<16x64xf32>
    %8 = arith.truncf %7 : vector<16x64xf32> to vector<16x64xbf16>
    %c0_6 = arith.constant 0 : index
    %c0_7 = arith.constant 0 : index
    %9 = vector.load %arg4[%c0_6, %c0_7] : memref<64x1024xbf16, #tpu.memory_space<vmem>>, vector<64x1024xbf16>
    %cst_8 = arith.constant dense<0.000000e+00> : vector<16x1024xf32>
    %10 = tpu.matmul %8, %9, %cst_8 {dimension_numbers = #tpu.dot_dimension_numbers<[1], [0], [0], [1], [0, 0, 1, 1], [], []>} : vector<16x64xbf16>, vector<64x1024xbf16>, vector<16x1024xf32> -> vector<16x1024xf32>
    %c0_9 = arith.constant 0 : index
    %c0_10 = arith.constant 0 : index
    %11 = vector.load %arg5[%c0_9, %c0_10] : memref<1x1024xf32, #tpu.memory_space<vmem>>, vector<1x1024xf32>
    %12 = vector.broadcast %11 : vector<1x1024xf32> to vector<16x1024xf32>
    %13 = arith.addf %10, %12 : vector<16x1024xf32>
    %cst_11 = arith.constant 0.000000e+00 : f32
    %14 = vector.broadcast %cst_11 : f32 to vector<16x1024xf32>
    %15 = arith.maximumf %13, %14 : vector<16x1024xf32>
    %16 = arith.truncf %15 : vector<16x1024xf32> to vector<16x1024xbf16>
    %c0_12 = arith.constant 0 : index
    %c0_13 = arith.constant 0 : index
    %17 = vector.load %arg6[%c0_12, %c0_13] : memref<1024x1024xbf16, #tpu.memory_space<vmem>>, vector<1024x1024xbf16>
    %cst_14 = arith.constant dense<0.000000e+00> : vector<16x1024xf32>
    %18 = tpu.matmul %16, %17, %cst_14 {dimension_numbers = #tpu.dot_dimension_numbers<[1], [0], [0], [1], [0, 0, 1, 1], [], []>} : vector<16x1024xbf16>, vector<1024x1024xbf16>, vector<16x1024xf32> -> vector<16x1024xf32>
    %c0_15 = arith.constant 0 : index
    %c0_16 = arith.constant 0 : index
    %19 = vector.load %arg7[%c0_15, %c0_16] : memref<1x1024xf32, #tpu.memory_space<vmem>>, vector<1x1024xf32>
    %20 = vector.broadcast %19 : vector<1x1024xf32> to vector<16x1024xf32>
    %21 = arith.addf %18, %20 : vector<16x1024xf32>
    %cst_17 = arith.constant 0.000000e+00 : f32
    %22 = vector.broadcast %cst_17 : f32 to vector<16x1024xf32>
    %23 = arith.maximumf %21, %22 : vector<16x1024xf32>
    %24 = arith.truncf %23 : vector<16x1024xf32> to vector<16x1024xbf16>
    %c0_18 = arith.constant 0 : index
    %c0_19 = arith.constant 0 : index
    %25 = vector.load %arg8[%c0_18, %c0_19] : memref<1024x512xbf16, #tpu.memory_space<vmem>>, vector<1024x512xbf16>
    %cst_20 = arith.constant dense<0.000000e+00> : vector<16x512xf32>
    %26 = tpu.matmul %24, %25, %cst_20 {dimension_numbers = #tpu.dot_dimension_numbers<[1], [0], [0], [1], [0, 0, 1, 1], [], []>} : vector<16x1024xbf16>, vector<1024x512xbf16>, vector<16x512xf32> -> vector<16x512xf32>
    %c0_21 = arith.constant 0 : index
    %c0_22 = arith.constant 0 : index
    %27 = vector.load %arg9[%c0_21, %c0_22] : memref<1x512xf32, #tpu.memory_space<vmem>>, vector<1x512xf32>
    %28 = vector.broadcast %27 : vector<1x512xf32> to vector<16x512xf32>
    %29 = arith.addf %26, %28 : vector<16x512xf32>
    %cst_23 = arith.constant 0.000000e+00 : f32
    %30 = vector.broadcast %cst_23 : f32 to vector<16x512xf32>
    %31 = arith.maximumf %29, %30 : vector<16x512xf32>
    %c0_24 = arith.constant 0 : index
    %c0_25 = arith.constant 0 : index
    %32 = vector.load %arg10[%c0_24, %c0_25] : memref<1x512xbf16, #tpu.memory_space<vmem>>, vector<1x512xbf16>
    %33 = arith.extf %32 : vector<1x512xbf16> to vector<1x512xf32>
    %34 = vector.broadcast %33 : vector<1x512xf32> to vector<16x512xf32>
    %35 = arith.mulf %31, %34 : vector<16x512xf32>
    %cst_26 = arith.constant dense<0.000000e+00> : vector<16xf32>
    %36 = vector.multi_reduction <add>, %35, %cst_26 [1] : vector<16x512xf32> to vector<16xf32>
    %37 = vector.shape_cast %36 : vector<16xf32> to vector<16x1xf32>
    %c0_27 = arith.constant 0 : index
    %c0_28 = arith.constant 0 : index
    %38 = vector.load %arg11[%c0_27, %c0_28] : memref<1x1xf32, #tpu.memory_space<vmem>>, vector<1x1xf32>
    %39 = vector.broadcast %38 : vector<1x1xf32> to vector<16x1xf32>
    %40 = arith.addf %37, %39 : vector<16x1xf32>
    %cst_29 = arith.constant 0.000000e+00 : f32
    %41 = vector.broadcast %cst_29 : f32 to vector<16x1xf32>
    %42 = arith.maximumf %40, %41 : vector<16x1xf32>
    %c0_30 = arith.constant 0 : index
    %c0_31 = arith.constant 0 : index
    %43 = vector.load %arg12[%c0_30, %c0_31] : memref<16x1xf32, #tpu.memory_space<vmem>>, vector<16x1xf32>
    tpu.vector_store %arg12[%c0_30, %c0_31], %42 {strides = array<i32>} : memref<16x1xf32, #tpu.memory_space<vmem>>, vector<16x1xf32>,
    %44 = arith.negf %40 : vector<16x1xf32>
    %45 = math.exp %44 : vector<16x1xf32>
    %cst_32 = arith.constant 1.000000e+00 : f32
    %46 = vector.broadcast %cst_32 : f32 to vector<16x1xf32>
    %47 = arith.addf %46, %45 : vector<16x1xf32>
    %48 = arith.divf %46, %47 : vector<16x1xf32>
    %c0_33 = arith.constant 0 : index
    %c0_34 = arith.constant 0 : index
    %49 = vector.load %arg13[%c0_33, %c0_34] : memref<16x1xf32, #tpu.memory_space<vmem>>, vector<16x1xf32>
    tpu.vector_store %arg13[%c0_33, %c0_34], %48 {strides = array<i32>} : memref<16x1xf32, #tpu.memory_space<vmem>>, vector<16x1xf32>,
    return
  }
  func.func @transform_0(%arg0: i32) -> (i32, i32) {
    %c0_i32 = arith.constant 0 : i32
    %c0_i32_0 = arith.constant 0 : i32
    return %arg0, %c0_i32 : i32, i32
  }
  func.func @transform_1(%arg0: i32) -> (i32, i32) {
    %c0_i32 = arith.constant 0 : i32
    %c0_i32_0 = arith.constant 0 : i32
    %c0_i32_1 = arith.constant 0 : i32
    return %c0_i32, %c0_i32_0 : i32, i32
  }
  func.func @transform_2(%arg0: i32) -> (i32, i32) {
    %c0_i32 = arith.constant 0 : i32
    %c0_i32_0 = arith.constant 0 : i32
    %c0_i32_1 = arith.constant 0 : i32
    return %c0_i32, %c0_i32_0 : i32, i32
  }
  func.func @transform_3(%arg0: i32) -> (i32, i32) {
    %c0_i32 = arith.constant 0 : i32
    %c0_i32_0 = arith.constant 0 : i32
    %c0_i32_1 = arith.constant 0 : i32
    return %c0_i32, %c0_i32_0 : i32, i32
  }
  func.func @transform_4(%arg0: i32) -> (i32, i32) {
    %c0_i32 = arith.constant 0 : i32
    %c0_i32_0 = arith.constant 0 : i32
    %c0_i32_1 = arith.constant 0 : i32
    return %c0_i32, %c0_i32_0 : i32, i32
  }
  func.func @transform_5(%arg0: i32) -> (i32, i32) {
    %c0_i32 = arith.constant 0 : i32
    %c0_i32_0 = arith.constant 0 : i32
    %c0_i32_1 = arith.constant 0 : i32
    return %c0_i32, %c0_i32_0 : i32, i32
  }
  func.func @transform_6(%arg0: i32) -> (i32, i32) {
    %c0_i32 = arith.constant 0 : i32
    %c0_i32_0 = arith.constant 0 : i32
    %c0_i32_1 = arith.constant 0 : i32
    return %c0_i32, %c0_i32_0 : i32, i32
  }
  func.func @transform_7(%arg0: i32) -> (i32, i32) {
    %c0_i32 = arith.constant 0 : i32
    %c0_i32_0 = arith.constant 0 : i32
    %c0_i32_1 = arith.constant 0 : i32
    return %c0_i32, %c0_i32_0 : i32, i32
  }
  func.func @transform_8(%arg0: i32) -> (i32, i32) {
    %c0_i32 = arith.constant 0 : i32
    %c0_i32_0 = arith.constant 0 : i32
    %c0_i32_1 = arith.constant 0 : i32
    return %c0_i32, %c0_i32_0 : i32, i32
  }
  func.func @transform_9(%arg0: i32) -> (i32, i32) {
    %c0_i32 = arith.constant 0 : i32
    %c0_i32_0 = arith.constant 0 : i32
    %c0_i32_1 = arith.constant 0 : i32
    return %c0_i32, %c0_i32_0 : i32, i32
  }
  func.func @transform_10(%arg0: i32) -> (i32, i32) {
    %c0_i32 = arith.constant 0 : i32
    %c0_i32_0 = arith.constant 0 : i32
    %c0_i32_1 = arith.constant 0 : i32
    return %c0_i32, %c0_i32_0 : i32, i32
  }
  func.func @transform_11(%arg0: i32) -> (i32, i32) {
    %c0_i32 = arith.constant 0 : i32
    %c0_i32_0 = arith.constant 0 : i32
    return %arg0, %c0_i32 : i32, i32
  }
  func.func @transform_12(%arg0: i32) -> (i32, i32) {
    %c0_i32 = arith.constant 0 : i32
    %c0_i32_0 = arith.constant 0 : i32
    return %arg0, %c0_i32 : i32, i32
  }
}

</mosaic_0001>

<llo_original>
// kernel: pcnet_rdkit_forward.1
$region0: #{pcnet_rdkit_forward.1}
  #allocation0 [shape = 'u32[]', space=smem, size = 0x4, offset = 0x4, fixed_abs, tag = 'smem constant byte address 0x4 - core index']
  #allocation1 [shape = 'u32[144,128]{1,0:T(1,128)}', space=vmem, size = 0x12000, scoped, tag = 'internal scratch']
  #allocation2 [shape = 'f32[1,1]{1,0:T(1,128)S(1)}', space=vmem, size = 0x200, scoped, tag = 'scoped memory for pcnet_rdkit_forward.1']
  %s0 = inlined_call_operand.vmem [shape: bf16[16,1408], index: 0, kind: input, shape index: {}]
  %s1 = inlined_call_operand.vmem [shape: bf16[1408,64], index: 1, kind: input, shape index: {}]
  %s2 = inlined_call_operand.hbm [shape: f32[1,64], index: 2, kind: input, shape index: {}]
  %s3 = inlined_call_operand.hbm [shape: bf16[64,1024], index: 3, kind: input, shape index: {}]
  %s4 = inlined_call_operand.hbm [shape: f32[1,1024], index: 4, kind: input, shape index: {}]
  %s5 = inlined_call_operand.hbm [shape: bf16[1024,1024], index: 5, kind: input, shape index: {}]
  %s6 = inlined_call_operand.hbm [shape: f32[1,1024], index: 6, kind: input, shape index: {}]
  %s7 = inlined_call_operand.hbm [shape: bf16[1024,512], index: 7, kind: input, shape index: {}]
  %s8 = inlined_call_operand.hbm [shape: f32[1,512], index: 8, kind: input, shape index: {}]
  %s9 = inlined_call_operand.hbm [shape: bf16[1,512], index: 9, kind: input, shape index: {}]
  %s10 = inlined_call_operand.<no memory space> [shape: f32[1,1], index: 10, kind: input, shape index: {}]
  %s11 = inlined_call_operand.vmem [shape: f32[16,1], index: 11, kind: output, shape index: {0}]
  %s12 = inlined_call_operand.vmem [shape: f32[16,1], index: 12, kind: output, shape index: {1}]
  %13 = xla_tuple %s11, %s12
  %s14 = sld [smem:[#allocation0]]
  $region94: #{pcnet_rdkit_forward.1} parent=0
    _
  %s16 = ssub.s32 1, %s14
  %s17 = scalar_select 0, %s16, %s14
  %v18 = vstv %s10
  %19 = vst [vmem:[#allocation2] sm:$0x1] %v18
  $region1: #{pcnet_rdkit_forward.1} parent=0
    #allocation3 [shape = 'u8[512]{0}', space=vmem, size = 0x400, scoped, tag = 'input window, operand 2, single buffered']
    #allocation4 [shape = 's32[1]{0}', space=sflag, size = 0x4, scoped, tag = 'scoped memory for pcnet_rdkit_forward.1']
    #allocation5 [shape = 'u8[131072]{0}', space=vmem, size = 0x20000, scoped, tag = 'input window, operand 3, single buffered']
    #allocation6 [shape = 's32[1]{0}', space=sflag, size = 0x4, scoped, tag = 'scoped memory for pcnet_rdkit_forward.1']
    #allocation7 [shape = 'u8[4096]{0}', space=vmem, size = 0x1000, scoped, tag = 'input window, operand 4, single buffered']
    #allocation8 [shape = 'u8[2097152]{0}', space=vmem, size = 0x200000, scoped, tag = 'input window, operand 5, single buffered']
    #allocation9 [shape = 's32[1]{0}', space=sflag, size = 0x4, scoped, tag = 'scoped memory for pcnet_rdkit_forward.1']
    #allocation10 [shape = 'u8[4096]{0}', space=vmem, size = 0x1000, scoped, tag = 'input window, operand 6, single buffered']
    #allocation11 [shape = 'u8[1048576]{0}', space=vmem, size = 0x100000, scoped, tag = 'input window, operand 7, single buffered']
    #allocation12 [shape = 's32[1]{0}', space=sflag, size = 0x4, scoped, tag = 'scoped memory for pcnet_rdkit_forward.1']
    #allocation13 [shape = 'u8[2048]{0}', space=vmem, size = 0x800, scoped, tag = 'input window, operand 8, single buffered']
    #allocation14 [shape = 'u8[2048]{0}', space=vmem, size = 0x800, scoped, tag = 'input window, operand 9, single buffered']
    #allocation15 [shape = 's32[1]{0}', space=sflag, size = 0x4, scoped, tag = 'scoped memory for pcnet_rdkit_forward.1']
    %20 = vsyncpa [#allocation4], 0
    %21 = vsyncpa [#allocation6], 0
    %22 = vsyncpa [#allocation9], 0
    %23 = vsyncpa [#allocation12], 0
    %24 = vsyncpa [#allocation15], 0
    // Predicated region
    $region2: #{pcnet_rdkit_forward.1} parent=1 // pred_check
      _
    $region3: #{pcnet_rdkit_forward.1} parent=1 // pred_check_branch
      %26 = sbr.rel (0) target = $region5
    $region4: #{pcnet_rdkit_forward.1} parent=1 // pred_region
      _
    $region5: #{pcnet_rdkit_forward.1} parent=1 // pred_fallthru
      _
    // Predicated region
    $region6: #{pcnet_rdkit_forward.1} parent=1 // pred_check
      _
    $region7: #{pcnet_rdkit_forward.1} parent=1 // pred_check_branch
      %28 = sbr.rel (0) target = $region9
    $region8: #{pcnet_rdkit_forward.1} parent=1 // pred_region
      _
    $region9: #{pcnet_rdkit_forward.1} parent=1 // pred_fallthru
      _
    // Predicated region
    $region10: #{pcnet_rdkit_forward.1} parent=1 // pred_check
      _
    $region11: #{pcnet_rdkit_forward.1} parent=1 // pred_check_branch
      %30 = sbr.rel (0) target = $region13
    $region12: #{pcnet_rdkit_forward.1} parent=1 // pred_region
      %s32 = ssub.s32 16, 16
      %33 = vsyncadd [#allocation4], %s32
      %s35 = sshll.u32 [#allocation3], 4
      %s36 = int_to_ptr.vmem [resolvable:$true] %s35
      %38 = dma.hbm_to_vmem [thread:$0]  %s2, 16, %s36, [#allocation4]
    $region13: #{pcnet_rdkit_forward.1} parent=1 // pred_fallthru
      _
    // Predicated region
    $region14: #{pcnet_rdkit_forward.1} parent=1 // pred_check
      _
    $region15: #{pcnet_rdkit_forward.1} parent=1 // pred_check_branch
      %40 = sbr.rel (0) target = $region17
    $region16: #{pcnet_rdkit_forward.1} parent=1 // pred_region
      %s42 = ssub.s32 4096, 4096
      %43 = vsyncadd [#allocation6], %s42
      %s44 = sshll.u32 [#allocation5], 4
      %s45 = int_to_ptr.vmem [resolvable:$true] %s44
      %50 = dma.hbm_to_vmem [thread:$0]  %s3, 4096, %s45, [#allocation6], 512, 512, 32
    $region17: #{pcnet_rdkit_forward.1} parent=1 // pred_fallthru
      _
    // Predicated region
    $region18: #{pcnet_rdkit_forward.1} parent=1 // pred_check
      _
    $region19: #{pcnet_rdkit_forward.1} parent=1 // pred_check_branch
      %52 = sbr.rel (0) target = $region21
    $region20: #{pcnet_rdkit_forward.1} parent=1 // pred_region
      %s54 = ssub.s32 128, 128
      %55 = vsyncadd [#allocation6], %s54
      %s57 = sshll.u32 [#allocation7], 4
      %s58 = int_to_ptr.vmem [resolvable:$true] %s57
      %60 = dma.hbm_to_vmem [thread:$0]  %s4, 128, %s58, [#allocation6]
    $region21: #{pcnet_rdkit_forward.1} parent=1 // pred_fallthru
      _
    // Predicated region
    $region22: #{pcnet_rdkit_forward.1} parent=1 // pred_check
      _
    $region23: #{pcnet_rdkit_forward.1} parent=1 // pred_check_branch
      %62 = sbr.rel (0) target = $region25
    $region24: #{pcnet_rdkit_forward.1} parent=1 // pred_region
      %s64 = ssub.s32 65536, 65536
      %65 = vsyncadd [#allocation9], %s64
      %s66 = sshll.u32 [#allocation8], 4
      %s67 = int_to_ptr.vmem [resolvable:$true] %s66
      %72 = dma.hbm_to_vmem [thread:$0]  %s5, 65536, %s67, [#allocation9], 512, 512, 32
    $region25: #{pcnet_rdkit_forward.1} parent=1 // pred_fallthru
      _
    // Predicated region
    $region26: #{pcnet_rdkit_forward.1} parent=1 // pred_check
      _
    $region27: #{pcnet_rdkit_forward.1} parent=1 // pred_check_branch
      %74 = sbr.rel (0) target = $region29
    $region28: #{pcnet_rdkit_forward.1} parent=1 // pred_region
      %s76 = ssub.s32 128, 128
      %77 = vsyncadd [#allocation9], %s76
      %s79 = sshll.u32 [#allocation10], 4
      %s80 = int_to_ptr.vmem [resolvable:$true] %s79
      %82 = dma.hbm_to_vmem [thread:$0]  %s6, 128, %s80, [#allocation9]
    $region29: #{pcnet_rdkit_forward.1} parent=1 // pred_fallthru
      _
    // Predicated region
    $region30: #{pcnet_rdkit_forward.1} parent=1 // pred_check
      _
    $region31: #{pcnet_rdkit_forward.1} parent=1 // pred_check_branch
      %84 = sbr.rel (0) target = $region33
    $region32: #{pcnet_rdkit_forward.1} parent=1 // pred_region
      %s86 = ssub.s32 32768, 32768
      %87 = vsyncadd [#allocation12], %s86
      %s88 = sshll.u32 [#allocation11], 4
      %s89 = int_to_ptr.vmem [resolvable:$true] %s88
      %94 = dma.hbm_to_vmem [thread:$0]  %s7, 32768, %s89, [#allocation12], 256, 256, 16
    $region33: #{pcnet_rdkit_forward.1} parent=1 // pred_fallthru
      _
    // Predicated region
    $region34: #{pcnet_rdkit_forward.1} parent=1 // pred_check
      _
    $region35: #{pcnet_rdkit_forward.1} parent=1 // pred_check_branch
      %96 = sbr.rel (0) target = $region37
    $region36: #{pcnet_rdkit_forward.1} parent=1 // pred_region
      %s98 = ssub.s32 64, 64
      %99 = vsyncadd [#allocation12], %s98
      %s101 = sshll.u32 [#allocation13], 4
      %s102 = int_to_ptr.vmem [resolvable:$true] %s101
      %104 = dma.hbm_to_vmem [thread:$0]  %s8, 64, %s102, [#allocation12]
    $region37: #{pcnet_rdkit_forward.1} parent=1 // pred_fallthru
      _
    // Predicated region
    $region38: #{pcnet_rdkit_forward.1} parent=1 // pred_check
      _
    $region39: #{pcnet_rdkit_forward.1} parent=1 // pred_check_branch
      %106 = sbr.rel (0) target = $region41
    $region40: #{pcnet_rdkit_forward.1} parent=1 // pred_region
      %s108 = ssub.s32 64, 64
      %109 = vsyncadd [#allocation15], %s108
      %s111 = sshll.u32 [#allocation14], 4
      %s112 = int_to_ptr.vmem [resolvable:$true] %s111
      %114 = dma.hbm_to_vmem [thread:$0]  %s9, 64, %s112, [#allocation15]
    $region41: #{pcnet_rdkit_forward.1} parent=1 // pred_fallthru
      _
    // Predicated region
    $region42: #{pcnet_rdkit_forward.1} parent=1 // pred_check
      _
    $region43: #{pcnet_rdkit_forward.1} parent=1 // pred_check_branch
      %116 = sbr.rel (0) target = $region45
    $region44: #{pcnet_rdkit_forward.1} parent=1 // pred_region
      _
    $region45: #{pcnet_rdkit_forward.1} parent=1 // pred_fallthru
      _
    // Predicated region
    $region46: #{pcnet_rdkit_forward.1} parent=1 // pred_check
      _
    $region47: #{pcnet_rdkit_forward.1} parent=1 // pred_check_branch
      %118 = sbr.rel (0) target = $region49
    $region48: #{pcnet_rdkit_forward.1} parent=1 // pred_region
      %119 = dma.done [#allocation4], 16
    $region49: #{pcnet_rdkit_forward.1} parent=1 // pred_fallthru
      _
    // Predicated region
    $region50: #{pcnet_rdkit_forward.1} parent=1 // pred_check
      _
    $region51: #{pcnet_rdkit_forward.1} parent=1 // pred_check_branch
      %121 = sbr.rel (0) target = $region53
    $region52: #{pcnet_rdkit_forward.1} parent=1 // pred_region
      %122 = dma.done [#allocation6], 4096
    $region53: #{pcnet_rdkit_forward.1} parent=1 // pred_fallthru
      _
    // Predicated region
    $region54: #{pcnet_rdkit_forward.1} parent=1 // pred_check
      _
    $region55: #{pcnet_rdkit_forward.1} parent=1 // pred_check_branch
      %124 = sbr.rel (0) target = $region57
    $region56: #{pcnet_rdkit_forward.1} parent=1 // pred_region
      %125 = dma.done [#allocation6], 128
    $region57: #{pcnet_rdkit_forward.1} parent=1 // pred_fallthru
      _
    // Predicated region
    $region58: #{pcnet_rdkit_forward.1} parent=1 // pred_check
      _
    $region59: #{pcnet_rdkit_forward.1} parent=1 // pred_check_branch
      %127 = sbr.rel (0) target = $region61
    $region60: #{pcnet_rdkit_forward.1} parent=1 // pred_region
      %128 = dma.done [#allocation9], 65536
    $region61: #{pcnet_rdkit_forward.1} parent=1 // pred_fallthru
      _
    // Predicated region
    $region62: #{pcnet_rdkit_forward.1} parent=1 // pred_check
      _
    $region63: #{pcnet_rdkit_forward.1} parent=1 // pred_check_branch
      %130 = sbr.rel (0) target = $region65
    $region64: #{pcnet_rdkit_forward.1} parent=1 // pred_region
      %131 = dma.done [#allocation9], 128
    $region65: #{pcnet_rdkit_forward.1} parent=1 // pred_fallthru
      _
    // Predicated region
    $region66: #{pcnet_rdkit_forward.1} parent=1 // pred_check
      _
    $region67: #{pcnet_rdkit_forward.1} parent=1 // pred_check_branch
      %133 = sbr.rel (0) target = $region69
    $region68: #{pcnet_rdkit_forward.1} parent=1 // pred_region
      %134 = dma.done [#allocation12], 32768
    $region69: #{pcnet_rdkit_forward.1} parent=1 // pred_fallthru
      _
    // Predicated region
    $region70: #{pcnet_rdkit_forward.1} parent=1 // pred_check
      _
    $region71: #{pcnet_rdkit_forward.1} parent=1 // pred_check_branch
      %136 = sbr.rel (0) target = $region73
    $region72: #{pcnet_rdkit_forward.1} parent=1 // pred_region
      %137 = dma.done [#allocation12], 64
    $region73: #{pcnet_rdkit_forward.1} parent=1 // pred_fallthru
      _
    // Predicated region
    $region74: #{pcnet_rdkit_forward.1} parent=1 // pred_check
      _
    $region75: #{pcnet_rdkit_forward.1} parent=1 // pred_check_branch
      %139 = sbr.rel (0) target = $region77
    $region76: #{pcnet_rdkit_forward.1} parent=1 // pred_region
      %140 = dma.done [#allocation15], 64
    $region77: #{pcnet_rdkit_forward.1} parent=1 // pred_fallthru
      _
    %v142 = vld [vmem:[%s0] sm:$0xff]
    %v143 = vld [vmem:[%s0 + $0x8] sm:$0xff]
    %v144 = vld [vmem:[%s0 + $0x10] sm:$0xff]
    %v145 = vld [vmem:[%s0 + $0x18] sm:$0xff]
    %v146 = vld [vmem:[%s0 + $0x20] sm:$0xff]
    %v147 = vld [vmem:[%s0 + $0x28] sm:$0xf]
    %v148 = vld [vmem:[%s0 + $0x2c] sm:$0xff]
    %v149 = vld [vmem:[%s0 + $0x34] sm:$0xff]
    %v150 = vld [vmem:[%s0 + $0x3c] sm:$0xff]
    %v151 = vld [vmem:[%s0 + $0x44] sm:$0xff]
    %v152 = vld [vmem:[%s0 + $0x4c] sm:$0xff]
    %v153 = vld [vmem:[%s0 + $0x54] sm:$0xf]
    %v154 = vld [vmem:[%s1] sm:$0xf]
    %v155 = vld [vmem:[%s1 + $0x4] sm:$0xf]
    %v156 = vld [vmem:[%s1 + $0x8] sm:$0xf]
    %v157 = vld [vmem:[%s1 + $0xc] sm:$0xf]
    %v158 = vld [vmem:[%s1 + $0x10] sm:$0xf]
    %v159 = vld [vmem:[%s1 + $0x14] sm:$0xf]
    %v160 = vld [vmem:[%s1 + $0x18] sm:$0xf]
    %v161 = vld [vmem:[%s1 + $0x1c] sm:$0xf]
    %v162 = vld [vmem:[%s1 + $0x20] sm:$0xf]
    %v163 = vld [vmem:[%s1 + $0x24] sm:$0xf]
    %v164 = vld [vmem:[%s1 + $0x28] sm:$0xf]
    %v165 = vld [vmem:[%s1 + $0x2c] sm:$0xf]
    %v166 = vld [vmem:[%s1 + $0x30] sm:$0xf]
    %v167 = vld [vmem:[%s1 + $0x34] sm:$0xf]
    %v168 = vld [vmem:[%s1 + $0x38] sm:$0xf]
    %v169 = vld [vmem:[%s1 + $0x3c] sm:$0xf]
    %v170 = vld [vmem:[%s1 + $0x40] sm:$0xf]
    %v171 = vld [vmem:[%s1 + $0x44] sm:$0xf]
    %v172 = vld [vmem:[%s1 + $0x48] sm:$0xf]
    %v173 = vld [vmem:[%s1 + $0x4c] sm:$0xf]
    %v174 = vld [vmem:[%s1 + $0x50] sm:$0xf]
    %v175 = vld [vmem:[%s1 + $0x54] sm:$0xf]
    %v176 = vld [vmem:[%s1 + $0x58] sm:$0xf]
    %v177 = vld [vmem:[%s1 + $0x5c] sm:$0xf]
    %v178 = vld [vmem:[%s1 + $0x60] sm:$0xf]
    %v179 = vld [vmem:[%s1 + $0x64] sm:$0xf]
    %v180 = vld [vmem:[%s1 + $0x68] sm:$0xf]
    %v181 = vld [vmem:[%s1 + $0x6c] sm:$0xf]
    %v182 = vld [vmem:[%s1 + $0x70] sm:$0xf]
    %v183 = vld [vmem:[%s1 + $0x74] sm:$0xf]
    %v184 = vld [vmem:[%s1 + $0x78] sm:$0xf]
    %v185 = vld [vmem:[%s1 + $0x7c] sm:$0xf]
    %v186 = vld [vmem:[%s1 + $0x80] sm:$0xf]
    %v187 = vld [vmem:[%s1 + $0x84] sm:$0xf]
    %v188 = vld [vmem:[%s1 + $0x88] sm:$0xf]
    %v189 = vld [vmem:[%s1 + $0x8c] sm:$0xf]
    %v190 = vld [vmem:[%s1 + $0x90] sm:$0xf]
    %v191 = vld [vmem:[%s1 + $0x94] sm:$0xf]
    %v192 = vld [vmem:[%s1 + $0x98] sm:$0xf]
    %v193 = vld [vmem:[%s1 + $0x9c] sm:$0xf]
    %v194 = vld [vmem:[%s1 + $0xa0] sm:$0xf]
    %v195 = vld [vmem:[%s1 + $0xa4] sm:$0xf]
    %v196 = vld [vmem:[%s1 + $0xa8] sm:$0xf]
    %v197 = vld [vmem:[%s1 + $0xac] sm:$0xf]
    %v198 = vld [vmem:[%s1 + $0xb0] sm:$0xf]
    %v199 = vld [vmem:[%s1 + $0xb4] sm:$0xf]
    %v200 = vld [vmem:[%s1 + $0xb8] sm:$0xf]
    %v201 = vld [vmem:[%s1 + $0xbc] sm:$0xf]
    %v202 = vld [vmem:[%s1 + $0xc0] sm:$0xf]
    %v203 = vld [vmem:[%s1 + $0xc4] sm:$0xf]
    %v204 = vld [vmem:[%s1 + $0xc8] sm:$0xf]
    %v205 = vld [vmem:[%s1 + $0xcc] sm:$0xf]
    %v206 = vld [vmem:[%s1 + $0xd0] sm:$0xf]
    %v207 = vld [vmem:[%s1 + $0xd4] sm:$0xf]
    %v208 = vld [vmem:[%s1 + $0xd8] sm:$0xf]
    %v209 = vld [vmem:[%s1 + $0xdc] sm:$0xf]
    %v210 = vld [vmem:[%s1 + $0xe0] sm:$0xf]
    %v211 = vld [vmem:[%s1 + $0xe4] sm:$0xf]
    %v212 = vld [vmem:[%s1 + $0xe8] sm:$0xf]
    %v213 = vld [vmem:[%s1 + $0xec] sm:$0xf]
    %v214 = vld [vmem:[%s1 + $0xf0] sm:$0xf]
    %v215 = vld [vmem:[%s1 + $0xf4] sm:$0xf]
    %v216 = vld [vmem:[%s1 + $0xf8] sm:$0xf]
    %v217 = vld [vmem:[%s1 + $0xfc] sm:$0xf]
    %v218 = vld [vmem:[%s1 + $0x100] sm:$0xf]
    %v219 = vld [vmem:[%s1 + $0x104] sm:$0xf]
    %v220 = vld [vmem:[%s1 + $0x108] sm:$0xf]
    %v221 = vld [vmem:[%s1 + $0x10c] sm:$0xf]
    %v222 = vld [vmem:[%s1 + $0x110] sm:$0xf]
    %v223 = vld [vmem:[%s1 + $0x114] sm:$0xf]
    %v224 = vld [vmem:[%s1 + $0x118] sm:$0xf]
    %v225 = vld [vmem:[%s1 + $0x11c] sm:$0xf]
    %v226 = vld [vmem:[%s1 + $0x120] sm:$0xf]
    %v227 = vld [vmem:[%s1 + $0x124] sm:$0xf]
    %v228 = vld [vmem:[%s1 + $0x128] sm:$0xf]
    %v229 = vld [vmem:[%s1 + $0x12c] sm:$0xf]
    %v230 = vld [vmem:[%s1 + $0x130] sm:$0xf]
    %v231 = vld [vmem:[%s1 + $0x134] sm:$0xf]
    %v232 = vld [vmem:[%s1 + $0x138] sm:$0xf]
    %v233 = vld [vmem:[%s1 + $0x13c] sm:$0xf]
    %v234 = vld [vmem:[%s1 + $0x140] sm:$0xf]
    %v235 = vld [vmem:[%s1 + $0x144] sm:$0xf]
    %v236 = vld [vmem:[%s1 + $0x148] sm:$0xf]
    %v237 = vld [vmem:[%s1 + $0x14c] sm:$0xf]
    %v238 = vld [vmem:[%s1 + $0x150] sm:$0xf]
    %v239 = vld [vmem:[%s1 + $0x154] sm:$0xf]
    %v240 = vld [vmem:[%s1 + $0x158] sm:$0xf]
    %v241 = vld [vmem:[%s1 + $0x15c] sm:$0xf]
    %v242 = vld [vmem:[%s1 + $0x160] sm:$0xf]
    %v243 = vld [vmem:[%s1 + $0x164] sm:$0xf]
    %v244 = vld [vmem:[%s1 + $0x168] sm:$0xf]
    %v245 = vld [vmem:[%s1 + $0x16c] sm:$0xf]
    %v246 = vld [vmem:[%s1 + $0x170] sm:$0xf]
    %v247 = vld [vmem:[%s1 + $0x174] sm:$0xf]
    %v248 = vld [vmem:[%s1 + $0x178] sm:$0xf]
    %v249 = vld [vmem:[%s1 + $0x17c] sm:$0xf]
    %v250 = vld [vmem:[%s1 + $0x180] sm:$0xf]
    %v251 = vld [vmem:[%s1 + $0x184] sm:$0xf]
    %v252 = vld [vmem:[%s1 + $0x188] sm:$0xf]
    %v253 = vld [vmem:[%s1 + $0x18c] sm:$0xf]
    %v254 = vld [vmem:[%s1 + $0x190] sm:$0xf]
    %v255 = vld [vmem:[%s1 + $0x194] sm:$0xf]
    %v256 = vld [vmem:[%s1 + $0x198] sm:$0xf]
    %v257 = vld [vmem:[%s1 + $0x19c] sm:$0xf]
    %v258 = vld [vmem:[%s1 + $0x1a0] sm:$0xf]
    %v259 = vld [vmem:[%s1 + $0x1a4] sm:$0xf]
    %v260 = vld [vmem:[%s1 + $0x1a8] sm:$0xf]
    %v261 = vld [vmem:[%s1 + $0x1ac] sm:$0xf]
    %v262 = vld [vmem:[%s1 + $0x1b0] sm:$0xf]
    %v263 = vld [vmem:[%s1 + $0x1b4] sm:$0xf]
    %v264 = vld [vmem:[%s1 + $0x1b8] sm:$0xf]
    %v265 = vld [vmem:[%s1 + $0x1bc] sm:$0xf]
    %v266 = vld [vmem:[%s1 + $0x1c0] sm:$0xf]
    %v267 = vld [vmem:[%s1 + $0x1c4] sm:$0xf]
    %v268 = vld [vmem:[%s1 + $0x1c8] sm:$0xf]
    %v269 = vld [vmem:[%s1 + $0x1cc] sm:$0xf]
    %v270 = vld [vmem:[%s1 + $0x1d0] sm:$0xf]
    %v271 = vld [vmem:[%s1 + $0x1d4] sm:$0xf]
    %v272 = vld [vmem:[%s1 + $0x1d8] sm:$0xf]
    %v273 = vld [vmem:[%s1 + $0x1dc] sm:$0xf]
    %v274 = vld [vmem:[%s1 + $0x1e0] sm:$0xf]
    %v275 = vld [vmem:[%s1 + $0x1e4] sm:$0xf]
    %v276 = vld [vmem:[%s1 + $0x1e8] sm:$0xf]
    %v277 = vld [vmem:[%s1 + $0x1ec] sm:$0xf]
    %v278 = vld [vmem:[%s1 + $0x1f0] sm:$0xf]
    %v279 = vld [vmem:[%s1 + $0x1f4] sm:$0xf]
    %v280 = vld [vmem:[%s1 + $0x1f8] sm:$0xf]
    %v281 = vld [vmem:[%s1 + $0x1fc] sm:$0xf]
    %v282 = vld [vmem:[%s1 + $0x200] sm:$0xf]
    %v283 = vld [vmem:[%s1 + $0x204] sm:$0xf]
    %v284 = vld [vmem:[%s1 + $0x208] sm:$0xf]
    %v285 = vld [vmem:[%s1 + $0x20c] sm:$0xf]
    %v286 = vld [vmem:[%s1 + $0x210] sm:$0xf]
    %v287 = vld [vmem:[%s1 + $0x214] sm:$0xf]
    %v288 = vld [vmem:[%s1 + $0x218] sm:$0xf]
    %v289 = vld [vmem:[%s1 + $0x21c] sm:$0xf]
    %v290 = vld [vmem:[%s1 + $0x220] sm:$0xf]
    %v291 = vld [vmem:[%s1 + $0x224] sm:$0xf]
    %v292 = vld [vmem:[%s1 + $0x228] sm:$0xf]
    %v293 = vld [vmem:[%s1 + $0x22c] sm:$0xf]
    %v294 = vld [vmem:[%s1 + $0x230] sm:$0xf]
    %v295 = vld [vmem:[%s1 + $0x234] sm:$0xf]
    %v296 = vld [vmem:[%s1 + $0x238] sm:$0xf]
    %v297 = vld [vmem:[%s1 + $0x23c] sm:$0xf]
    %v298 = vld [vmem:[%s1 + $0x240] sm:$0xf]
    %v299 = vld [vmem:[%s1 + $0x244] sm:$0xf]
    %v300 = vld [vmem:[%s1 + $0x248] sm:$0xf]
    %v301 = vld [vmem:[%s1 + $0x24c] sm:$0xf]
    %v302 = vld [vmem:[%s1 + $0x250] sm:$0xf]
    %v303 = vld [vmem:[%s1 + $0x254] sm:$0xf]
    %v304 = vld [vmem:[%s1 + $0x258] sm:$0xf]
    %v305 = vld [vmem:[%s1 + $0x25c] sm:$0xf]
    %v306 = vld [vmem:[%s1 + $0x260] sm:$0xf]
    %v307 = vld [vmem:[%s1 + $0x264] sm:$0xf]
    %v308 = vld [vmem:[%s1 + $0x268] sm:$0xf]
    %v309 = vld [vmem:[%s1 + $0x26c] sm:$0xf]
    %v310 = vld [vmem:[%s1 + $0x270] sm:$0xf]
    %v311 = vld [vmem:[%s1 + $0x274] sm:$0xf]
    %v312 = vld [vmem:[%s1 + $0x278] sm:$0xf]
    %v313 = vld [vmem:[%s1 + $0x27c] sm:$0xf]
    %v314 = vld [vmem:[%s1 + $0x280] sm:$0xf]
    %v315 = vld [vmem:[%s1 + $0x284] sm:$0xf]
    %v316 = vld [vmem:[%s1 + $0x288] sm:$0xf]
    %v317 = vld [vmem:[%s1 + $0x28c] sm:$0xf]
    %v318 = vld [vmem:[%s1 + $0x290] sm:$0xf]
    %v319 = vld [vmem:[%s1 + $0x294] sm:$0xf]
    %v320 = vld [vmem:[%s1 + $0x298] sm:$0xf]
    %v321 = vld [vmem:[%s1 + $0x29c] sm:$0xf]
    %v322 = vld [vmem:[%s1 + $0x2a0] sm:$0xf]
    %v323 = vld [vmem:[%s1 + $0x2a4] sm:$0xf]
    %v324 = vld [vmem:[%s1 + $0x2a8] sm:$0xf]
    %v325 = vld [vmem:[%s1 + $0x2ac] sm:$0xf]
    %v326 = vld [vmem:[%s1 + $0x2b0] sm:$0xf]
    %v327 = vld [vmem:[%s1 + $0x2b4] sm:$0xf]
    %v328 = vld [vmem:[%s1 + $0x2b8] sm:$0xf]
    %v329 = vld [vmem:[%s1 + $0x2bc] sm:$0xf]
    %v330 = vld [vmem:[#allocation3] sm:$0x1]
    %v332 = vlaneseq
    %v333 = vshrl.u32 %v332, 7
    %v334 = vsub.s32 0, %v333
    %v335 = vrot.slane %v330, %v334
    %v349 = vunpack.c.l.b16 %v142
    %v350 = vunpack.c.h.b16 %v142
    %v351 = vunpack.c.l.b16 %v143
    %v352 = vunpack.c.h.b16 %v143
    %v353 = vunpack.c.l.b16 %v144
    %v354 = vunpack.c.h.b16 %v144
    %v355 = vunpack.c.l.b16 %v145
    %v356 = vunpack.c.h.b16 %v145
    %v357 = vunpack.c.l.b16 %v146
    %v358 = vunpack.c.h.b16 %v146
    %v359 = vunpack.c.l.b16 %v147
    %v360 = vunpack.c.l.b16 %v148
    %v361 = vunpack.c.h.b16 %v148
    %v362 = vunpack.c.l.b16 %v149
    %v363 = vunpack.c.h.b16 %v149
    %v364 = vunpack.c.l.b16 %v150
    %v365 = vunpack.c.h.b16 %v150
    %v366 = vunpack.c.l.b16 %v151
    %v367 = vunpack.c.h.b16 %v151
    %v368 = vunpack.c.l.b16 %v152
    %v369 = vunpack.c.h.b16 %v152
    %v370 = vunpack.c.l.b16 %v153
    %v371 = vpack.c.b16 %v360, %v349
    %v372 = vpack.c.b16 %v361, %v350
    %v373 = vpack.c.b16 %v362, %v351
    %v374 = vpack.c.b16 %v363, %v352
    %v375 = vpack.c.b16 %v364, %v353
    %v376 = vpack.c.b16 %v365, %v354
    %v377 = vpack.c.b16 %v366, %v355
    %v378 = vpack.c.b16 %v367, %v356
    %v379 = vpack.c.b16 %v368, %v357
    %v380 = vpack.c.b16 %v369, %v358
    %v381 = vpack.c.b16 %v370, %v359
    %v569 = vunpack.c.l.b16 %v154
    %v570 = vunpack.c.l.b16 %v155
    %v571 = vunpack.c.l.b16 %v156
    %v572 = vunpack.c.l.b16 %v157
    %v573 = vunpack.c.l.b16 %v158
    %v574 = vunpack.c.l.b16 %v159
    %v575 = vunpack.c.l.b16 %v160
    %v576 = vunpack.c.l.b16 %v161
    %v577 = vunpack.c.l.b16 %v162
    %v578 = vunpack.c.l.b16 %v163
    %v579 = vunpack.c.l.b16 %v164
    %v580 = vunpack.c.l.b16 %v165
    %v581 = vunpack.c.l.b16 %v166
    %v582 = vunpack.c.l.b16 %v167
    %v583 = vunpack.c.l.b16 %v168
    %v584 = vunpack.c.l.b16 %v169
    %v585 = vunpack.c.l.b16 %v170
    %v586 = vunpack.c.l.b16 %v171
    %v587 = vunpack.c.l.b16 %v172
    %v588 = vunpack.c.l.b16 %v173
    %v589 = vunpack.c.l.b16 %v174
    %v590 = vunpack.c.l.b16 %v175
    %v591 = vunpack.c.l.b16 %v176
    %v592 = vunpack.c.l.b16 %v177
    %v593 = vunpack.c.l.b16 %v178
    %v594 = vunpack.c.l.b16 %v179
    %v595 = vunpack.c.l.b16 %v180
    %v596 = vunpack.c.l.b16 %v181
    %v597 = vunpack.c.l.b16 %v182
    %v598 = vunpack.c.l.b16 %v183
    %v599 = vunpack.c.l.b16 %v184
    %v600 = vunpack.c.l.b16 %v185
    %v601 = vunpack.c.l.b16 %v186
    %v602 = vunpack.c.l.b16 %v187
    %v603 = vunpack.c.l.b16 %v188
    %v604 = vunpack.c.l.b16 %v189
    %v605 = vunpack.c.l.b16 %v190
    %v606 = vunpack.c.l.b16 %v191
    %v607 = vunpack.c.l.b16 %v192
    %v608 = vunpack.c.l.b16 %v193
    %v609 = vunpack.c.l.b16 %v194
    %v610 = vunpack.c.l.b16 %v195
    %v611 = vunpack.c.l.b16 %v196
    %v612 = vunpack.c.l.b16 %v197
    %v613 = vunpack.c.l.b16 %v198
    %v614 = vunpack.c.l.b16 %v199
    %v615 = vunpack.c.l.b16 %v200
    %v616 = vunpack.c.l.b16 %v201
    %v617 = vunpack.c.l.b16 %v202
    %v618 = vunpack.c.l.b16 %v203
    %v619 = vunpack.c.l.b16 %v204
    %v620 = vunpack.c.l.b16 %v205
    %v621 = vunpack.c.l.b16 %v206
    %v622 = vunpack.c.l.b16 %v207
    %v623 = vunpack.c.l.b16 %v208
    %v624 = vunpack.c.l.b16 %v209
    %v625 = vunpack.c.l.b16 %v210
    %v626 = vunpack.c.l.b16 %v211
    %v627 = vunpack.c.l.b16 %v212
    %v628 = vunpack.c.l.b16 %v213
    %v629 = vunpack.c.l.b16 %v214
    %v630 = vunpack.c.l.b16 %v215
    %v631 = vunpack.c.l.b16 %v216
    %v632 = vunpack.c.l.b16 %v217
    %v633 = vunpack.c.l.b16 %v218
    %v634 = vunpack.c.l.b16 %v219
    %v635 = vunpack.c.l.b16 %v220
    %v636 = vunpack.c.l.b16 %v221
    %v637 = vunpack.c.l.b16 %v222
    %v638 = vunpack.c.l.b16 %v223
    %v639 = vunpack.c.l.b16 %v224
    %v640 = vunpack.c.l.b16 %v225
    %v641 = vunpack.c.l.b16 %v226
    %v642 = vunpack.c.l.b16 %v227
    %v643 = vunpack.c.l.b16 %v228
    %v644 = vunpack.c.l.b16 %v229
    %v645 = vunpack.c.l.b16 %v230
    %v646 = vunpack.c.l.b16 %v231
    %v647 = vunpack.c.l.b16 %v232
    %v648 = vunpack.c.l.b16 %v233
    %v649 = vunpack.c.l.b16 %v234
    %v650 = vunpack.c.l.b16 %v235
    %v651 = vunpack.c.l.b16 %v236
    %v652 = vunpack.c.l.b16 %v237
    %v653 = vunpack.c.l.b16 %v238
    %v654 = vunpack.c.l.b16 %v239
    %v655 = vunpack.c.l.b16 %v240
    %v656 = vunpack.c.l.b16 %v241
    %v657 = vunpack.c.l.b16 %v242
    %v658 = vunpack.c.l.b16 %v243
    %v659 = vunpack.c.l.b16 %v244
    %v660 = vunpack.c.l.b16 %v245
    %v661 = vunpack.c.l.b16 %v246
    %v662 = vunpack.c.l.b16 %v247
    %v663 = vunpack.c.l.b16 %v248
    %v664 = vunpack.c.l.b16 %v249
    %v665 = vunpack.c.l.b16 %v250
    %v666 = vunpack.c.l.b16 %v251
    %v667 = vunpack.c.l.b16 %v252
    %v668 = vunpack.c.l.b16 %v253
    %v669 = vunpack.c.l.b16 %v254
    %v670 = vunpack.c.l.b16 %v255
    %v671 = vunpack.c.l.b16 %v256
    %v672 = vunpack.c.l.b16 %v257
    %v673 = vunpack.c.l.b16 %v258
    %v674 = vunpack.c.l.b16 %v259
    %v675 = vunpack.c.l.b16 %v260
    %v676 = vunpack.c.l.b16 %v261
    %v677 = vunpack.c.l.b16 %v262
    %v678 = vunpack.c.l.b16 %v263
    %v679 = vunpack.c.l.b16 %v264
    %v680 = vunpack.c.l.b16 %v265
    %v681 = vunpack.c.l.b16 %v266
    %v682 = vunpack.c.l.b16 %v267
    %v683 = vunpack.c.l.b16 %v268
    %v684 = vunpack.c.l.b16 %v269
    %v685 = vunpack.c.l.b16 %v270
    %v686 = vunpack.c.l.b16 %v271
    %v687 = vunpack.c.l.b16 %v272
    %v688 = vunpack.c.l.b16 %v273
    %v689 = vunpack.c.l.b16 %v274
    %v690 = vunpack.c.l.b16 %v275
    %v691 = vunpack.c.l.b16 %v276
    %v692 = vunpack.c.l.b16 %v277
    %v693 = vunpack.c.l.b16 %v278
    %v694 = vunpack.c.l.b16 %v279
    %v695 = vunpack.c.l.b16 %v280
    %v696 = vunpack.c.l.b16 %v281
    %v697 = vunpack.c.l.b16 %v282
    %v698 = vunpack.c.l.b16 %v283
    %v699 = vunpack.c.l.b16 %v284
    %v700 = vunpack.c.l.b16 %v285
    %v701 = vunpack.c.l.b16 %v286
    %v702 = vunpack.c.l.b16 %v287
    %v703 = vunpack.c.l.b16 %v288
    %v704 = vunpack.c.l.b16 %v289
    %v705 = vunpack.c.l.b16 %v290
    %v706 = vunpack.c.l.b16 %v291
    %v707 = vunpack.c.l.b16 %v292
    %v708 = vunpack.c.l.b16 %v293
    %v709 = vunpack.c.l.b16 %v294
    %v710 = vunpack.c.l.b16 %v295
    %v711 = vunpack.c.l.b16 %v296
    %v712 = vunpack.c.l.b16 %v297
    %v713 = vunpack.c.l.b16 %v298
    %v714 = vunpack.c.l.b16 %v299
    %v715 = vunpack.c.l.b16 %v300
    %v716 = vunpack.c.l.b16 %v301
    %v717 = vunpack.c.l.b16 %v302
    %v718 = vunpack.c.l.b16 %v303
    %v719 = vunpack.c.l.b16 %v304
    %v720 = vunpack.c.l.b16 %v305
    %v721 = vunpack.c.l.b16 %v306
    %v722 = vunpack.c.l.b16 %v307
    %v723 = vunpack.c.l.b16 %v308
    %v724 = vunpack.c.l.b16 %v309
    %v725 = vunpack.c.l.b16 %v310
    %v726 = vunpack.c.l.b16 %v311
    %v727 = vunpack.c.l.b16 %v312
    %v728 = vunpack.c.l.b16 %v313
    %v729 = vunpack.c.l.b16 %v314
    %v730 = vunpack.c.l.b16 %v315
    %v731 = vunpack.c.l.b16 %v316
    %v732 = vunpack.c.l.b16 %v317
    %v733 = vunpack.c.l.b16 %v318
    %v734 = vunpack.c.l.b16 %v319
    %v735 = vunpack.c.l.b16 %v320
    %v736 = vunpack.c.l.b16 %v321
    %v737 = vunpack.c.l.b16 %v322
    %v738 = vunpack.c.l.b16 %v323
    %v739 = vunpack.c.l.b16 %v324
    %v740 = vunpack.c.l.b16 %v325
    %v741 = vunpack.c.l.b16 %v326
    %v742 = vunpack.c.l.b16 %v327
    %v743 = vunpack.c.l.b16 %v328
    %v744 = vunpack.c.l.b16 %v329
    %v745 = vpack.c.b16 %v570, %v569
    %v746 = vpack.c.b16 %v572, %v571
    %v747 = vpack.c.b16 %v574, %v573
    %v748 = vpack.c.b16 %v576, %v575
    %v749 = vpack.c.b16 %v578, %v577
    %v750 = vpack.c.b16 %v580, %v579
    %v751 = vpack.c.b16 %v582, %v581
    %v752 = vpack.c.b16 %v584, %v583
    %v753 = vpack.c.b16 %v586, %v585
    %v754 = vpack.c.b16 %v588, %v587
    %v755 = vpack.c.b16 %v590, %v589
    %v756 = vpack.c.b16 %v592, %v591
    %v757 = vpack.c.b16 %v594, %v593
    %v758 = vpack.c.b16 %v596, %v595
    %v759 = vpack.c.b16 %v598, %v597
    %v760 = vpack.c.b16 %v600, %v599
    %v761 = vpack.c.b16 %v602, %v601
    %v762 = vpack.c.b16 %v604, %v603
    %v763 = vpack.c.b16 %v606, %v605
    %v764 = vpack.c.b16 %v608, %v607
    %v765 = vpack.c.b16 %v610, %v609
    %v766 = vpack.c.b16 %v612, %v611
    %v767 = vpack.c.b16 %v614, %v613
    %v768 = vpack.c.b16 %v616, %v615
    %v769 = vpack.c.b16 %v618, %v617
    %v770 = vpack.c.b16 %v620, %v619
    %v771 = vpack.c.b16 %v622, %v621
    %v772 = vpack.c.b16 %v624, %v623
    %v773 = vpack.c.b16 %v626, %v625
    %v774 = vpack.c.b16 %v628, %v627
    %v775 = vpack.c.b16 %v630, %v629
    %v776 = vpack.c.b16 %v632, %v631
    %v777 = vpack.c.b16 %v634, %v633
    %v778 = vpack.c.b16 %v636, %v635
    %v779 = vpack.c.b16 %v638, %v637
    %v780 = vpack.c.b16 %v640, %v639
    %v781 = vpack.c.b16 %v642, %v641
    %v782 = vpack.c.b16 %v644, %v643
    %v783 = vpack.c.b16 %v646, %v645
    %v784 = vpack.c.b16 %v648, %v647
    %v785 = vpack.c.b16 %v650, %v649
    %v786 = vpack.c.b16 %v652, %v651
    %v787 = vpack.c.b16 %v654, %v653
    %v788 = vpack.c.b16 %v656, %v655
    %v789 = vpack.c.b16 %v658, %v657
    %v790 = vpack.c.b16 %v660, %v659
    %v791 = vpack.c.b16 %v662, %v661
    %v792 = vpack.c.b16 %v664, %v663
    %v793 = vpack.c.b16 %v666, %v665
    %v794 = vpack.c.b16 %v668, %v667
    %v795 = vpack.c.b16 %v670, %v669
    %v796 = vpack.c.b16 %v672, %v671
    %v797 = vpack.c.b16 %v674, %v673
    %v798 = vpack.c.b16 %v676, %v675
    %v799 = vpack.c.b16 %v678, %v677
    %v800 = vpack.c.b16 %v680, %v679
    %v801 = vpack.c.b16 %v682, %v681
    %v802 = vpack.c.b16 %v684, %v683
    %v803 = vpack.c.b16 %v686, %v685
    %v804 = vpack.c.b16 %v688, %v687
    %v805 = vpack.c.b16 %v690, %v689
    %v806 = vpack.c.b16 %v692, %v691
    %v807 = vpack.c.b16 %v694, %v693
    %v808 = vpack.c.b16 %v696, %v695
    %v809 = vpack.c.b16 %v698, %v697
    %v810 = vpack.c.b16 %v700, %v699
    %v811 = vpack.c.b16 %v702, %v701
    %v812 = vpack.c.b16 %v704, %v703
    %v813 = vpack.c.b16 %v706, %v705
    %v814 = vpack.c.b16 %v708, %v707
    %v815 = vpack.c.b16 %v710, %v709
    %v816 = vpack.c.b16 %v712, %v711
    %v817 = vpack.c.b16 %v714, %v713
    %v818 = vpack.c.b16 %v716, %v715
    %v819 = vpack.c.b16 %v718, %v717
    %v820 = vpack.c.b16 %v720, %v719
    %v821 = vpack.c.b16 %v722, %v721
    %v822 = vpack.c.b16 %v724, %v723
    %v823 = vpack.c.b16 %v726, %v725
    %v824 = vpack.c.b16 %v728, %v727
    %v825 = vpack.c.b16 %v730, %v729
    %v826 = vpack.c.b16 %v732, %v731
    %v827 = vpack.c.b16 %v734, %v733
    %v828 = vpack.c.b16 %v736, %v735
    %v829 = vpack.c.b16 %v738, %v737
    %v830 = vpack.c.b16 %v740, %v739
    %v831 = vpack.c.b16 %v742, %v741
    %v832 = vpack.c.b16 %v744, %v743
    %921 = vmatprep.subr.bf16.mxu0 0
    %922 = vmatpush1.bf16.msra.mxu0 %v745
    %923 = vmatprep.subr.bf16.mxu0 0
    %924 = vmatpush1.bf16.msra.mxu0 %v746
    %925 = vmatprep.subr.bf16.mxu0 0
    %926 = vmatpush1.bf16.msra.mxu0 %v747
    %927 = vmatprep.subr.bf16.mxu0 0
    %928 = vmatpush1.bf16.msra.mxu0 %v748
    %929 = vmatprep.subr.bf16.mxu0 0
    %930 = vmatpush1.bf16.msra.mxu0 %v749
    %931 = vmatprep.subr.bf16.mxu0 0
    %932 = vmatpush1.bf16.msra.mxu0 %v750
    %933 = vmatprep.subr.bf16.mxu0 0
    %934 = vmatpush1.bf16.msra.mxu0 %v751
    %935 = vmatprep.subr.bf16.mxu0 0
    %936 = vmatpush1.bf16.msra.mxu0 %v752
    %937 = vmatprep.subr.bf16.mxu0 0
    %938 = vmatpush1.bf16.msra.mxu0 %v753
    %939 = vmatprep.subr.bf16.mxu0 0
    %940 = vmatpush1.bf16.msra.mxu0 %v754
    %941 = vmatprep.subr.bf16.mxu0 0
    %942 = vmatpush1.bf16.msra.mxu0 %v755
    %943 = vmatprep.subr.bf16.mxu0 0
    %944 = vmatpush1.bf16.msra.mxu0 %v756
    %945 = vmatprep.subr.bf16.mxu0 0
    %946 = vmatpush1.bf16.msra.mxu0 %v757
    %947 = vmatprep.subr.bf16.mxu0 0
    %948 = vmatpush1.bf16.msra.mxu0 %v758
    %949 = vmatprep.subr.bf16.mxu0 0
    %950 = vmatpush1.bf16.msra.mxu0 %v759
    %951 = vmatprep.subr.bf16.mxu0 0
    %952 = vmatpush1.bf16.msra.mxu0 %v760
    %953 = vmatprep.mubr.bf16.mxu0 %v372
    %954 = vmatmul.mubr.bf16.gmra.mrb[0].mxu0 %v371
    %v955 = vpop.f32.mrb[0].mxu0
    %v956 = vadd.f32 %v335, %v955
    %v957 = vpop.f32.mrb[0].mxu0
    %v958 = vpop.f32.mrb[0].mxu0
    %v959 = vadd.f32 %v335, %v958
    %v960 = vpop.f32.mrb[0].mxu0
    %961 = vdwg.mxu0
    %962 = vmatprep.subr.bf16.mxu0 0
    %963 = vmatpush1.bf16.msra.mxu0 %v761
    %964 = vmatprep.subr.bf16.mxu0 0
    %965 = vmatpush1.bf16.msra.mxu0 %v762
    %966 = vmatprep.subr.bf16.mxu0 0
    %967 = vmatpush1.bf16.msra.mxu0 %v763
    %968 = vmatprep.subr.bf16.mxu0 0
    %969 = vmatpush1.bf16.msra.mxu0 %v764
    %970 = vmatprep.subr.bf16.mxu0 0
    %971 = vmatpush1.bf16.msra.mxu0 %v765
    %972 = vmatprep.subr.bf16.mxu0 0
    %973 = vmatpush1.bf16.msra.mxu0 %v766
    %974 = vmatprep.subr.bf16.mxu0 0
    %975 = vmatpush1.bf16.msra.mxu0 %v767
    %976 = vmatprep.subr.bf16.mxu0 0
    %977 = vmatpush1.bf16.msra.mxu0 %v768
    %978 = vmatprep.subr.bf16.mxu0 0
    %979 = vmatpush1.bf16.msra.mxu0 %v769
    %980 = vmatprep.subr.bf16.mxu0 0
    %981 = vmatpush1.bf16.msra.mxu0 %v770
    %982 = vmatprep.subr.bf16.mxu0 0
    %983 = vmatpush1.bf16.msra.mxu0 %v771
    %984 = vmatprep.subr.bf16.mxu0 0
    %985 = vmatpush1.bf16.msra.mxu0 %v772
    %986 = vmatprep.subr.bf16.mxu0 0
    %987 = vmatpush1.bf16.msra.mxu0 %v773
    %988 = vmatprep.subr.bf16.mxu0 0
    %989 = vmatpush1.bf16.msra.mxu0 %v774
    %990 = vmatprep.subr.bf16.mxu0 0
    %991 = vmatpush1.bf16.msra.mxu0 %v775
    %992 = vmatprep.subr.bf16.mxu0 0
    %993 = vmatpush1.bf16.msra.mxu0 %v776
    %994 = vmatprep.mubr.bf16.mxu0 %v374
    %995 = vmatmul.mubr.bf16.gmra.mrb[0].mxu0 %v373
    %v996 = vpop.f32.mrb[0].mxu0
    %v997 = vadd.f32 %v956, %v996
    %v998 = vpop.f32.mrb[0].mxu0
    %v999 = vpop.f32.mrb[0].mxu0
    %v1000 = vadd.f32 %v959, %v999
    %v1001 = vpop.f32.mrb[0].mxu0
    %1002 = vdwg.mxu0
    %1003 = vmatprep.subr.bf16.mxu0 0
    %1004 = vmatpush1.bf16.msra.mxu0 %v777
    %1005 = vmatprep.subr.bf16.mxu0 0
    %1006 = vmatpush1.bf16.msra.mxu0 %v778
    %1007 = vmatprep.subr.bf16.mxu0 0
    %1008 = vmatpush1.bf16.msra.mxu0 %v779
    %1009 = vmatprep.subr.bf16.mxu0 0
    %1010 = vmatpush1.bf16.msra.mxu0 %v780
    %1011 = vmatprep.subr.bf16.mxu0 0
    %1012 = vmatpush1.bf16.msra.mxu0 %v781
    %1013 = vmatprep.subr.bf16.mxu0 0
    %1014 = vmatpush1.bf16.msra.mxu0 %v782
    %1015 = vmatprep.subr.bf16.mxu0 0
    %1016 = vmatpush1.bf16.msra.mxu0 %v783
    %1017 = vmatprep.subr.bf16.mxu0 0
    %1018 = vmatpush1.bf16.msra.mxu0 %v784
    %1019 = vmatprep.subr.bf16.mxu0 0
    %1020 = vmatpush1.bf16.msra.mxu0 %v785
    %1021 = vmatprep.subr.bf16.mxu0 0
    %1022 = vmatpush1.bf16.msra.mxu0 %v786
    %1023 = vmatprep.subr.bf16.mxu0 0
    %1024 = vmatpush1.bf16.msra.mxu0 %v787
    %1025 = vmatprep.subr.bf16.mxu0 0
    %1026 = vmatpush1.bf16.msra.mxu0 %v788
    %1027 = vmatprep.subr.bf16.mxu0 0
    %1028 = vmatpush1.bf16.msra.mxu0 %v789
    %1029 = vmatprep.subr.bf16.mxu0 0
    %1030 = vmatpush1.bf16.msra.mxu0 %v790
    %1031 = vmatprep.subr.bf16.mxu0 0
    %1032 = vmatpush1.bf16.msra.mxu0 %v791
    %1033 = vmatprep.subr.bf16.mxu0 0
    %1034 = vmatpush1.bf16.msra.mxu0 %v792
    %1035 = vmatprep.mubr.bf16.mxu0 %v376
    %1036 = vmatmul.mubr.bf16.gmra.mrb[0].mxu0 %v375
    %v1037 = vpop.f32.mrb[0].mxu0
    %v1038 = vadd.f32 %v997, %v1037
    %v1039 = vpop.f32.mrb[0].mxu0
    %v1040 = vpop.f32.mrb[0].mxu0
    %v1041 = vadd.f32 %v1000, %v1040
    %v1042 = vpop.f32.mrb[0].mxu0
    %1043 = vdwg.mxu0
    %1044 = vmatprep.subr.bf16.mxu0 0
    %1045 = vmatpush1.bf16.msra.mxu0 %v793
    %1046 = vmatprep.subr.bf16.mxu0 0
    %1047 = vmatpush1.bf16.msra.mxu0 %v794
    %1048 = vmatprep.subr.bf16.mxu0 0
    %1049 = vmatpush1.bf16.msra.mxu0 %v795
    %1050 = vmatprep.subr.bf16.mxu0 0
    %1051 = vmatpush1.bf16.msra.mxu0 %v796
    %1052 = vmatprep.subr.bf16.mxu0 0
    %1053 = vmatpush1.bf16.msra.mxu0 %v797
    %1054 = vmatprep.subr.bf16.mxu0 0
    %1055 = vmatpush1.bf16.msra.mxu0 %v798
    %1056 = vmatprep.subr.bf16.mxu0 0
    %1057 = vmatpush1.bf16.msra.mxu0 %v799
    %1058 = vmatprep.subr.bf16.mxu0 0
    %1059 = vmatpush1.bf16.msra.mxu0 %v800
    %1060 = vmatprep.subr.bf16.mxu0 0
    %1061 = vmatpush1.bf16.msra.mxu0 %v801
    %1062 = vmatprep.subr.bf16.mxu0 0
    %1063 = vmatpush1.bf16.msra.mxu0 %v802
    %1064 = vmatprep.subr.bf16.mxu0 0
    %1065 = vmatpush1.bf16.msra.mxu0 %v803
    %1066 = vmatprep.subr.bf16.mxu0 0
    %1067 = vmatpush1.bf16.msra.mxu0 %v804
    %1068 = vmatprep.subr.bf16.mxu0 0
    %1069 = vmatpush1.bf16.msra.mxu0 %v805
    %1070 = vmatprep.subr.bf16.mxu0 0
    %1071 = vmatpush1.bf16.msra.mxu0 %v806
    %1072 = vmatprep.subr.bf16.mxu0 0
    %1073 = vmatpush1.bf16.msra.mxu0 %v807
    %1074 = vmatprep.subr.bf16.mxu0 0
    %1075 = vmatpush1.bf16.msra.mxu0 %v808
    %1076 = vmatprep.mubr.bf16.mxu0 %v378
    %1077 = vmatmul.mubr.bf16.gmra.mrb[0].mxu0 %v377
    %v1078 = vpop.f32.mrb[0].mxu0
    %v1079 = vadd.f32 %v1038, %v1078
    %v1080 = vpop.f32.mrb[0].mxu0
    %v1081 = vpop.f32.mrb[0].mxu0
    %v1082 = vadd.f32 %v1041, %v1081
    %v1083 = vpop.f32.mrb[0].mxu0
    %1084 = vdwg.mxu0
    %1085 = vmatprep.subr.bf16.mxu0 0
    %1086 = vmatpush1.bf16.msra.mxu0 %v809
    %1087 = vmatprep.subr.bf16.mxu0 0
    %1088 = vmatpush1.bf16.msra.mxu0 %v810
    %1089 = vmatprep.subr.bf16.mxu0 0
    %1090 = vmatpush1.bf16.msra.mxu0 %v811
    %1091 = vmatprep.subr.bf16.mxu0 0
    %1092 = vmatpush1.bf16.msra.mxu0 %v812
    %1093 = vmatprep.subr.bf16.mxu0 0
    %1094 = vmatpush1.bf16.msra.mxu0 %v813
    %1095 = vmatprep.subr.bf16.mxu0 0
    %1096 = vmatpush1.bf16.msra.mxu0 %v814
    %1097 = vmatprep.subr.bf16.mxu0 0
    %1098 = vmatpush1.bf16.msra.mxu0 %v815
    %1099 = vmatprep.subr.bf16.mxu0 0
    %1100 = vmatpush1.bf16.msra.mxu0 %v816
    %1101 = vmatprep.subr.bf16.mxu0 0
    %1102 = vmatpush1.bf16.msra.mxu0 %v817
    %1103 = vmatprep.subr.bf16.mxu0 0
    %1104 = vmatpush1.bf16.msra.mxu0 %v818
    %1105 = vmatprep.subr.bf16.mxu0 0
    %1106 = vmatpush1.bf16.msra.mxu0 %v819
    %1107 = vmatprep.subr.bf16.mxu0 0
    %1108 = vmatpush1.bf16.msra.mxu0 %v820
    %1109 = vmatprep.subr.bf16.mxu0 0
    %1110 = vmatpush1.bf16.msra.mxu0 %v821
    %1111 = vmatprep.subr.bf16.mxu0 0
    %1112 = vmatpush1.bf16.msra.mxu0 %v822
    %1113 = vmatprep.subr.bf16.mxu0 0
    %1114 = vmatpush1.bf16.msra.mxu0 %v823
    %1115 = vmatprep.subr.bf16.mxu0 0
    %1116 = vmatpush1.bf16.msra.mxu0 %v824
    %1117 = vmatprep.mubr.bf16.mxu0 %v380
    %1118 = vmatmul.mubr.bf16.gmra.mrb[0].mxu0 %v379
    %v1119 = vpop.f32.mrb[0].mxu0
    %v1120 = vadd.f32 %v1079, %v1119
    %v1121 = vpop.f32.mrb[0].mxu0
    %v1122 = vpop.f32.mrb[0].mxu0
    %v1123 = vadd.f32 %v1082, %v1122
    %v1124 = vpop.f32.mrb[0].mxu0
    %1125 = vdwg.mxu0
    %1126 = vmatprep.subr.bf16.mxu0 0
    %1127 = vmatpush1.bf16.msra.mxu0 %v825
    %1128 = vmatprep.subr.bf16.mxu0 0
    %1129 = vmatpush1.bf16.msra.mxu0 %v826
    %1130 = vmatprep.subr.bf16.mxu0 0
    %1131 = vmatpush1.bf16.msra.mxu0 %v827
    %1132 = vmatprep.subr.bf16.mxu0 0
    %1133 = vmatpush1.bf16.msra.mxu0 %v828
    %1134 = vmatprep.subr.bf16.mxu0 0
    %1135 = vmatpush1.bf16.msra.mxu0 %v829
    %1136 = vmatprep.subr.bf16.mxu0 0
    %1137 = vmatpush1.bf16.msra.mxu0 %v830
    %1138 = vmatprep.subr.bf16.mxu0 0
    %1139 = vmatpush1.bf16.msra.mxu0 %v831
    %1140 = vmatprep.subr.bf16.mxu0 0
    %1141 = vmatpush1.bf16.msra.mxu0 %v832
    %1142 = vmatprep.subr.bf16.mxu0 0
    %1143 = vmatpush1.bf16.msra.mxu0 0
    %1144 = vmatprep.subr.bf16.mxu0 0
    %1145 = vmatpush1.bf16.msra.mxu0 0
    %1146 = vmatprep.subr.bf16.mxu0 0
    %1147 = vmatpush1.bf16.msra.mxu0 0
    %1148 = vmatprep.subr.bf16.mxu0 0
    %1149 = vmatpush1.bf16.msra.mxu0 0
    %1150 = vmatprep.subr.bf16.mxu0 0
    %1151 = vmatpush1.bf16.msra.mxu0 0
    %1152 = vmatprep.subr.bf16.mxu0 0
    %1153 = vmatpush1.bf16.msra.mxu0 0
    %1154 = vmatprep.subr.bf16.mxu0 0
    %1155 = vmatpush1.bf16.msra.mxu0 0
    %1156 = vmatprep.subr.bf16.mxu0 0
    %1157 = vmatpush1.bf16.msra.mxu0 0
    %1158 = vmatprep.mubr.bf16.mxu0 0
    %1159 = vmatmul.mubr.bf16.gmra.mrb[0].mxu0 %v381
    %v1160 = vpop.f32.mrb[0].mxu0
    %v1161 = vadd.f32 %v1120, %v1160
    %v1162 = vpop.f32.mrb[0].mxu0
    %v1163 = vpop.f32.mrb[0].mxu0
    %v1164 = vadd.f32 %v1123, %v1163
    %v1165 = vpop.f32.mrb[0].mxu0
    %1166 = vdwg.mxu0
    %v1167 = vmax.f32 %v1161, 0.0
    %v1168 = vmax.f32 %v1164, 0.0
    %v1169 = vpack.c.bf16 %v1168, %v1167
    %v1170 = vld [vmem:[#allocation5] sm:$0xff]
    %v1171 = vld [vmem:[#allocation5 + $0x8] sm:$0xff]
    %v1172 = vld [vmem:[#allocation5 + $0x10] sm:$0xff]
    %v1173 = vld [vmem:[#allocation5 + $0x18] sm:$0xff]
    %v1174 = vld [vmem:[#allocation5 + $0x20] sm:$0xff]
    %v1175 = vld [vmem:[#allocation5 + $0x28] sm:$0xff]
    %v1176 = vld [vmem:[#allocation5 + $0x30] sm:$0xff]
    %v1177 = vld [vmem:[#allocation5 + $0x38] sm:$0xff]
    %v1178 = vld [vmem:[#allocation5 + $0x40] sm:$0xff]
    %v1179 = vld [vmem:[#allocation5 + $0x48] sm:$0xff]
    %v1180 = vld [vmem:[#allocation5 + $0x50] sm:$0xff]
    %v1181 = vld [vmem:[#allocation5 + $0x58] sm:$0xff]
    %v1182 = vld [vmem:[#allocation5 + $0x60] sm:$0xff]
    %v1183 = vld [vmem:[#allocation5 + $0x68] sm:$0xff]
    %v1184 = vld [vmem:[#allocation5 + $0x70] sm:$0xff]
    %v1185 = vld [vmem:[#allocation5 + $0x78] sm:$0xff]
    %v1186 = vld [vmem:[#allocation5 + $0x80] sm:$0xff]
    %v1187 = vld [vmem:[#allocation5 + $0x88] sm:$0xff]
    %v1188 = vld [vmem:[#allocation5 + $0x90] sm:$0xff]
    %v1189 = vld [vmem:[#allocation5 + $0x98] sm:$0xff]
    %v1190 = vld [vmem:[#allocation5 + $0xa0] sm:$0xff]
    %v1191 = vld [vmem:[#allocation5 + $0xa8] sm:$0xff]
    %v1192 = vld [vmem:[#allocation5 + $0xb0] sm:$0xff]
    %v1193 = vld [vmem:[#allocation5 + $0xb8] sm:$0xff]
    %v1194 = vld [vmem:[#allocation5 + $0xc0] sm:$0xff]
    %v1195 = vld [vmem:[#allocation5 + $0xc8] sm:$0xff]
    %v1196 = vld [vmem:[#allocation5 + $0xd0] sm:$0xff]
    %v1197 = vld [vmem:[#allocation5 + $0xd8] sm:$0xff]
    %v1198 = vld [vmem:[#allocation5 + $0xe0] sm:$0xff]
    %v1199 = vld [vmem:[#allocation5 + $0xe8] sm:$0xff]
    %v1200 = vld [vmem:[#allocation5 + $0xf0] sm:$0xff]
    %v1201 = vld [vmem:[#allocation5 + $0xf8] sm:$0xff]
    %v1202 = vld [vmem:[#allocation7] sm:$0xff]
    %v1204 = vlaneseq
    %v1205 = vshrl.u32 %v1204, 7
    %v1206 = vsub.s32 0, %v1205
    %v1207 = vrot.slane %v1202, %v1206
    %v1208 = vlaneseq
    %v1209 = vshrl.u32 %v1208, 7
    %v1210 = vsub.s32 1, %v1209
    %v1211 = vrot.slane %v1202, %v1210
    %v1212 = vlaneseq
    %v1213 = vshrl.u32 %v1212, 7
    %v1214 = vsub.s32 2, %v1213
    %v1215 = vrot.slane %v1202, %v1214
    %v1216 = vlaneseq
    %v1217 = vshrl.u32 %v1216, 7
    %v1218 = vsub.s32 3, %v1217
    %v1219 = vrot.slane %v1202, %v1218
    %v1220 = vlaneseq
    %v1221 = vshrl.u32 %v1220, 7
    %v1222 = vsub.s32 4, %v1221
    %v1223 = vrot.slane %v1202, %v1222
    %v1224 = vlaneseq
    %v1225 = vshrl.u32 %v1224, 7
    %v1226 = vsub.s32 5, %v1225
    %v1227 = vrot.slane %v1202, %v1226
    %v1228 = vlaneseq
    %v1229 = vshrl.u32 %v1228, 7
    %v1230 = vsub.s32 6, %v1229
    %v1231 = vrot.slane %v1202, %v1230
    %v1232 = vlaneseq
    %v1233 = vshrl.u32 %v1232, 7
    %v1234 = vsub.s32 7, %v1233
    %v1235 = vrot.slane %v1202, %v1234
    %v1276 = vunpack.c.l.b16 %v1170
    %v1277 = vunpack.c.h.b16 %v1170
    %v1278 = vunpack.c.l.b16 %v1171
    %v1279 = vunpack.c.h.b16 %v1171
    %v1280 = vunpack.c.l.b16 %v1172
    %v1281 = vunpack.c.h.b16 %v1172
    %v1282 = vunpack.c.l.b16 %v1173
    %v1283 = vunpack.c.h.b16 %v1173
    %v1284 = vunpack.c.l.b16 %v1174
    %v1285 = vunpack.c.h.b16 %v1174
    %v1286 = vunpack.c.l.b16 %v1175
    %v1287 = vunpack.c.h.b16 %v1175
    %v1288 = vunpack.c.l.b16 %v1176
    %v1289 = vunpack.c.h.b16 %v1176
    %v1290 = vunpack.c.l.b16 %v1177
    %v1291 = vunpack.c.h.b16 %v1177
    %v1292 = vunpack.c.l.b16 %v1178
    %v1293 = vunpack.c.h.b16 %v1178
    %v1294 = vunpack.c.l.b16 %v1179
    %v1295 = vunpack.c.h.b16 %v1179
    %v1296 = vunpack.c.l.b16 %v1180
    %v1297 = vunpack.c.h.b16 %v1180
    %v1298 = vunpack.c.l.b16 %v1181
    %v1299 = vunpack.c.h.b16 %v1181
    %v1300 = vunpack.c.l.b16 %v1182
    %v1301 = vunpack.c.h.b16 %v1182
    %v1302 = vunpack.c.l.b16 %v1183
    %v1303 = vunpack.c.h.b16 %v1183
    %v1304 = vunpack.c.l.b16 %v1184
    %v1305 = vunpack.c.h.b16 %v1184
    %v1306 = vunpack.c.l.b16 %v1185
    %v1307 = vunpack.c.h.b16 %v1185
    %v1308 = vunpack.c.l.b16 %v1186
    %v1309 = vunpack.c.h.b16 %v1186
    %v1310 = vunpack.c.l.b16 %v1187
    %v1311 = vunpack.c.h.b16 %v1187
    %v1312 = vunpack.c.l.b16 %v1188
    %v1313 = vunpack.c.h.b16 %v1188
    %v1314 = vunpack.c.l.b16 %v1189
    %v1315 = vunpack.c.h.b16 %v1189
    %v1316 = vunpack.c.l.b16 %v1190
    %v1317 = vunpack.c.h.b16 %v1190
    %v1318 = vunpack.c.l.b16 %v1191
    %v1319 = vunpack.c.h.b16 %v1191
    %v1320 = vunpack.c.l.b16 %v1192
    %v1321 = vunpack.c.h.b16 %v1192
    %v1322 = vunpack.c.l.b16 %v1193
    %v1323 = vunpack.c.h.b16 %v1193
    %v1324 = vunpack.c.l.b16 %v1194
    %v1325 = vunpack.c.h.b16 %v1194
    %v1326 = vunpack.c.l.b16 %v1195
    %v1327 = vunpack.c.h.b16 %v1195
    %v1328 = vunpack.c.l.b16 %v1196
    %v1329 = vunpack.c.h.b16 %v1196
    %v1330 = vunpack.c.l.b16 %v1197
    %v1331 = vunpack.c.h.b16 %v1197
    %v1332 = vunpack.c.l.b16 %v1198
    %v1333 = vunpack.c.h.b16 %v1198
    %v1334 = vunpack.c.l.b16 %v1199
    %v1335 = vunpack.c.h.b16 %v1199
    %v1336 = vunpack.c.l.b16 %v1200
    %v1337 = vunpack.c.h.b16 %v1200
    %v1338 = vunpack.c.l.b16 %v1201
    %v1339 = vunpack.c.h.b16 %v1201
    %v1340 = vpack.c.b16 %v1284, %v1276
    %v1341 = vpack.c.b16 %v1285, %v1277
    %v1342 = vpack.c.b16 %v1286, %v1278
    %v1343 = vpack.c.b16 %v1287, %v1279
    %v1344 = vpack.c.b16 %v1288, %v1280
    %v1345 = vpack.c.b16 %v1289, %v1281
    %v1346 = vpack.c.b16 %v1290, %v1282
    %v1347 = vpack.c.b16 %v1291, %v1283
    %v1348 = vpack.c.b16 %v1300, %v1292
    %v1349 = vpack.c.b16 %v1301, %v1293
    %v1350 = vpack.c.b16 %v1302, %v1294
    %v1351 = vpack.c.b16 %v1303, %v1295
    %v1352 = vpack.c.b16 %v1304, %v1296
    %v1353 = vpack.c.b16 %v1305, %v1297
    %v1354 = vpack.c.b16 %v1306, %v1298
    %v1355 = vpack.c.b16 %v1307, %v1299
    %v1356 = vpack.c.b16 %v1316, %v1308
    %v1357 = vpack.c.b16 %v1317, %v1309
    %v1358 = vpack.c.b16 %v1318, %v1310
    %v1359 = vpack.c.b16 %v1319, %v1311
    %v1360 = vpack.c.b16 %v1320, %v1312
    %v1361 = vpack.c.b16 %v1321, %v1313
    %v1362 = vpack.c.b16 %v1322, %v1314
    %v1363 = vpack.c.b16 %v1323, %v1315
    %v1364 = vpack.c.b16 %v1332, %v1324
    %v1365 = vpack.c.b16 %v1333, %v1325
    %v1366 = vpack.c.b16 %v1334, %v1326
    %v1367 = vpack.c.b16 %v1335, %v1327
    %v1368 = vpack.c.b16 %v1336, %v1328
    %v1369 = vpack.c.b16 %v1337, %v1329
    %v1370 = vpack.c.b16 %v1338, %v1330
    %v1371 = vpack.c.b16 %v1339, %v1331
    %vm1404 = vcmask 523264
    %v1406 = vsel %vm1404, %v1169, 0
    %1408 = vmatprep.subr.bf16.mxu0 %v1341
    %1409 = vmatpush1.bf16.msra.mxu0 %v1340
    %1410 = vmatprep.subr.bf16.mxu0 %v1349
    %1411 = vmatpush1.bf16.msra.mxu0 %v1348
    %1412 = vmatprep.subr.bf16.mxu0 %v1357
    %1413 = vmatpush1.bf16.msra.mxu0 %v1356
    %1414 = vmatprep.subr.bf16.mxu0 %v1365
    %1415 = vmatpush1.bf16.msra.mxu0 %v1364
    %1416 = vmatprep.subr.bf16.mxu0 0
    %1417 = vmatpush1.bf16.msra.mxu0 0
    %1418 = vmatprep.subr.bf16.mxu0 0
    %1419 = vmatpush1.bf16.msra.mxu0 0
    %1420 = vmatprep.subr.bf16.mxu0 0
    %1421 = vmatpush1.bf16.msra.mxu0 0
    %1422 = vmatprep.subr.bf16.mxu0 0
    %1423 = vmatpush1.bf16.msra.mxu0 0
    %1424 = vmatprep.subr.bf16.mxu0 0
    %1425 = vmatpush1.bf16.msra.mxu0 0
    %1426 = vmatprep.subr.bf16.mxu0 0
    %1427 = vmatpush1.bf16.msra.mxu0 0
    %1428 = vmatprep.subr.bf16.mxu0 0
    %1429 = vmatpush1.bf16.msra.mxu0 0
    %1430 = vmatprep.subr.bf16.mxu0 0
    %1431 = vmatpush1.bf16.msra.mxu0 0
    %1432 = vmatprep.subr.bf16.mxu0 0
    %1433 = vmatpush1.bf16.msra.mxu0 0
    %1434 = vmatprep.subr.bf16.mxu0 0
    %1435 = vmatpush1.bf16.msra.mxu0 0
    %1436 = vmatprep.subr.bf16.mxu0 0
    %1437 = vmatpush1.bf16.msra.mxu0 0
    %1438 = vmatprep.subr.bf16.mxu0 0
    %1439 = vmatpush1.bf16.msra.mxu0 0
    %1440 = vmatprep.mubr.bf16.mxu0 0
    %1441 = vmatmul.mubr.bf16.gmra.mrb[0].mxu0 %v1406
    %v1442 = vpop.f32.mrb[0].mxu0
    %v1443 = vadd.f32 %v1207, %v1442
    %v1444 = vpop.f32.mrb[0].mxu0
    %v1445 = vadd.f32 %v1211, %v1444
    %v1446 = vpop.f32.mrb[0].mxu0
    %v1447 = vadd.f32 %v1207, %v1446
    %v1448 = vpop.f32.mrb[0].mxu0
    %v1449 = vadd.f32 %v1211, %v1448
    %1450 = vdwg.mxu0
    %1451 = vmatprep.subr.bf16.mxu0 %v1343
    %1452 = vmatpush1.bf16.msra.mxu0 %v1342
    %1453 = vmatprep.subr.bf16.mxu0 %v1351
    %1454 = vmatpush1.bf16.msra.mxu0 %v1350
    %1455 = vmatprep.subr.bf16.mxu0 %v1359
    %1456 = vmatpush1.bf16.msra.mxu0 %v1358
    %1457 = vmatprep.subr.bf16.mxu0 %v1367
    %1458 = vmatpush1.bf16.msra.mxu0 %v1366
    %1459 = vmatprep.subr.bf16.mxu0 0
    %1460 = vmatpush1.bf16.msra.mxu0 0
    %1461 = vmatprep.subr.bf16.mxu0 0
    %1462 = vmatpush1.bf16.msra.mxu0 0
    %1463 = vmatprep.subr.bf16.mxu0 0
    %1464 = vmatpush1.bf16.msra.mxu0 0
    %1465 = vmatprep.subr.bf16.mxu0 0
    %1466 = vmatpush1.bf16.msra.mxu0 0
    %1467 = vmatprep.subr.bf16.mxu0 0
    %1468 = vmatpush1.bf16.msra.mxu0 0
    %1469 = vmatprep.subr.bf16.mxu0 0
    %1470 = vmatpush1.bf16.msra.mxu0 0
    %1471 = vmatprep.subr.bf16.mxu0 0
    %1472 = vmatpush1.bf16.msra.mxu0 0
    %1473 = vmatprep.subr.bf16.mxu0 0
    %1474 = vmatpush1.bf16.msra.mxu0 0
    %1475 = vmatprep.subr.bf16.mxu0 0
    %1476 = vmatpush1.bf16.msra.mxu0 0
    %1477 = vmatprep.subr.bf16.mxu0 0
    %1478 = vmatpush1.bf16.msra.mxu0 0
    %1479 = vmatprep.subr.bf16.mxu0 0
    %1480 = vmatpush1.bf16.msra.mxu0 0
    %1481 = vmatprep.subr.bf16.mxu0 0
    %1482 = vmatpush1.bf16.msra.mxu0 0
    %1483 = vmatprep.mubr.bf16.mxu0 0
    %1484 = vmatmul.mubr.bf16.gmra.mrb[0].mxu0 %v1406
    %v1485 = vpop.f32.mrb[0].mxu0
    %v1486 = vadd.f32 %v1215, %v1485
    %v1487 = vpop.f32.mrb[0].mxu0
    %v1488 = vadd.f32 %v1219, %v1487
    %v1489 = vpop.f32.mrb[0].mxu0
    %v1490 = vadd.f32 %v1215, %v1489
    %v1491 = vpop.f32.mrb[0].mxu0
    %v1492 = vadd.f32 %v1219, %v1491
    %1493 = vdwg.mxu0
    %1494 = vmatprep.subr.bf16.mxu0 %v1345
    %1495 = vmatpush1.bf16.msra.mxu0 %v1344
    %1496 = vmatprep.subr.bf16.mxu0 %v1353
    %1497 = vmatpush1.bf16.msra.mxu0 %v1352
    %1498 = vmatprep.subr.bf16.mxu0 %v1361
    %1499 = vmatpush1.bf16.msra.mxu0 %v1360
    %1500 = vmatprep.subr.bf16.mxu0 %v1369
    %1501 = vmatpush1.bf16.msra.mxu0 %v1368
    %1502 = vmatprep.subr.bf16.mxu0 0
    %1503 = vmatpush1.bf16.msra.mxu0 0
    %1504 = vmatprep.subr.bf16.mxu0 0
    %1505 = vmatpush1.bf16.msra.mxu0 0
    %1506 = vmatprep.subr.bf16.mxu0 0
    %1507 = vmatpush1.bf16.msra.mxu0 0
    %1508 = vmatprep.subr.bf16.mxu0 0
    %1509 = vmatpush1.bf16.msra.mxu0 0
    %1510 = vmatprep.subr.bf16.mxu0 0
    %1511 = vmatpush1.bf16.msra.mxu0 0
    %1512 = vmatprep.subr.bf16.mxu0 0
    %1513 = vmatpush1.bf16.msra.mxu0 0
    %1514 = vmatprep.subr.bf16.mxu0 0
    %1515 = vmatpush1.bf16.msra.mxu0 0
    %1516 = vmatprep.subr.bf16.mxu0 0
    %1517 = vmatpush1.bf16.msra.mxu0 0
    %1518 = vmatprep.subr.bf16.mxu0 0
    %1519 = vmatpush1.bf16.msra.mxu0 0
    %1520 = vmatprep.subr.bf16.mxu0 0
    %1521 = vmatpush1.bf16.msra.mxu0 0
    %1522 = vmatprep.subr.bf16.mxu0 0
    %1523 = vmatpush1.bf16.msra.mxu0 0
    %1524 = vmatprep.subr.bf16.mxu0 0
    %1525 = vmatpush1.bf16.msra.mxu0 0
    %1526 = vmatprep.mubr.bf16.mxu0 0
    %1527 = vmatmul.mubr.bf16.gmra.mrb[0].mxu0 %v1406
    %v1528 = vpop.f32.mrb[0].mxu0
    %v1529 = vadd.f32 %v1223, %v1528
    %v1530 = vpop.f32.mrb[0].mxu0
    %v1531 = vadd.f32 %v1227, %v1530
    %v1532 = vpop.f32.mrb[0].mxu0
    %v1533 = vadd.f32 %v1223, %v1532
    %v1534 = vpop.f32.mrb[0].mxu0
    %v1535 = vadd.f32 %v1227, %v1534
    %1536 = vdwg.mxu0
    %1537 = vmatprep.subr.bf16.mxu0 %v1347
    %1538 = vmatpush1.bf16.msra.mxu0 %v1346
    %1539 = vmatprep.subr.bf16.mxu0 %v1355
    %1540 = vmatpush1.bf16.msra.mxu0 %v1354
    %1541 = vmatprep.subr.bf16.mxu0 %v1363
    %1542 = vmatpush1.bf16.msra.mxu0 %v1362
    %1543 = vmatprep.subr.bf16.mxu0 %v1371
    %1544 = vmatpush1.bf16.msra.mxu0 %v1370
    %1545 = vmatprep.subr.bf16.mxu0 0
    %1546 = vmatpush1.bf16.msra.mxu0 0
    %1547 = vmatprep.subr.bf16.mxu0 0
    %1548 = vmatpush1.bf16.msra.mxu0 0
    %1549 = vmatprep.subr.bf16.mxu0 0
    %1550 = vmatpush1.bf16.msra.mxu0 0
    %1551 = vmatprep.subr.bf16.mxu0 0
    %1552 = vmatpush1.bf16.msra.mxu0 0
    %1553 = vmatprep.subr.bf16.mxu0 0
    %1554 = vmatpush1.bf16.msra.mxu0 0
    %1555 = vmatprep.subr.bf16.mxu0 0
    %1556 = vmatpush1.bf16.msra.mxu0 0
    %1557 = vmatprep.subr.bf16.mxu0 0
    %1558 = vmatpush1.bf16.msra.mxu0 0
    %1559 = vmatprep.subr.bf16.mxu0 0
    %1560 = vmatpush1.bf16.msra.mxu0 0
    %1561 = vmatprep.subr.bf16.mxu0 0
    %1562 = vmatpush1.bf16.msra.mxu0 0
    %1563 = vmatprep.subr.bf16.mxu0 0
    %1564 = vmatpush1.bf16.msra.mxu0 0
    %1565 = vmatprep.subr.bf16.mxu0 0
    %1566 = vmatpush1.bf16.msra.mxu0 0
    %1567 = vmatprep.subr.bf16.mxu0 0
    %1568 = vmatpush1.bf16.msra.mxu0 0
    %1569 = vmatprep.mubr.bf16.mxu0 0
    %1570 = vmatmul.mubr.bf16.gmra.mrb[0].mxu0 %v1406
    %v1571 = vpop.f32.mrb[0].mxu0
    %v1572 = vadd.f32 %v1231, %v1571
    %v1573 = vpop.f32.mrb[0].mxu0
    %v1574 = vadd.f32 %v1235, %v1573
    %v1575 = vpop.f32.mrb[0].mxu0
    %v1576 = vadd.f32 %v1231, %v1575
    %v1577 = vpop.f32.mrb[0].mxu0
    %v1578 = vadd.f32 %v1235, %v1577
    %1579 = vdwg.mxu0
    %v1580 = vmax.f32 %v1443, 0.0
    %v1581 = vmax.f32 %v1445, 0.0
    %v1582 = vmax.f32 %v1486, 0.0
    %v1583 = vmax.f32 %v1488, 0.0
    %v1584 = vmax.f32 %v1529, 0.0
    %v1585 = vmax.f32 %v1531, 0.0
    %v1586 = vmax.f32 %v1572, 0.0
    %v1587 = vmax.f32 %v1574, 0.0
    %v1588 = vmax.f32 %v1447, 0.0
    %v1589 = vmax.f32 %v1449, 0.0
    %v1590 = vmax.f32 %v1490, 0.0
    %v1591 = vmax.f32 %v1492, 0.0
    %v1592 = vmax.f32 %v1533, 0.0
    %v1593 = vmax.f32 %v1535, 0.0
    %v1594 = vmax.f32 %v1576, 0.0
    %v1595 = vmax.f32 %v1578, 0.0
    %v1596 = vpack.c.bf16 %v1588, %v1580
    %v1597 = vpack.c.bf16 %v1589, %v1581
    %v1598 = vpack.c.bf16 %v1590, %v1582
    %v1599 = vpack.c.bf16 %v1591, %v1583
    %v1600 = vpack.c.bf16 %v1592, %v1584
    %v1601 = vpack.c.bf16 %v1593, %v1585
    %v1602 = vpack.c.bf16 %v1594, %v1586
    %v1603 = vpack.c.bf16 %v1595, %v1587
    %v1604 = vld [vmem:[#allocation8] sm:$0xff]
    %v1605 = vld [vmem:[#allocation8 + $0x8] sm:$0xff]
    %v1606 = vld [vmem:[#allocation8 + $0x10] sm:$0xff]
    %v1607 = vld [vmem:[#allocation8 + $0x18] sm:$0xff]
    %v1608 = vld [vmem:[#allocation8 + $0x20] sm:$0xff]
    %v1609 = vld [vmem:[#allocation8 + $0x28] sm:$0xff]
    %v1610 = vld [vmem:[#allocation8 + $0x30] sm:$0xff]
    %v1611 = vld [vmem:[#allocation8 + $0x38] sm:$0xff]
    %v1612 = vld [vmem:[#allocation8 + $0x40] sm:$0xff]
    %v1613 = vld [vmem:[#allocation8 + $0x48] sm:$0xff]
    %v1614 = vld [vmem:[#allocation8 + $0x50] sm:$0xff]
    %v1615 = vld [vmem:[#allocation8 + $0x58] sm:$0xff]
    %v1616 = vld [vmem:[#allocation8 + $0x60] sm:$0xff]
    %v1617 = vld [vmem:[#allocation8 + $0x68] sm:$0xff]
    %v1618 = vld [vmem:[#allocation8 + $0x70] sm:$0xff]
    %v1619 = vld [vmem:[#allocation8 + $0x78] sm:$0xff]
    %v1620 = vld [vmem:[#allocation8 + $0x80] sm:$0xff]
    %v1621 = vld [vmem:[#allocation8 + $0x88] sm:$0xff]
    %v1622 = vld [vmem:[#allocation8 + $0x90] sm:$0xff]
    %v1623 = vld [vmem:[#allocation8 + $0x98] sm:$0xff]
    %v1624 = vld [vmem:[#allocation8 + $0xa0] sm:$0xff]
    %v1625 = vld [vmem:[#allocation8 + $0xa8] sm:$0xff]
    %v1626 = vld [vmem:[#allocation8 + $0xb0] sm:$0xff]
    %v1627 = vld [vmem:[#allocation8 + $0xb8] sm:$0xff]
    %v1628 = vld [vmem:[#allocation8 + $0xc0] sm:$0xff]
    %v1629 = vld [vmem:[#allocation8 + $0xc8] sm:$0xff]
    %v1630 = vld [vmem:[#allocation8 + $0xd0] sm:$0xff]
    %v1631 = vld [vmem:[#allocation8 + $0xd8] sm:$0xff]
    %v1632 = vld [vmem:[#allocation8 + $0xe0] sm:$0xff]
    %v1633 = vld [vmem:[#allocation8 + $0xe8] sm:$0xff]
    %v1634 = vld [vmem:[#allocation8 + $0xf0] sm:$0xff]
    %v1635 = vld [vmem:[#allocation8 + $0xf8] sm:$0xff]
    %v1636 = vld [vmem:[#allocation8 + $0x100] sm:$0xff]
    %v1637 = vld [vmem:[#allocation8 + $0x108] sm:$0xff]
    %v1638 = vld [vmem:[#allocation8 + $0x110] sm:$0xff]
    %v1639 = vld [vmem:[#allocation8 + $0x118] sm:$0xff]
    %v1640 = vld [vmem:[#allocation8 + $0x120] sm:$0xff]
    %v1641 = vld [vmem:[#allocation8 + $0x128] sm:$0xff]
    %v1642 = vld [vmem:[#allocation8 + $0x130] sm:$0xff]
    %v1643 = vld [vmem:[#allocation8 + $0x138] sm:$0xff]
    %v1644 = vld [vmem:[#allocation8 + $0x140] sm:$0xff]
    %v1645 = vld [vmem:[#allocation8 + $0x148] sm:$0xff]
    %v1646 = vld [vmem:[#allocation8 + $0x150] sm:$0xff]
    %v1647 = vld [vmem:[#allocation8 + $0x158] sm:$0xff]
    %v1648 = vld [vmem:[#allocation8 + $0x160] sm:$0xff]
    %v1649 = vld [vmem:[#allocation8 + $0x168] sm:$0xff]
    %v1650 = vld [vmem:[#allocation8 + $0x170] sm:$0xff]
    %v1651 = vld [vmem:[#allocation8 + $0x178] sm:$0xff]
    %v1652 = vld [vmem:[#allocation8 + $0x180] sm:$0xff]
    %v1653 = vld [vmem:[#allocation8 + $0x188] sm:$0xff]
    %v1654 = vld [vmem:[#allocation8 + $0x190] sm:$0xff]
    %v1655 = vld [vmem:[#allocation8 + $0x198] sm:$0xff]
    %v1656 = vld [vmem:[#allocation8 + $0x1a0] sm:$0xff]
    %v1657 = vld [vmem:[#allocation8 + $0x1a8] sm:$0xff]
    %v1658 = vld [vmem:[#allocation8 + $0x1b0] sm:$0xff]
    %v1659 = vld [vmem:[#allocation8 + $0x1b8] sm:$0xff]
    %v1660 = vld [vmem:[#allocation8 + $0x1c0] sm:$0xff]
    %v1661 = vld [vmem:[#allocation8 + $0x1c8] sm:$0xff]
    %v1662 = vld [vmem:[#allocation8 + $0x1d0] sm:$0xff]
    %v1663 = vld [vmem:[#allocation8 + $0x1d8] sm:$0xff]
    %v1664 = vld [vmem:[#allocation8 + $0x1e0] sm:$0xff]
    %v1665 = vld [vmem:[#allocation8 + $0x1e8] sm:$0xff]
    %v1666 = vld [vmem:[#allocation8 + $0x1f0] sm:$0xff]
    %v1667 = vld [vmem:[#allocation8 + $0x1f8] sm:$0xff]
    %v1668 = vld [vmem:[#allocation8 + $0x200] sm:$0xff]
    %v1669 = vld [vmem:[#allocation8 + $0x208] sm:$0xff]
    %v1670 = vld [vmem:[#allocation8 + $0x210] sm:$0xff]
    %v1671 = vld [vmem:[#allocation8 + $0x218] sm:$0xff]
    %v1672 = vld [vmem:[#allocation8 + $0x220] sm:$0xff]
    %v1673 = vld [vmem:[#allocation8 + $0x228] sm:$0xff]
    %v1674 = vld [vmem:[#allocation8 + $0x230] sm:$0xff]
    %v1675 = vld [vmem:[#allocation8 + $0x238] sm:$0xff]
    %v1676 = vld [vmem:[#allocation8 + $0x240] sm:$0xff]
    %v1677 = vld [vmem:[#allocation8 + $0x248] sm:$0xff]
    %v1678 = vld [vmem:[#allocation8 + $0x250] sm:$0xff]
    %v1679 = vld [vmem:[#allocation8 + $0x258] sm:$0xff]
    %v1680 = vld [vmem:[#allocation8 + $0x260] sm:$0xff]
    %v1681 = vld [vmem:[#allocation8 + $0x268] sm:$0xff]
    %v1682 = vld [vmem:[#allocation8 + $0x270] sm:$0xff]
    %v1683 = vld [vmem:[#allocation8 + $0x278] sm:$0xff]
    %v1684 = vld [vmem:[#allocation8 + $0x280] sm:$0xff]
    %v1685 = vld [vmem:[#allocation8 + $0x288] sm:$0xff]
    %v1686 = vld [vmem:[#allocation8 + $0x290] sm:$0xff]
    %v1687 = vld [vmem:[#allocation8 + $0x298] sm:$0xff]
    %v1688 = vld [vmem:[#allocation8 + $0x2a0] sm:$0xff]
    %v1689 = vld [vmem:[#allocation8 + $0x2a8] sm:$0xff]
    %v1690 = vld [vmem:[#allocation8 + $0x2b0] sm:$0xff]
    %v1691 = vld [vmem:[#allocation8 + $0x2b8] sm:$0xff]
    %v1692 = vld [vmem:[#allocation8 + $0x2c0] sm:$0xff]
    %v1693 = vld [vmem:[#allocation8 + $0x2c8] sm:$0xff]
    %v1694 = vld [vmem:[#allocation8 + $0x2d0] sm:$0xff]
    %v1695 = vld [vmem:[#allocation8 + $0x2d8] sm:$0xff]
    %v1696 = vld [vmem:[#allocation8 + $0x2e0] sm:$0xff]
    %v1697 = vld [vmem:[#allocation8 + $0x2e8] sm:$0xff]
    %v1698 = vld [vmem:[#allocation8 + $0x2f0] sm:$0xff]
    %v1699 = vld [vmem:[#allocation8 + $0x2f8] sm:$0xff]
    %v1700 = vld [vmem:[#allocation8 + $0x300] sm:$0xff]
    %v1701 = vld [vmem:[#allocation8 + $0x308] sm:$0xff]
    %v1702 = vld [vmem:[#allocation8 + $0x310] sm:$0xff]
    %v1703 = vld [vmem:[#allocation8 + $0x318] sm:$0xff]
    %v1704 = vld [vmem:[#allocation8 + $0x320] sm:$0xff]
    %v1705 = vld [vmem:[#allocation8 + $0x328] sm:$0xff]
    %v1706 = vld [vmem:[#allocation8 + $0x330] sm:$0xff]
    %v1707 = vld [vmem:[#allocation8 + $0x338] sm:$0xff]
    %v1708 = vld [vmem:[#allocation8 + $0x340] sm:$0xff]
    %v1709 = vld [vmem:[#allocation8 + $0x348] sm:$0xff]
    %v1710 = vld [vmem:[#allocation8 + $0x350] sm:$0xff]
    %v1711 = vld [vmem:[#allocation8 + $0x358] sm:$0xff]
    %v1712 = vld [vmem:[#allocation8 + $0x360] sm:$0xff]
    %v1713 = vld [vmem:[#allocation8 + $0x368] sm:$0xff]
    %v1714 = vld [vmem:[#allocation8 + $0x370] sm:$0xff]
    %v1715 = vld [vmem:[#allocation8 + $0x378] sm:$0xff]
    %v1716 = vld [vmem:[#allocation8 + $0x380] sm:$0xff]
    %v1717 = vld [vmem:[#allocation8 + $0x388] sm:$0xff]
    %v1718 = vld [vmem:[#allocation8 + $0x390] sm:$0xff]
    %v1719 = vld [vmem:[#allocation8 + $0x398] sm:$0xff]
    %v1720 = vld [vmem:[#allocation8 + $0x3a0] sm:$0xff]
    %v1721 = vld [vmem:[#allocation8 + $0x3a8] sm:$0xff]
    %v1722 = vld [vmem:[#allocation8 + $0x3b0] sm:$0xff]
    %v1723 = vld [vmem:[#allocation8 + $0x3b8] sm:$0xff]
    %v1724 = vld [vmem:[#allocation8 + $0x3c0] sm:$0xff]
    %v1725 = vld [vmem:[#allocation8 + $0x3c8] sm:$0xff]
    %v1726 = vld [vmem:[#allocation8 + $0x3d0] sm:$0xff]
    %v1727 = vld [vmem:[#allocation8 + $0x3d8] sm:$0xff]
    %v1728 = vld [vmem:[#allocation8 + $0x3e0] sm:$0xff]
    %v1729 = vld [vmem:[#allocation8 + $0x3e8] sm:$0xff]
    %v1730 = vld [vmem:[#allocation8 + $0x3f0] sm:$0xff]
    %v1731 = vld [vmem:[#allocation8 + $0x3f8] sm:$0xff]
    %v1732 = vld [vmem:[#allocation8 + $0x400] sm:$0xff]
    %v1733 = vld [vmem:[#allocation8 + $0x408] sm:$0xff]
    %v1734 = vld [vmem:[#allocation8 + $0x410] sm:$0xff]
    %v1735 = vld [vmem:[#allocation8 + $0x418] sm:$0xff]
    %v1736 = vld [vmem:[#allocation8 + $0x420] sm:$0xff]
    %v1737 = vld [vmem:[#allocation8 + $0x428] sm:$0xff]
    %v1738 = vld [vmem:[#allocation8 + $0x430] sm:$0xff]
    %v1739 = vld [vmem:[#allocation8 + $0x438] sm:$0xff]
    %v1740 = vld [vmem:[#allocation8 + $0x440] sm:$0xff]
    %v1741 = vld [vmem:[#allocation8 + $0x448] sm:$0xff]
    %v1742 = vld [vmem:[#allocation8 + $0x450] sm:$0xff]
    %v1743 = vld [vmem:[#allocation8 + $0x458] sm:$0xff]
    %v1744 = vld [vmem:[#allocation8 + $0x460] sm:$0xff]
    %v1745 = vld [vmem:[#allocation8 + $0x468] sm:$0xff]
    %v1746 = vld [vmem:[#allocation8 + $0x470] sm:$0xff]
    %v1747 = vld [vmem:[#allocation8 + $0x478] sm:$0xff]
    %v1748 = vld [vmem:[#allocation8 + $0x480] sm:$0xff]
    %v1749 = vld [vmem:[#allocation8 + $0x488] sm:$0xff]
    %v1750 = vld [vmem:[#allocation8 + $0x490] sm:$0xff]
    %v1751 = vld [vmem:[#allocation8 + $0x498] sm:$0xff]
    %v1752 = vld [vmem:[#allocation8 + $0x4a0] sm:$0xff]
    %v1753 = vld [vmem:[#allocation8 + $0x4a8] sm:$0xff]
    %v1754 = vld [vmem:[#allocation8 + $0x4b0] sm:$0xff]
    %v1755 = vld [vmem:[#allocation8 + $0x4b8] sm:$0xff]
    %v1756 = vld [vmem:[#allocation8 + $0x4c0] sm:$0xff]
    %v1757 = vld [vmem:[#allocation8 + $0x4c8] sm:$0xff]
    %v1758 = vld [vmem:[#allocation8 + $0x4d0] sm:$0xff]
    %v1759 = vld [vmem:[#allocation8 + $0x4d8] sm:$0xff]
    %v1760 = vld [vmem:[#allocation8 + $0x4e0] sm:$0xff]
    %v1761 = vld [vmem:[#allocation8 + $0x4e8] sm:$0xff]
    %v1762 = vld [vmem:[#allocation8 + $0x4f0] sm:$0xff]
    %v1763 = vld [vmem:[#allocation8 + $0x4f8] sm:$0xff]
    %v1764 = vld [vmem:[#allocation8 + $0x500] sm:$0xff]
    %v1765 = vld [vmem:[#allocation8 + $0x508] sm:$0xff]
    %v1766 = vld [vmem:[#allocation8 + $0x510] sm:$0xff]
    %v1767 = vld [vmem:[#allocation8 + $0x518] sm:$0xff]
    %v1768 = vld [vmem:[#allocation8 + $0x520] sm:$0xff]
    %v1769 = vld [vmem:[#allocation8 + $0x528] sm:$0xff]
    %v1770 = vld [vmem:[#allocation8 + $0x530] sm:$0xff]
    %v1771 = vld [vmem:[#allocation8 + $0x538] sm:$0xff]
    %v1772 = vld [vmem:[#allocation8 + $0x540] sm:$0xff]
    %v1773 = vld [vmem:[#allocation8 + $0x548] sm:$0xff]
    %v1774 = vld [vmem:[#allocation8 + $0x550] sm:$0xff]
    %v1775 = vld [vmem:[#allocation8 + $0x558] sm:$0xff]
    %v1776 = vld [vmem:[#allocation8 + $0x560] sm:$0xff]
    %v1777 = vld [vmem:[#allocation8 + $0x568] sm:$0xff]
    %v1778 = vld [vmem:[#allocation8 + $0x570] sm:$0xff]
    %v1779 = vld [vmem:[#allocation8 + $0x578] sm:$0xff]
    %v1780 = vld [vmem:[#allocation8 + $0x580] sm:$0xff]
    %v1781 = vld [vmem:[#allocation8 + $0x588] sm:$0xff]
    %v1782 = vld [vmem:[#allocation8 + $0x590] sm:$0xff]
    %v1783 = vld [vmem:[#allocation8 + $0x598] sm:$0xff]
    %v1784 = vld [vmem:[#allocation8 + $0x5a0] sm:$0xff]
    %v1785 = vld [vmem:[#allocation8 + $0x5a8] sm:$0xff]
    %v1786 = vld [vmem:[#allocation8 + $0x5b0] sm:$0xff]
    %v1787 = vld [vmem:[#allocation8 + $0x5b8] sm:$0xff]
    %v1788 = vld [vmem:[#allocation8 + $0x5c0] sm:$0xff]
    %v1789 = vld [vmem:[#allocation8 + $0x5c8] sm:$0xff]
    %v1790 = vld [vmem:[#allocation8 + $0x5d0] sm:$0xff]
    %v1791 = vld [vmem:[#allocation8 + $0x5d8] sm:$0xff]
    %v1792 = vld [vmem:[#allocation8 + $0x5e0] sm:$0xff]
    %v1793 = vld [vmem:[#allocation8 + $0x5e8] sm:$0xff]
    %v1794 = vld [vmem:[#allocation8 + $0x5f0] sm:$0xff]
    %v1795 = vld [vmem:[#allocation8 + $0x5f8] sm:$0xff]
    %v1796 = vld [vmem:[#allocation8 + $0x600] sm:$0xff]
    %v1797 = vld [vmem:[#allocation8 + $0x608] sm:$0xff]
    %v1798 = vld [vmem:[#allocation8 + $0x610] sm:$0xff]
    %v1799 = vld [vmem:[#allocation8 + $0x618] sm:$0xff]
    %v1800 = vld [vmem:[#allocation8 + $0x620] sm:$0xff]
    %v1801 = vld [vmem:[#allocation8 + $0x628] sm:$0xff]
    %v1802 = vld [vmem:[#allocation8 + $0x630] sm:$0xff]
    %v1803 = vld [vmem:[#allocation8 + $0x638] sm:$0xff]
    %v1804 = vld [vmem:[#allocation8 + $0x640] sm:$0xff]
    %v1805 = vld [vmem:[#allocation8 + $0x648] sm:$0xff]
    %v1806 = vld [vmem:[#allocation8 + $0x650] sm:$0xff]
    %v1807 = vld [vmem:[#allocation8 + $0x658] sm:$0xff]
    %v1808 = vld [vmem:[#allocation8 + $0x660] sm:$0xff]
    %v1809 = vld [vmem:[#allocation8 + $0x668] sm:$0xff]
    %v1810 = vld [vmem:[#allocation8 + $0x670] sm:$0xff]
    %v1811 = vld [vmem:[#allocation8 + $0x678] sm:$0xff]
    %v1812 = vld [vmem:[#allocation8 + $0x680] sm:$0xff]
    %v1813 = vld [vmem:[#allocation8 + $0x688] sm:$0xff]
    %v1814 = vld [vmem:[#allocation8 + $0x690] sm:$0xff]
    %v1815 = vld [vmem:[#allocation8 + $0x698] sm:$0xff]
    %v1816 = vld [vmem:[#allocation8 + $0x6a0] sm:$0xff]
    %v1817 = vld [vmem:[#allocation8 + $0x6a8] sm:$0xff]
    %v1818 = vld [vmem:[#allocation8 + $0x6b0] sm:$0xff]
    %v1819 = vld [vmem:[#allocation8 + $0x6b8] sm:$0xff]
    %v1820 = vld [vmem:[#allocation8 + $0x6c0] sm:$0xff]
    %v1821 = vld [vmem:[#allocation8 + $0x6c8] sm:$0xff]
    %v1822 = vld [vmem:[#allocation8 + $0x6d0] sm:$0xff]
    %v1823 = vld [vmem:[#allocation8 + $0x6d8] sm:$0xff]
    %v1824 = vld [vmem:[#allocation8 + $0x6e0] sm:$0xff]
    %v1825 = vld [vmem:[#allocation8 + $0x6e8] sm:$0xff]
    %v1826 = vld [vmem:[#allocation8 + $0x6f0] sm:$0xff]
    %v1827 = vld [vmem:[#allocation8 + $0x6f8] sm:$0xff]
    %v1828 = vld [vmem:[#allocation8 + $0x700] sm:$0xff]
    %v1829 = vld [vmem:[#allocation8 + $0x708] sm:$0xff]
    %v1830 = vld [vmem:[#allocation8 + $0x710] sm:$0xff]
    %v1831 = vld [vmem:[#allocation8 + $0x718] sm:$0xff]
    %v1832 = vld [vmem:[#allocation8 + $0x720] sm:$0xff]
    %v1833 = vld [vmem:[#allocation8 + $0x728] sm:$0xff]
    %v1834 = vld [vmem:[#allocation8 + $0x730] sm:$0xff]
    %v1835 = vld [vmem:[#allocation8 + $0x738] sm:$0xff]
    %v1836 = vld [vmem:[#allocation8 + $0x740] sm:$0xff]
    %v1837 = vld [vmem:[#allocation8 + $0x748] sm:$0xff]
    %v1838 = vld [vmem:[#allocation8 + $0x750] sm:$0xff]
    %v1839 = vld [vmem:[#allocation8 + $0x758] sm:$0xff]
    %v1840 = vld [vmem:[#allocation8 + $0x760] sm:$0xff]
    %v1841 = vld [vmem:[#allocation8 + $0x768] sm:$0xff]
    %v1842 = vld [vmem:[#allocation8 + $0x770] sm:$0xff]
    %v1843 = vld [vmem:[#allocation8 + $0x778] sm:$0xff]
    %v1844 = vld [vmem:[#allocation8 + $0x780] sm:$0xff]
    %v1845 = vld [vmem:[#allocation8 + $0x788] sm:$0xff]
    %v1846 = vld [vmem:[#allocation8 + $0x790] sm:$0xff]
    %v1847 = vld [vmem:[#allocation8 + $0x798] sm:$0xff]
    %v1848 = vld [vmem:[#allocation8 + $0x7a0] sm:$0xff]
    %v1849 = vld [vmem:[#allocation8 + $0x7a8] sm:$0xff]
    %v1850 = vld [vmem:[#allocation8 + $0x7b0] sm:$0xff]
    %v1851 = vld [vmem:[#allocation8 + $0x7b8] sm:$0xff]
    %v1852 = vld [vmem:[#allocation8 + $0x7c0] sm:$0xff]
    %v1853 = vld [vmem:[#allocation8 + $0x7c8] sm:$0xff]
    %v1854 = vld [vmem:[#allocation8 + $0x7d0] sm:$0xff]
    %v1855 = vld [vmem:[#allocation8 + $0x7d8] sm:$0xff]
    %v1856 = vld [vmem:[#allocation8 + $0x7e0] sm:$0xff]
    %v1857 = vld [vmem:[#allocation8 + $0x7e8] sm:$0xff]
    %v1858 = vld [vmem:[#allocation8 + $0x7f0] sm:$0xff]
    %v1859 = vld [vmem:[#allocation8 + $0x7f8] sm:$0xff]
    %v1860 = vld [vmem:[#allocation8 + $0x800] sm:$0xff]
    %v1861 = vld [vmem:[#allocation8 + $0x808] sm:$0xff]
    %v1862 = vld [vmem:[#allocation8 + $0x810] sm:$0xff]
    %v1863 = vld [vmem:[#allocation8 + $0x818] sm:$0xff]
    %v1864 = vld [vmem:[#allocation8 + $0x820] sm:$0xff]
    %v1865 = vld [vmem:[#allocation8 + $0x828] sm:$0xff]
    %v1866 = vld [vmem:[#allocation8 + $0x830] sm:$0xff]
    %v1867 = vld [vmem:[#allocation8 + $0x838] sm:$0xff]
    %v1868 = vld [vmem:[#allocation8 + $0x840] sm:$0xff]
    %v1869 = vld [vmem:[#allocation8 + $0x848] sm:$0xff]
    %v1870 = vld [vmem:[#allocation8 + $0x850] sm:$0xff]
    %v1871 = vld [vmem:[#allocation8 + $0x858] sm:$0xff]
    %v1872 = vld [vmem:[#allocation8 + $0x860] sm:$0xff]
    %v1873 = vld [vmem:[#allocation8 + $0x868] sm:$0xff]
    %v1874 = vld [vmem:[#allocation8 + $0x870] sm:$0xff]
    %v1875 = vld [vmem:[#allocation8 + $0x878] sm:$0xff]
    %v1876 = vld [vmem:[#allocation8 + $0x880] sm:$0xff]
    %v1877 = vld [vmem:[#allocation8 + $0x888] sm:$0xff]
    %v1878 = vld [vmem:[#allocation8 + $0x890] sm:$0xff]
    %v1879 = vld [vmem:[#allocation8 + $0x898] sm:$0xff]
    %v1880 = vld [vmem:[#allocation8 + $0x8a0] sm:$0xff]
    %v1881 = vld [vmem:[#allocation8 + $0x8a8] sm:$0xff]
    %v1882 = vld [vmem:[#allocation8 + $0x8b0] sm:$0xff]
    %v1883 = vld [vmem:[#allocation8 + $0x8b8] sm:$0xff]
    %v1884 = vld [vmem:[#allocation8 + $0x8c0] sm:$0xff]
    %v1885 = vld [vmem:[#allocation8 + $0x8c8] sm:$0xff]
    %v1886 = vld [vmem:[#allocation8 + $0x8d0] sm:$0xff]
    %v1887 = vld [vmem:[#allocation8 + $0x8d8] sm:$0xff]
    %v1888 = vld [vmem:[#allocation8 + $0x8e0] sm:$0xff]
    %v1889 = vld [vmem:[#allocation8 + $0x8e8] sm:$0xff]
    %v1890 = vld [vmem:[#allocation8 + $0x8f0] sm:$0xff]
    %v1891 = vld [vmem:[#allocation8 + $0x8f8] sm:$0xff]
    %v1892 = vld [vmem:[#allocation8 + $0x900] sm:$0xff]
    %v1893 = vld [vmem:[#allocation8 + $0x908] sm:$0xff]
    %v1894 = vld [vmem:[#allocation8 + $0x910] sm:$0xff]
    %v1895 = vld [vmem:[#allocation8 + $0x918] sm:$0xff]
    %v1896 = vld [vmem:[#allocation8 + $0x920] sm:$0xff]
    %v1897 = vld [vmem:[#allocation8 + $0x928] sm:$0xff]
    %v1898 = vld [vmem:[#allocation8 + $0x930] sm:$0xff]
    %v1899 = vld [vmem:[#allocation8 + $0x938] sm:$0xff]
    %v1900 = vld [vmem:[#allocation8 + $0x940] sm:$0xff]
    %v1901 = vld [vmem:[#allocation8 + $0x948] sm:$0xff]
    %v1902 = vld [vmem:[#allocation8 + $0x950] sm:$0xff]
    %v1903 = vld [vmem:[#allocation8 + $0x958] sm:$0xff]
    %v1904 = vld [vmem:[#allocation8 + $0x960] sm:$0xff]
    %v1905 = vld [vmem:[#allocation8 + $0x968] sm:$0xff]
    %v1906 = vld [vmem:[#allocation8 + $0x970] sm:$0xff]
    %v1907 = vld [vmem:[#allocation8 + $0x978] sm:$0xff]
    %v1908 = vld [vmem:[#allocation8 + $0x980] sm:$0xff]
    %v1909 = vld [vmem:[#allocation8 + $0x988] sm:$0xff]
    %v1910 = vld [vmem:[#allocation8 + $0x990] sm:$0xff]
    %v1911 = vld [vmem:[#allocation8 + $0x998] sm:$0xff]
    %v1912 = vld [vmem:[#allocation8 + $0x9a0] sm:$0xff]
    %v1913 = vld [vmem:[#allocation8 + $0x9a8] sm:$0xff]
    %v1914 = vld [vmem:[#allocation8 + $0x9b0] sm:$0xff]
    %v1915 = vld [vmem:[#allocation8 + $0x9b8] sm:$0xff]
    %v1916 = vld [vmem:[#allocation8 + $0x9c0] sm:$0xff]
    %v1917 = vld [vmem:[#allocation8 + $0x9c8] sm:$0xff]
    %v1918 = vld [vmem:[#allocation8 + $0x9d0] sm:$0xff]
    %v1919 = vld [vmem:[#allocation8 + $0x9d8] sm:$0xff]
    %v1920 = vld [vmem:[#allocation8 + $0x9e0] sm:$0xff]
    %v1921 = vld [vmem:[#allocation8 + $0x9e8] sm:$0xff]
    %v1922 = vld [vmem:[#allocation8 + $0x9f0] sm:$0xff]
    %v1923 = vld [vmem:[#allocation8 + $0x9f8] sm:$0xff]
    %v1924 = vld [vmem:[#allocation8 + $0xa00] sm:$0xff]
    %v1925 = vld [vmem:[#allocation8 + $0xa08] sm:$0xff]
    %v1926 = vld [vmem:[#allocation8 + $0xa10] sm:$0xff]
    %v1927 = vld [vmem:[#allocation8 + $0xa18] sm:$0xff]
    %v1928 = vld [vmem:[#allocation8 + $0xa20] sm:$0xff]
    %v1929 = vld [vmem:[#allocation8 + $0xa28] sm:$0xff]
    %v1930 = vld [vmem:[#allocation8 + $0xa30] sm:$0xff]
    %v1931 = vld [vmem:[#allocation8 + $0xa38] sm:$0xff]
    %v1932 = vld [vmem:[#allocation8 + $0xa40] sm:$0xff]
    %v1933 = vld [vmem:[#allocation8 + $0xa48] sm:$0xff]
    %v1934 = vld [vmem:[#allocation8 + $0xa50] sm:$0xff]
    %v1935 = vld [vmem:[#allocation8 + $0xa58] sm:$0xff]
    %v1936 = vld [vmem:[#allocation8 + $0xa60] sm:$0xff]
    %v1937 = vld [vmem:[#allocation8 + $0xa68] sm:$0xff]
    %v1938 = vld [vmem:[#allocation8 + $0xa70] sm:$0xff]
    %v1939 = vld [vmem:[#allocation8 + $0xa78] sm:$0xff]
    %v1940 = vld [vmem:[#allocation8 + $0xa80] sm:$0xff]
    %v1941 = vld [vmem:[#allocation8 + $0xa88] sm:$0xff]
    %v1942 = vld [vmem:[#allocation8 + $0xa90] sm:$0xff]
    %v1943 = vld [vmem:[#allocation8 + $0xa98] sm:$0xff]
    %v1944 = vld [vmem:[#allocation8 + $0xaa0] sm:$0xff]
    %v1945 = vld [vmem:[#allocation8 + $0xaa8] sm:$0xff]
    %v1946 = vld [vmem:[#allocation8 + $0xab0] sm:$0xff]
    %v1947 = vld [vmem:[#allocation8 + $0xab8] sm:$0xff]
    %v1948 = vld [vmem:[#allocation8 + $0xac0] sm:$0xff]
    %v1949 = vld [vmem:[#allocation8 + $0xac8] sm:$0xff]
    %v1950 = vld [vmem:[#allocation8 + $0xad0] sm:$0xff]
    %v1951 = vld [vmem:[#allocation8 + $0xad8] sm:$0xff]
    %v1952 = vld [vmem:[#allocation8 + $0xae0] sm:$0xff]
    %v1953 = vld [vmem:[#allocation8 + $0xae8] sm:$0xff]
    %v1954 = vld [vmem:[#allocation8 + $0xaf0] sm:$0xff]
    %v1955 = vld [vmem:[#allocation8 + $0xaf8] sm:$0xff]
    %v1956 = vld [vmem:[#allocation8 + $0xb00] sm:$0xff]
    %v1957 = vld [vmem:[#allocation8 + $0xb08] sm:$0xff]
    %v1958 = vld [vmem:[#allocation8 + $0xb10] sm:$0xff]
    %v1959 = vld [vmem:[#allocation8 + $0xb18] sm:$0xff]
    %v1960 = vld [vmem:[#allocation8 + $0xb20] sm:$0xff]
    %v1961 = vld [vmem:[#allocation8 + $0xb28] sm:$0xff]
    %v1962 = vld [vmem:[#allocation8 + $0xb30] sm:$0xff]
    %v1963 = vld [vmem:[#allocation8 + $0xb38] sm:$0xff]
    %v1964 = vld [vmem:[#allocation8 + $0xb40] sm:$0xff]
    %v1965 = vld [vmem:[#allocation8 + $0xb48] sm:$0xff]
    %v1966 = vld [vmem:[#allocation8 + $0xb50] sm:$0xff]
    %v1967 = vld [vmem:[#allocation8 + $0xb58] sm:$0xff]
    %v1968 = vld [vmem:[#allocation8 + $0xb60] sm:$0xff]
    %v1969 = vld [vmem:[#allocation8 + $0xb68] sm:$0xff]
    %v1970 = vld [vmem:[#allocation8 + $0xb70] sm:$0xff]
    %v1971 = vld [vmem:[#allocation8 + $0xb78] sm:$0xff]
    %v1972 = vld [vmem:[#allocation8 + $0xb80] sm:$0xff]
    %v1973 = vld [vmem:[#allocation8 + $0xb88] sm:$0xff]
    %v1974 = vld [vmem:[#allocation8 + $0xb90] sm:$0xff]
    %v1975 = vld [vmem:[#allocation8 + $0xb98] sm:$0xff]
    %v1976 = vld [vmem:[#allocation8 + $0xba0] sm:$0xff]
    %v1977 = vld [vmem:[#allocation8 + $0xba8] sm:$0xff]
    %v1978 = vld [vmem:[#allocation8 + $0xbb0] sm:$0xff]
    %v1979 = vld [vmem:[#allocation8 + $0xbb8] sm:$0xff]
    %v1980 = vld [vmem:[#allocation8 + $0xbc0] sm:$0xff]
    %v1981 = vld [vmem:[#allocation8 + $0xbc8] sm:$0xff]
    %v1982 = vld [vmem:[#allocation8 + $0xbd0] sm:$0xff]
    %v1983 = vld [vmem:[#allocation8 + $0xbd8] sm:$0xff]
    %v1984 = vld [vmem:[#allocation8 + $0xbe0] sm:$0xff]
    %v1985 = vld [vmem:[#allocation8 + $0xbe8] sm:$0xff]
    %v1986 = vld [vmem:[#allocation8 + $0xbf0] sm:$0xff]
    %v1987 = vld [vmem:[#allocation8 + $0xbf8] sm:$0xff]
    %v1988 = vld [vmem:[#allocation8 + $0xc00] sm:$0xff]
    %v1989 = vld [vmem:[#allocation8 + $0xc08] sm:$0xff]
    %v1990 = vld [vmem:[#allocation8 + $0xc10] sm:$0xff]
    %v1991 = vld [vmem:[#allocation8 + $0xc18] sm:$0xff]
    %v1992 = vld [vmem:[#allocation8 + $0xc20] sm:$0xff]
    %v1993 = vld [vmem:[#allocation8 + $0xc28] sm:$0xff]
    %v1994 = vld [vmem:[#allocation8 + $0xc30] sm:$0xff]
    %v1995 = vld [vmem:[#allocation8 + $0xc38] sm:$0xff]
    %v1996 = vld [vmem:[#allocation8 + $0xc40] sm:$0xff]
    %v1997 = vld [vmem:[#allocation8 + $0xc48] sm:$0xff]
    %v1998 = vld [vmem:[#allocation8 + $0xc50] sm:$0xff]
    %v1999 = vld [vmem:[#allocation8 + $0xc58] sm:$0xff]
    %v2000 = vld [vmem:[#allocation8 + $0xc60] sm:$0xff]
    %v2001 = vld [vmem:[#allocation8 + $0xc68] sm:$0xff]
    %v2002 = vld [vmem:[#allocation8 + $0xc70] sm:$0xff]
    %v2003 = vld [vmem:[#allocation8 + $0xc78] sm:$0xff]
    %v2004 = vld [vmem:[#allocation8 + $0xc80] sm:$0xff]
    %v2005 = vld [vmem:[#allocation8 + $0xc88] sm:$0xff]
    %v2006 = vld [vmem:[#allocation8 + $0xc90] sm:$0xff]
    %v2007 = vld [vmem:[#allocation8 + $0xc98] sm:$0xff]
    %v2008 = vld [vmem:[#allocation8 + $0xca0] sm:$0xff]
    %v2009 = vld [vmem:[#allocation8 + $0xca8] sm:$0xff]
    %v2010 = vld [vmem:[#allocation8 + $0xcb0] sm:$0xff]
    %v2011 = vld [vmem:[#allocation8 + $0xcb8] sm:$0xff]
    %v2012 = vld [vmem:[#allocation8 + $0xcc0] sm:$0xff]
    %v2013 = vld [vmem:[#allocation8 + $0xcc8] sm:$0xff]
    %v2014 = vld [vmem:[#allocation8 + $0xcd0] sm:$0xff]
    %v2015 = vld [vmem:[#allocation8 + $0xcd8] sm:$0xff]
    %v2016 = vld [vmem:[#allocation8 + $0xce0] sm:$0xff]
    %v2017 = vld [vmem:[#allocation8 + $0xce8] sm:$0xff]
    %v2018 = vld [vmem:[#allocation8 + $0xcf0] sm:$0xff]
    %v2019 = vld [vmem:[#allocation8 + $0xcf8] sm:$0xff]
    %v2020 = vld [vmem:[#allocation8 + $0xd00] sm:$0xff]
    %v2021 = vld [vmem:[#allocation8 + $0xd08] sm:$0xff]
    %v2022 = vld [vmem:[#allocation8 + $0xd10] sm:$0xff]
    %v2023 = vld [vmem:[#allocation8 + $0xd18] sm:$0xff]
    %v2024 = vld [vmem:[#allocation8 + $0xd20] sm:$0xff]
    %v2025 = vld [vmem:[#allocation8 + $0xd28] sm:$0xff]
    %v2026 = vld [vmem:[#allocation8 + $0xd30] sm:$0xff]
    %v2027 = vld [vmem:[#allocation8 + $0xd38] sm:$0xff]
    %v2028 = vld [vmem:[#allocation8 + $0xd40] sm:$0xff]
    %v2029 = vld [vmem:[#allocation8 + $0xd48] sm:$0xff]
    %v2030 = vld [vmem:[#allocation8 + $0xd50] sm:$0xff]
    %v2031 = vld [vmem:[#allocation8 + $0xd58] sm:$0xff]
    %v2032 = vld [vmem:[#allocation8 + $0xd60] sm:$0xff]
    %v2033 = vld [vmem:[#allocation8 + $0xd68] sm:$0xff]
    %v2034 = vld [vmem:[#allocation8 + $0xd70] sm:$0xff]
    %v2035 = vld [vmem:[#allocation8 + $0xd78] sm:$0xff]
    %v2036 = vld [vmem:[#allocation8 + $0xd80] sm:$0xff]
    %v2037 = vld [vmem:[#allocation8 + $0xd88] sm:$0xff]
    %v2038 = vld [vmem:[#allocation8 + $0xd90] sm:$0xff]
    %v2039 = vld [vmem:[#allocation8 + $0xd98] sm:$0xff]
    %v2040 = vld [vmem:[#allocation8 + $0xda0] sm:$0xff]
    %v2041 = vld [vmem:[#allocation8 + $0xda8] sm:$0xff]
    %v2042 = vld [vmem:[#allocation8 + $0xdb0] sm:$0xff]
    %v2043 = vld [vmem:[#allocation8 + $0xdb8] sm:$0xff]
    %v2044 = vld [vmem:[#allocation8 + $0xdc0] sm:$0xff]
    %v2045 = vld [vmem:[#allocation8 + $0xdc8] sm:$0xff]
    %v2046 = vld [vmem:[#allocation8 + $0xdd0] sm:$0xff]
    %v2047 = vld [vmem:[#allocation8 + $0xdd8] sm:$0xff]
    %v2048 = vld [vmem:[#allocation8 + $0xde0] sm:$0xff]
    %v2049 = vld [vmem:[#allocation8 + $0xde8] sm:$0xff]
    %v2050 = vld [vmem:[#allocation8 + $0xdf0] sm:$0xff]
    %v2051 = vld [vmem:[#allocation8 + $0xdf8] sm:$0xff]
    %v2052 = vld [vmem:[#allocation8 + $0xe00] sm:$0xff]
    %v2053 = vld [vmem:[#allocation8 + $0xe08] sm:$0xff]
    %v2054 = vld [vmem:[#allocation8 + $0xe10] sm:$0xff]
    %v2055 = vld [vmem:[#allocation8 + $0xe18] sm:$0xff]
    %v2056 = vld [vmem:[#allocation8 + $0xe20] sm:$0xff]
    %v2057 = vld [vmem:[#allocation8 + $0xe28] sm:$0xff]
    %v2058 = vld [vmem:[#allocation8 + $0xe30] sm:$0xff]
    %v2059 = vld [vmem:[#allocation8 + $0xe38] sm:$0xff]
    %v2060 = vld [vmem:[#allocation8 + $0xe40] sm:$0xff]
    %v2061 = vld [vmem:[#allocation8 + $0xe48] sm:$0xff]
    %v2062 = vld [vmem:[#allocation8 + $0xe50] sm:$0xff]
    %v2063 = vld [vmem:[#allocation8 + $0xe58] sm:$0xff]
    %v2064 = vld [vmem:[#allocation8 + $0xe60] sm:$0xff]
    %v2065 = vld [vmem:[#allocation8 + $0xe68] sm:$0xff]
    %v2066 = vld [vmem:[#allocation8 + $0xe70] sm:$0xff]
    %v2067 = vld [vmem:[#allocation8 + $0xe78] sm:$0xff]
    %v2068 = vld [vmem:[#allocation8 + $0xe80] sm:$0xff]
    %v2069 = vld [vmem:[#allocation8 + $0xe88] sm:$0xff]
    %v2070 = vld [vmem:[#allocation8 + $0xe90] sm:$0xff]
    %v2071 = vld [vmem:[#allocation8 + $0xe98] sm:$0xff]
    %v2072 = vld [vmem:[#allocation8 + $0xea0] sm:$0xff]
    %v2073 = vld [vmem:[#allocation8 + $0xea8] sm:$0xff]
    %v2074 = vld [vmem:[#allocation8 + $0xeb0] sm:$0xff]
    %v2075 = vld [vmem:[#allocation8 + $0xeb8] sm:$0xff]
    %v2076 = vld [vmem:[#allocation8 + $0xec0] sm:$0xff]
    %v2077 = vld [vmem:[#allocation8 + $0xec8] sm:$0xff]
    %v2078 = vld [vmem:[#allocation8 + $0xed0] sm:$0xff]
    %v2079 = vld [vmem:[#allocation8 + $0xed8] sm:$0xff]
    %v2080 = vld [vmem:[#allocation8 + $0xee0] sm:$0xff]
    %v2081 = vld [vmem:[#allocation8 + $0xee8] sm:$0xff]
    %v2082 = vld [vmem:[#allocation8 + $0xef0] sm:$0xff]
    %v2083 = vld [vmem:[#allocation8 + $0xef8] sm:$0xff]
    %v2084 = vld [vmem:[#allocation8 + $0xf00] sm:$0xff]
    %v2085 = vld [vmem:[#allocation8 + $0xf08] sm:$0xff]
    %v2086 = vld [vmem:[#allocation8 + $0xf10] sm:$0xff]
    %v2087 = vld [vmem:[#allocation8 + $0xf18] sm:$0xff]
    %v2088 = vld [vmem:[#allocation8 + $0xf20] sm:$0xff]
    %v2089 = vld [vmem:[#allocation8 + $0xf28] sm:$0xff]
    %v2090 = vld [vmem:[#allocation8 + $0xf30] sm:$0xff]
    %v2091 = vld [vmem:[#allocation8 + $0xf38] sm:$0xff]
    %v2092 = vld [vmem:[#allocation8 + $0xf40] sm:$0xff]
    %v2093 = vld [vmem:[#allocation8 + $0xf48] sm:$0xff]
    %v2094 = vld [vmem:[#allocation8 + $0xf50] sm:$0xff]
    %v2095 = vld [vmem:[#allocation8 + $0xf58] sm:$0xff]
    %v2096 = vld [vmem:[#allocation8 + $0xf60] sm:$0xff]
    %v2097 = vld [vmem:[#allocation8 + $0xf68] sm:$0xff]
    %v2098 = vld [vmem:[#allocation8 + $0xf70] sm:$0xff]
    %v2099 = vld [vmem:[#allocation8 + $0xf78] sm:$0xff]
    %v2100 = vld [vmem:[#allocation8 + $0xf80] sm:$0xff]
    %v2101 = vld [vmem:[#allocation8 + $0xf88] sm:$0xff]
    %v2102 = vld [vmem:[#allocation8 + $0xf90] sm:$0xff]
    %v2103 = vld [vmem:[#allocation8 + $0xf98] sm:$0xff]
    %v2104 = vld [vmem:[#allocation8 + $0xfa0] sm:$0xff]
    %v2105 = vld [vmem:[#allocation8 + $0xfa8] sm:$0xff]
    %v2106 = vld [vmem:[#allocation8 + $0xfb0] sm:$0xff]
    %v2107 = vld [vmem:[#allocation8 + $0xfb8] sm:$0xff]
    %v2108 = vld [vmem:[#allocation8 + $0xfc0] sm:$0xff]
    %v2109 = vld [vmem:[#allocation8 + $0xfc8] sm:$0xff]
    %v2110 = vld [vmem:[#allocation8 + $0xfd0] sm:$0xff]
    %v2111 = vld [vmem:[#allocation8 + $0xfd8] sm:$0xff]
    %v2112 = vld [vmem:[#allocation8 + $0xfe0] sm:$0xff]
    %v2113 = vld [vmem:[#allocation8 + $0xfe8] sm:$0xff]
    %v2114 = vld [vmem:[#allocation8 + $0xff0] sm:$0xff]
    %v2115 = vld [vmem:[#allocation8 + $0xff8] sm:$0xff]
    %v2116 = vld [vmem:[#allocation10] sm:$0xff]
    %v2118 = vlaneseq
    %v2119 = vshrl.u32 %v2118, 7
    %v2120 = vsub.s32 0, %v2119
    %v2121 = vrot.slane %v2116, %v2120
    %v2122 = vlaneseq
    %v2123 = vshrl.u32 %v2122, 7
    %v2124 = vsub.s32 1, %v2123
    %v2125 = vrot.slane %v2116, %v2124
    %v2126 = vlaneseq
    %v2127 = vshrl.u32 %v2126, 7
    %v2128 = vsub.s32 2, %v2127
    %v2129 = vrot.slane %v2116, %v2128
    %v2130 = vlaneseq
    %v2131 = vshrl.u32 %v2130, 7
    %v2132 = vsub.s32 3, %v2131
    %v2133 = vrot.slane %v2116, %v2132
    %v2134 = vlaneseq
    %v2135 = vshrl.u32 %v2134, 7
    %v2136 = vsub.s32 4, %v2135
    %v2137 = vrot.slane %v2116, %v2136
    %v2138 = vlaneseq
    %v2139 = vshrl.u32 %v2138, 7
    %v2140 = vsub.s32 5, %v2139
    %v2141 = vrot.slane %v2116, %v2140
    %v2142 = vlaneseq
    %v2143 = vshrl.u32 %v2142, 7
    %v2144 = vsub.s32 6, %v2143
    %v2145 = vrot.slane %v2116, %v2144
    %v2146 = vlaneseq
    %v2147 = vshrl.u32 %v2146, 7
    %v2148 = vsub.s32 7, %v2147
    %v2149 = vrot.slane %v2116, %v2148
    %v2670 = vunpack.c.l.b16 %v1604
    %v2671 = vunpack.c.h.b16 %v1604
    %v2672 = vunpack.c.l.b16 %v1605
    %v2673 = vunpack.c.h.b16 %v1605
    %v2674 = vunpack.c.l.b16 %v1606
    %v2675 = vunpack.c.h.b16 %v1606
    %v2676 = vunpack.c.l.b16 %v1607
    %v2677 = vunpack.c.h.b16 %v1607
    %v2678 = vunpack.c.l.b16 %v1608
    %v2679 = vunpack.c.h.b16 %v1608
    %v2680 = vunpack.c.l.b16 %v1609
    %v2681 = vunpack.c.h.b16 %v1609
    %v2682 = vunpack.c.l.b16 %v1610
    %v2683 = vunpack.c.h.b16 %v1610
    %v2684 = vunpack.c.l.b16 %v1611
    %v2685 = vunpack.c.h.b16 %v1611
    %v2686 = vunpack.c.l.b16 %v1612
    %v2687 = vunpack.c.h.b16 %v1612
    %v2688 = vunpack.c.l.b16 %v1613
    %v2689 = vunpack.c.h.b16 %v1613
    %v2690 = vunpack.c.l.b16 %v1614
    %v2691 = vunpack.c.h.b16 %v1614
    %v2692 = vunpack.c.l.b16 %v1615
    %v2693 = vunpack.c.h.b16 %v1615
    %v2694 = vunpack.c.l.b16 %v1616
    %v2695 = vunpack.c.h.b16 %v1616
    %v2696 = vunpack.c.l.b16 %v1617
    %v2697 = vunpack.c.h.b16 %v1617
    %v2698 = vunpack.c.l.b16 %v1618
    %v2699 = vunpack.c.h.b16 %v1618
    %v2700 = vunpack.c.l.b16 %v1619
    %v2701 = vunpack.c.h.b16 %v1619
    %v2702 = vunpack.c.l.b16 %v1620
    %v2703 = vunpack.c.h.b16 %v1620
    %v2704 = vunpack.c.l.b16 %v1621
    %v2705 = vunpack.c.h.b16 %v1621
    %v2706 = vunpack.c.l.b16 %v1622
    %v2707 = vunpack.c.h.b16 %v1622
    %v2708 = vunpack.c.l.b16 %v1623
    %v2709 = vunpack.c.h.b16 %v1623
    %v2710 = vunpack.c.l.b16 %v1624
    %v2711 = vunpack.c.h.b16 %v1624
    %v2712 = vunpack.c.l.b16 %v1625
    %v2713 = vunpack.c.h.b16 %v1625
    %v2714 = vunpack.c.l.b16 %v1626
    %v2715 = vunpack.c.h.b16 %v1626
    %v2716 = vunpack.c.l.b16 %v1627
    %v2717 = vunpack.c.h.b16 %v1627
    %v2718 = vunpack.c.l.b16 %v1628
    %v2719 = vunpack.c.h.b16 %v1628
    %v2720 = vunpack.c.l.b16 %v1629
    %v2721 = vunpack.c.h.b16 %v1629
    %v2722 = vunpack.c.l.b16 %v1630
    %v2723 = vunpack.c.h.b16 %v1630
    %v2724 = vunpack.c.l.b16 %v1631
    %v2725 = vunpack.c.h.b16 %v1631
    %v2726 = vunpack.c.l.b16 %v1632
    %v2727 = vunpack.c.h.b16 %v1632
    %v2728 = vunpack.c.l.b16 %v1633
    %v2729 = vunpack.c.h.b16 %v1633
    %v2730 = vunpack.c.l.b16 %v1634
    %v2731 = vunpack.c.h.b16 %v1634
    %v2732 = vunpack.c.l.b16 %v1635
    %v2733 = vunpack.c.h.b16 %v1635
    %v2734 = vunpack.c.l.b16 %v1636
    %v2735 = vunpack.c.h.b16 %v1636
    %v2736 = vunpack.c.l.b16 %v1637
    %v2737 = vunpack.c.h.b16 %v1637
    %v2738 = vunpack.c.l.b16 %v1638
    %v2739 = vunpack.c.h.b16 %v1638
    %v2740 = vunpack.c.l.b16 %v1639
    %v2741 = vunpack.c.h.b16 %v1639
    %v2742 = vunpack.c.l.b16 %v1640
    %v2743 = vunpack.c.h.b16 %v1640
    %v2744 = vunpack.c.l.b16 %v1641
    %v2745 = vunpack.c.h.b16 %v1641
    %v2746 = vunpack.c.l.b16 %v1642
    %v2747 = vunpack.c.h.b16 %v1642
    %v2748 = vunpack.c.l.b16 %v1643
    %v2749 = vunpack.c.h.b16 %v1643
    %v2750 = vunpack.c.l.b16 %v1644
    %v2751 = vunpack.c.h.b16 %v1644
    %v2752 = vunpack.c.l.b16 %v1645
    %v2753 = vunpack.c.h.b16 %v1645
    %v2754 = vunpack.c.l.b16 %v1646
    %v2755 = vunpack.c.h.b16 %v1646
    %v2756 = vunpack.c.l.b16 %v1647
    %v2757 = vunpack.c.h.b16 %v1647
    %v2758 = vunpack.c.l.b16 %v1648
    %v2759 = vunpack.c.h.b16 %v1648
    %v2760 = vunpack.c.l.b16 %v1649
    %v2761 = vunpack.c.h.b16 %v1649
    %v2762 = vunpack.c.l.b16 %v1650
    %v2763 = vunpack.c.h.b16 %v1650
    %v2764 = vunpack.c.l.b16 %v1651
    %v2765 = vunpack.c.h.b16 %v1651
    %v2766 = vunpack.c.l.b16 %v1652
    %v2767 = vunpack.c.h.b16 %v1652
    %v2768 = vunpack.c.l.b16 %v1653
    %v2769 = vunpack.c.h.b16 %v1653
    %v2770 = vunpack.c.l.b16 %v1654
    %v2771 = vunpack.c.h.b16 %v1654
    %v2772 = vunpack.c.l.b16 %v1655
    %v2773 = vunpack.c.h.b16 %v1655
    %v2774 = vunpack.c.l.b16 %v1656
    %v2775 = vunpack.c.h.b16 %v1656
    %v2776 = vunpack.c.l.b16 %v1657
    %v2777 = vunpack.c.h.b16 %v1657
    %v2778 = vunpack.c.l.b16 %v1658
    %v2779 = vunpack.c.h.b16 %v1658
    %v2780 = vunpack.c.l.b16 %v1659
    %v2781 = vunpack.c.h.b16 %v1659
    %v2782 = vunpack.c.l.b16 %v1660
    %v2783 = vunpack.c.h.b16 %v1660
    %v2784 = vunpack.c.l.b16 %v1661
    %v2785 = vunpack.c.h.b16 %v1661
    %v2786 = vunpack.c.l.b16 %v1662
    %v2787 = vunpack.c.h.b16 %v1662
    %v2788 = vunpack.c.l.b16 %v1663
    %v2789 = vunpack.c.h.b16 %v1663
    %v2790 = vunpack.c.l.b16 %v1664
    %v2791 = vunpack.c.h.b16 %v1664
    %v2792 = vunpack.c.l.b16 %v1665
    %v2793 = vunpack.c.h.b16 %v1665
    %v2794 = vunpack.c.l.b16 %v1666
    %v2795 = vunpack.c.h.b16 %v1666
    %v2796 = vunpack.c.l.b16 %v1667
    %v2797 = vunpack.c.h.b16 %v1667
    %v2798 = vunpack.c.l.b16 %v1668
    %v2799 = vunpack.c.h.b16 %v1668
    %v2800 = vunpack.c.l.b16 %v1669
    %v2801 = vunpack.c.h.b16 %v1669
    %v2802 = vunpack.c.l.b16 %v1670
    %v2803 = vunpack.c.h.b16 %v1670
    %v2804 = vunpack.c.l.b16 %v1671
    %v2805 = vunpack.c.h.b16 %v1671
    %v2806 = vunpack.c.l.b16 %v1672
    %v2807 = vunpack.c.h.b16 %v1672
    %v2808 = vunpack.c.l.b16 %v1673
    %v2809 = vunpack.c.h.b16 %v1673
    %v2810 = vunpack.c.l.b16 %v1674
    %v2811 = vunpack.c.h.b16 %v1674
    %v2812 = vunpack.c.l.b16 %v1675
    %v2813 = vunpack.c.h.b16 %v1675
    %v2814 = vunpack.c.l.b16 %v1676
    %v2815 = vunpack.c.h.b16 %v1676
    %v2816 = vunpack.c.l.b16 %v1677
    %v2817 = vunpack.c.h.b16 %v1677
    %v2818 = vunpack.c.l.b16 %v1678
    %v2819 = vunpack.c.h.b16 %v1678
    %v2820 = vunpack.c.l.b16 %v1679
    %v2821 = vunpack.c.h.b16 %v1679
    %v2822 = vunpack.c.l.b16 %v1680
    %v2823 = vunpack.c.h.b16 %v1680
    %v2824 = vunpack.c.l.b16 %v1681
    %v2825 = vunpack.c.h.b16 %v1681
    %v2826 = vunpack.c.l.b16 %v1682
    %v2827 = vunpack.c.h.b16 %v1682
    %v2828 = vunpack.c.l.b16 %v1683
    %v2829 = vunpack.c.h.b16 %v1683
    %v2830 = vunpack.c.l.b16 %v1684
    %v2831 = vunpack.c.h.b16 %v1684
    %v2832 = vunpack.c.l.b16 %v1685
    %v2833 = vunpack.c.h.b16 %v1685
    %v2834 = vunpack.c.l.b16 %v1686
    %v2835 = vunpack.c.h.b16 %v1686
    %v2836 = vunpack.c.l.b16 %v1687
    %v2837 = vunpack.c.h.b16 %v1687
    %v2838 = vunpack.c.l.b16 %v1688
    %v2839 = vunpack.c.h.b16 %v1688
    %v2840 = vunpack.c.l.b16 %v1689
    %v2841 = vunpack.c.h.b16 %v1689
    %v2842 = vunpack.c.l.b16 %v1690
    %v2843 = vunpack.c.h.b16 %v1690
    %v2844 = vunpack.c.l.b16 %v1691
    %v2845 = vunpack.c.h.b16 %v1691
    %v2846 = vunpack.c.l.b16 %v1692
    %v2847 = vunpack.c.h.b16 %v1692
    %v2848 = vunpack.c.l.b16 %v1693
    %v2849 = vunpack.c.h.b16 %v1693
    %v2850 = vunpack.c.l.b16 %v1694
    %v2851 = vunpack.c.h.b16 %v1694
    %v2852 = vunpack.c.l.b16 %v1695
    %v2853 = vunpack.c.h.b16 %v1695
    %v2854 = vunpack.c.l.b16 %v1696
    %v2855 = vunpack.c.h.b16 %v1696
    %v2856 = vunpack.c.l.b16 %v1697
    %v2857 = vunpack.c.h.b16 %v1697
    %v2858 = vunpack.c.l.b16 %v1698
    %v2859 = vunpack.c.h.b16 %v1698
    %v2860 = vunpack.c.l.b16 %v1699
    %v2861 = vunpack.c.h.b16 %v1699
    %v2862 = vunpack.c.l.b16 %v1700
    %v2863 = vunpack.c.h.b16 %v1700
    %v2864 = vunpack.c.l.b16 %v1701
    %v2865 = vunpack.c.h.b16 %v1701
    %v2866 = vunpack.c.l.b16 %v1702
    %v2867 = vunpack.c.h.b16 %v1702
    %v2868 = vunpack.c.l.b16 %v1703
    %v2869 = vunpack.c.h.b16 %v1703
    %v2870 = vunpack.c.l.b16 %v1704
    %v2871 = vunpack.c.h.b16 %v1704
    %v2872 = vunpack.c.l.b16 %v1705
    %v2873 = vunpack.c.h.b16 %v1705
    %v2874 = vunpack.c.l.b16 %v1706
    %v2875 = vunpack.c.h.b16 %v1706
    %v2876 = vunpack.c.l.b16 %v1707
    %v2877 = vunpack.c.h.b16 %v1707
    %v2878 = vunpack.c.l.b16 %v1708
    %v2879 = vunpack.c.h.b16 %v1708
    %v2880 = vunpack.c.l.b16 %v1709
    %v2881 = vunpack.c.h.b16 %v1709
    %v2882 = vunpack.c.l.b16 %v1710
    %v2883 = vunpack.c.h.b16 %v1710
    %v2884 = vunpack.c.l.b16 %v1711
    %v2885 = vunpack.c.h.b16 %v1711
    %v2886 = vunpack.c.l.b16 %v1712
    %v2887 = vunpack.c.h.b16 %v1712
    %v2888 = vunpack.c.l.b16 %v1713
    %v2889 = vunpack.c.h.b16 %v1713
    %v2890 = vunpack.c.l.b16 %v1714
    %v2891 = vunpack.c.h.b16 %v1714
    %v2892 = vunpack.c.l.b16 %v1715
    %v2893 = vunpack.c.h.b16 %v1715
    %v2894 = vunpack.c.l.b16 %v1716
    %v2895 = vunpack.c.h.b16 %v1716
    %v2896 = vunpack.c.l.b16 %v1717
    %v2897 = vunpack.c.h.b16 %v1717
    %v2898 = vunpack.c.l.b16 %v1718
    %v2899 = vunpack.c.h.b16 %v1718
    %v2900 = vunpack.c.l.b16 %v1719
    %v2901 = vunpack.c.h.b16 %v1719
    %v2902 = vunpack.c.l.b16 %v1720
    %v2903 = vunpack.c.h.b16 %v1720
    %v2904 = vunpack.c.l.b16 %v1721
    %v2905 = vunpack.c.h.b16 %v1721
    %v2906 = vunpack.c.l.b16 %v1722
    %v2907 = vunpack.c.h.b16 %v1722
    %v2908 = vunpack.c.l.b16 %v1723
    %v2909 = vunpack.c.h.b16 %v1723
    %v2910 = vunpack.c.l.b16 %v1724
    %v2911 = vunpack.c.h.b16 %v1724
    %v2912 = vunpack.c.l.b16 %v1725
    %v2913 = vunpack.c.h.b16 %v1725
    %v2914 = vunpack.c.l.b16 %v1726
    %v2915 = vunpack.c.h.b16 %v1726
    %v2916 = vunpack.c.l.b16 %v1727
    %v2917 = vunpack.c.h.b16 %v1727
    %v2918 = vunpack.c.l.b16 %v1728
    %v2919 = vunpack.c.h.b16 %v1728
    %v2920 = vunpack.c.l.b16 %v1729
    %v2921 = vunpack.c.h.b16 %v1729
    %v2922 = vunpack.c.l.b16 %v1730
    %v2923 = vunpack.c.h.b16 %v1730
    %v2924 = vunpack.c.l.b16 %v1731
    %v2925 = vunpack.c.h.b16 %v1731
    %v2926 = vunpack.c.l.b16 %v1732
    %v2927 = vunpack.c.h.b16 %v1732
    %v2928 = vunpack.c.l.b16 %v1733
    %v2929 = vunpack.c.h.b16 %v1733
    %v2930 = vunpack.c.l.b16 %v1734
    %v2931 = vunpack.c.h.b16 %v1734
    %v2932 = vunpack.c.l.b16 %v1735
    %v2933 = vunpack.c.h.b16 %v1735
    %v2934 = vunpack.c.l.b16 %v1736
    %v2935 = vunpack.c.h.b16 %v1736
    %v2936 = vunpack.c.l.b16 %v1737
    %v2937 = vunpack.c.h.b16 %v1737
    %v2938 = vunpack.c.l.b16 %v1738
    %v2939 = vunpack.c.h.b16 %v1738
    %v2940 = vunpack.c.l.b16 %v1739
    %v2941 = vunpack.c.h.b16 %v1739
    %v2942 = vunpack.c.l.b16 %v1740
    %v2943 = vunpack.c.h.b16 %v1740
    %v2944 = vunpack.c.l.b16 %v1741
    %v2945 = vunpack.c.h.b16 %v1741
    %v2946 = vunpack.c.l.b16 %v1742
    %v2947 = vunpack.c.h.b16 %v1742
    %v2948 = vunpack.c.l.b16 %v1743
    %v2949 = vunpack.c.h.b16 %v1743
    %v2950 = vunpack.c.l.b16 %v1744
    %v2951 = vunpack.c.h.b16 %v1744
    %v2952 = vunpack.c.l.b16 %v1745
    %v2953 = vunpack.c.h.b16 %v1745
    %v2954 = vunpack.c.l.b16 %v1746
    %v2955 = vunpack.c.h.b16 %v1746
    %v2956 = vunpack.c.l.b16 %v1747
    %v2957 = vunpack.c.h.b16 %v1747
    %v2958 = vunpack.c.l.b16 %v1748
    %v2959 = vunpack.c.h.b16 %v1748
    %v2960 = vunpack.c.l.b16 %v1749
    %v2961 = vunpack.c.h.b16 %v1749
    %v2962 = vunpack.c.l.b16 %v1750
    %v2963 = vunpack.c.h.b16 %v1750
    %v2964 = vunpack.c.l.b16 %v1751
    %v2965 = vunpack.c.h.b16 %v1751
    %v2966 = vunpack.c.l.b16 %v1752
    %v2967 = vunpack.c.h.b16 %v1752
    %v2968 = vunpack.c.l.b16 %v1753
    %v2969 = vunpack.c.h.b16 %v1753
    %v2970 = vunpack.c.l.b16 %v1754
    %v2971 = vunpack.c.h.b16 %v1754
    %v2972 = vunpack.c.l.b16 %v1755
    %v2973 = vunpack.c.h.b16 %v1755
    %v2974 = vunpack.c.l.b16 %v1756
    %v2975 = vunpack.c.h.b16 %v1756
    %v2976 = vunpack.c.l.b16 %v1757
    %v2977 = vunpack.c.h.b16 %v1757
    %v2978 = vunpack.c.l.b16 %v1758
    %v2979 = vunpack.c.h.b16 %v1758
    %v2980 = vunpack.c.l.b16 %v1759
    %v2981 = vunpack.c.h.b16 %v1759
    %v2982 = vunpack.c.l.b16 %v1760
    %v2983 = vunpack.c.h.b16 %v1760
    %v2984 = vunpack.c.l.b16 %v1761
    %v2985 = vunpack.c.h.b16 %v1761
    %v2986 = vunpack.c.l.b16 %v1762
    %v2987 = vunpack.c.h.b16 %v1762
    %v2988 = vunpack.c.l.b16 %v1763
    %v2989 = vunpack.c.h.b16 %v1763
    %v2990 = vunpack.c.l.b16 %v1764
    %v2991 = vunpack.c.h.b16 %v1764
    %v2992 = vunpack.c.l.b16 %v1765
    %v2993 = vunpack.c.h.b16 %v1765
    %v2994 = vunpack.c.l.b16 %v1766
    %v2995 = vunpack.c.h.b16 %v1766
    %v2996 = vunpack.c.l.b16 %v1767
    %v2997 = vunpack.c.h.b16 %v1767
    %v2998 = vunpack.c.l.b16 %v1768
    %v2999 = vunpack.c.h.b16 %v1768
    %v3000 = vunpack.c.l.b16 %v1769
    %v3001 = vunpack.c.h.b16 %v1769
    %v3002 = vunpack.c.l.b16 %v1770
    %v3003 = vunpack.c.h.b16 %v1770
    %v3004 = vunpack.c.l.b16 %v1771
    %v3005 = vunpack.c.h.b16 %v1771
    %v3006 = vunpack.c.l.b16 %v1772
    %v3007 = vunpack.c.h.b16 %v1772
    %v3008 = vunpack.c.l.b16 %v1773
    %v3009 = vunpack.c.h.b16 %v1773
    %v3010 = vunpack.c.l.b16 %v1774
    %v3011 = vunpack.c.h.b16 %v1774
    %v3012 = vunpack.c.l.b16 %v1775
    %v3013 = vunpack.c.h.b16 %v1775
    %v3014 = vunpack.c.l.b16 %v1776
    %v3015 = vunpack.c.h.b16 %v1776
    %v3016 = vunpack.c.l.b16 %v1777
    %v3017 = vunpack.c.h.b16 %v1777
    %v3018 = vunpack.c.l.b16 %v1778
    %v3019 = vunpack.c.h.b16 %v1778
    %v3020 = vunpack.c.l.b16 %v1779
    %v3021 = vunpack.c.h.b16 %v1779
    %v3022 = vunpack.c.l.b16 %v1780
    %v3023 = vunpack.c.h.b16 %v1780
    %v3024 = vunpack.c.l.b16 %v1781
    %v3025 = vunpack.c.h.b16 %v1781
    %v3026 = vunpack.c.l.b16 %v1782
    %v3027 = vunpack.c.h.b16 %v1782
    %v3028 = vunpack.c.l.b16 %v1783
    %v3029 = vunpack.c.h.b16 %v1783
    %v3030 = vunpack.c.l.b16 %v1784
    %v3031 = vunpack.c.h.b16 %v1784
    %v3032 = vunpack.c.l.b16 %v1785
    %v3033 = vunpack.c.h.b16 %v1785
    %v3034 = vunpack.c.l.b16 %v1786
    %v3035 = vunpack.c.h.b16 %v1786
    %v3036 = vunpack.c.l.b16 %v1787
    %v3037 = vunpack.c.h.b16 %v1787
    %v3038 = vunpack.c.l.b16 %v1788
    %v3039 = vunpack.c.h.b16 %v1788
    %v3040 = vunpack.c.l.b16 %v1789
    %v3041 = vunpack.c.h.b16 %v1789
    %v3042 = vunpack.c.l.b16 %v1790
    %v3043 = vunpack.c.h.b16 %v1790
    %v3044 = vunpack.c.l.b16 %v1791
    %v3045 = vunpack.c.h.b16 %v1791
    %v3046 = vunpack.c.l.b16 %v1792
    %v3047 = vunpack.c.h.b16 %v1792
    %v3048 = vunpack.c.l.b16 %v1793
    %v3049 = vunpack.c.h.b16 %v1793
    %v3050 = vunpack.c.l.b16 %v1794
    %v3051 = vunpack.c.h.b16 %v1794
    %v3052 = vunpack.c.l.b16 %v1795
    %v3053 = vunpack.c.h.b16 %v1795
    %v3054 = vunpack.c.l.b16 %v1796
    %v3055 = vunpack.c.h.b16 %v1796
    %v3056 = vunpack.c.l.b16 %v1797
    %v3057 = vunpack.c.h.b16 %v1797
    %v3058 = vunpack.c.l.b16 %v1798
    %v3059 = vunpack.c.h.b16 %v1798
    %v3060 = vunpack.c.l.b16 %v1799
    %v3061 = vunpack.c.h.b16 %v1799
    %v3062 = vunpack.c.l.b16 %v1800
    %v3063 = vunpack.c.h.b16 %v1800
    %v3064 = vunpack.c.l.b16 %v1801
    %v3065 = vunpack.c.h.b16 %v1801
    %v3066 = vunpack.c.l.b16 %v1802
    %v3067 = vunpack.c.h.b16 %v1802
    %v3068 = vunpack.c.l.b16 %v1803
    %v3069 = vunpack.c.h.b16 %v1803
    %v3070 = vunpack.c.l.b16 %v1804
    %v3071 = vunpack.c.h.b16 %v1804
    %v3072 = vunpack.c.l.b16 %v1805
    %v3073 = vunpack.c.h.b16 %v1805
    %v3074 = vunpack.c.l.b16 %v1806
    %v3075 = vunpack.c.h.b16 %v1806
    %v3076 = vunpack.c.l.b16 %v1807
    %v3077 = vunpack.c.h.b16 %v1807
    %v3078 = vunpack.c.l.b16 %v1808
    %v3079 = vunpack.c.h.b16 %v1808
    %v3080 = vunpack.c.l.b16 %v1809
    %v3081 = vunpack.c.h.b16 %v1809
    %v3082 = vunpack.c.l.b16 %v1810
    %v3083 = vunpack.c.h.b16 %v1810
    %v3084 = vunpack.c.l.b16 %v1811
    %v3085 = vunpack.c.h.b16 %v1811
    %v3086 = vunpack.c.l.b16 %v1812
    %v3087 = vunpack.c.h.b16 %v1812
    %v3088 = vunpack.c.l.b16 %v1813
    %v3089 = vunpack.c.h.b16 %v1813
    %v3090 = vunpack.c.l.b16 %v1814
    %v3091 = vunpack.c.h.b16 %v1814
    %v3092 = vunpack.c.l.b16 %v1815
    %v3093 = vunpack.c.h.b16 %v1815
    %v3094 = vunpack.c.l.b16 %v1816
    %v3095 = vunpack.c.h.b16 %v1816
    %v3096 = vunpack.c.l.b16 %v1817
    %v3097 = vunpack.c.h.b16 %v1817
    %v3098 = vunpack.c.l.b16 %v1818
    %v3099 = vunpack.c.h.b16 %v1818
    %v3100 = vunpack.c.l.b16 %v1819
    %v3101 = vunpack.c.h.b16 %v1819
    %v3102 = vunpack.c.l.b16 %v1820
    %v3103 = vunpack.c.h.b16 %v1820
    %v3104 = vunpack.c.l.b16 %v1821
    %v3105 = vunpack.c.h.b16 %v1821
    %v3106 = vunpack.c.l.b16 %v1822
    %v3107 = vunpack.c.h.b16 %v1822
    %v3108 = vunpack.c.l.b16 %v1823
    %v3109 = vunpack.c.h.b16 %v1823
    %v3110 = vunpack.c.l.b16 %v1824
    %v3111 = vunpack.c.h.b16 %v1824
    %v3112 = vunpack.c.l.b16 %v1825
    %v3113 = vunpack.c.h.b16 %v1825
    %v3114 = vunpack.c.l.b16 %v1826
    %v3115 = vunpack.c.h.b16 %v1826
    %v3116 = vunpack.c.l.b16 %v1827
    %v3117 = vunpack.c.h.b16 %v1827
    %v3118 = vunpack.c.l.b16 %v1828
    %v3119 = vunpack.c.h.b16 %v1828
    %v3120 = vunpack.c.l.b16 %v1829
    %v3121 = vunpack.c.h.b16 %v1829
    %v3122 = vunpack.c.l.b16 %v1830
    %v3123 = vunpack.c.h.b16 %v1830
    %v3124 = vunpack.c.l.b16 %v1831
    %v3125 = vunpack.c.h.b16 %v1831
    %v3126 = vunpack.c.l.b16 %v1832
    %v3127 = vunpack.c.h.b16 %v1832
    %v3128 = vunpack.c.l.b16 %v1833
    %v3129 = vunpack.c.h.b16 %v1833
    %v3130 = vunpack.c.l.b16 %v1834
    %v3131 = vunpack.c.h.b16 %v1834
    %v3132 = vunpack.c.l.b16 %v1835
    %v3133 = vunpack.c.h.b16 %v1835
    %v3134 = vunpack.c.l.b16 %v1836
    %v3135 = vunpack.c.h.b16 %v1836
    %v3136 = vunpack.c.l.b16 %v1837
    %v3137 = vunpack.c.h.b16 %v1837
    %v3138 = vunpack.c.l.b16 %v1838
    %v3139 = vunpack.c.h.b16 %v1838
    %v3140 = vunpack.c.l.b16 %v1839
    %v3141 = vunpack.c.h.b16 %v1839
    %v3142 = vunpack.c.l.b16 %v1840
    %v3143 = vunpack.c.h.b16 %v1840
    %v3144 = vunpack.c.l.b16 %v1841
    %v3145 = vunpack.c.h.b16 %v1841
    %v3146 = vunpack.c.l.b16 %v1842
    %v3147 = vunpack.c.h.b16 %v1842
    %v3148 = vunpack.c.l.b16 %v1843
    %v3149 = vunpack.c.h.b16 %v1843
    %v3150 = vunpack.c.l.b16 %v1844
    %v3151 = vunpack.c.h.b16 %v1844
    %v3152 = vunpack.c.l.b16 %v1845
    %v3153 = vunpack.c.h.b16 %v1845
    %v3154 = vunpack.c.l.b16 %v1846
    %v3155 = vunpack.c.h.b16 %v1846
    %v3156 = vunpack.c.l.b16 %v1847
    %v3157 = vunpack.c.h.b16 %v1847
    %v3158 = vunpack.c.l.b16 %v1848
    %v3159 = vunpack.c.h.b16 %v1848
    %v3160 = vunpack.c.l.b16 %v1849
    %v3161 = vunpack.c.h.b16 %v1849
    %v3162 = vunpack.c.l.b16 %v1850
    %v3163 = vunpack.c.h.b16 %v1850
    %v3164 = vunpack.c.l.b16 %v1851
    %v3165 = vunpack.c.h.b16 %v1851
    %v3166 = vunpack.c.l.b16 %v1852
    %v3167 = vunpack.c.h.b16 %v1852
    %v3168 = vunpack.c.l.b16 %v1853
    %v3169 = vunpack.c.h.b16 %v1853
    %v3170 = vunpack.c.l.b16 %v1854
    %v3171 = vunpack.c.h.b16 %v1854
    %v3172 = vunpack.c.l.b16 %v1855
    %v3173 = vunpack.c.h.b16 %v1855
    %v3174 = vunpack.c.l.b16 %v1856
    %v3175 = vunpack.c.h.b16 %v1856
    %v3176 = vunpack.c.l.b16 %v1857
    %v3177 = vunpack.c.h.b16 %v1857
    %v3178 = vunpack.c.l.b16 %v1858
    %v3179 = vunpack.c.h.b16 %v1858
    %v3180 = vunpack.c.l.b16 %v1859
    %v3181 = vunpack.c.h.b16 %v1859
    %v3182 = vunpack.c.l.b16 %v1860
    %v3183 = vunpack.c.h.b16 %v1860
    %v3184 = vunpack.c.l.b16 %v1861
    %v3185 = vunpack.c.h.b16 %v1861
    %v3186 = vunpack.c.l.b16 %v1862
    %v3187 = vunpack.c.h.b16 %v1862
    %v3188 = vunpack.c.l.b16 %v1863
    %v3189 = vunpack.c.h.b16 %v1863
    %v3190 = vunpack.c.l.b16 %v1864
    %v3191 = vunpack.c.h.b16 %v1864
    %v3192 = vunpack.c.l.b16 %v1865
    %v3193 = vunpack.c.h.b16 %v1865
    %v3194 = vunpack.c.l.b16 %v1866
    %v3195 = vunpack.c.h.b16 %v1866
    %v3196 = vunpack.c.l.b16 %v1867
    %v3197 = vunpack.c.h.b16 %v1867
    %v3198 = vunpack.c.l.b16 %v1868
    %v3199 = vunpack.c.h.b16 %v1868
    %v3200 = vunpack.c.l.b16 %v1869
    %v3201 = vunpack.c.h.b16 %v1869
    %v3202 = vunpack.c.l.b16 %v1870
    %v3203 = vunpack.c.h.b16 %v1870
    %v3204 = vunpack.c.l.b16 %v1871
    %v3205 = vunpack.c.h.b16 %v1871
    %v3206 = vunpack.c.l.b16 %v1872
    %v3207 = vunpack.c.h.b16 %v1872
    %v3208 = vunpack.c.l.b16 %v1873
    %v3209 = vunpack.c.h.b16 %v1873
    %v3210 = vunpack.c.l.b16 %v1874
    %v3211 = vunpack.c.h.b16 %v1874
    %v3212 = vunpack.c.l.b16 %v1875
    %v3213 = vunpack.c.h.b16 %v1875
    %v3214 = vunpack.c.l.b16 %v1876
    %v3215 = vunpack.c.h.b16 %v1876
    %v3216 = vunpack.c.l.b16 %v1877
    %v3217 = vunpack.c.h.b16 %v1877
    %v3218 = vunpack.c.l.b16 %v1878
    %v3219 = vunpack.c.h.b16 %v1878
    %v3220 = vunpack.c.l.b16 %v1879
    %v3221 = vunpack.c.h.b16 %v1879
    %v3222 = vunpack.c.l.b16 %v1880
    %v3223 = vunpack.c.h.b16 %v1880
    %v3224 = vunpack.c.l.b16 %v1881
    %v3225 = vunpack.c.h.b16 %v1881
    %v3226 = vunpack.c.l.b16 %v1882
    %v3227 = vunpack.c.h.b16 %v1882
    %v3228 = vunpack.c.l.b16 %v1883
    %v3229 = vunpack.c.h.b16 %v1883
    %v3230 = vunpack.c.l.b16 %v1884
    %v3231 = vunpack.c.h.b16 %v1884
    %v3232 = vunpack.c.l.b16 %v1885
    %v3233 = vunpack.c.h.b16 %v1885
    %v3234 = vunpack.c.l.b16 %v1886
    %v3235 = vunpack.c.h.b16 %v1886
    %v3236 = vunpack.c.l.b16 %v1887
    %v3237 = vunpack.c.h.b16 %v1887
    %v3238 = vunpack.c.l.b16 %v1888
    %v3239 = vunpack.c.h.b16 %v1888
    %v3240 = vunpack.c.l.b16 %v1889
    %v3241 = vunpack.c.h.b16 %v1889
    %v3242 = vunpack.c.l.b16 %v1890
    %v3243 = vunpack.c.h.b16 %v1890
    %v3244 = vunpack.c.l.b16 %v1891
    %v3245 = vunpack.c.h.b16 %v1891
    %v3246 = vunpack.c.l.b16 %v1892
    %v3247 = vunpack.c.h.b16 %v1892
    %v3248 = vunpack.c.l.b16 %v1893
    %v3249 = vunpack.c.h.b16 %v1893
    %v3250 = vunpack.c.l.b16 %v1894
    %v3251 = vunpack.c.h.b16 %v1894
    %v3252 = vunpack.c.l.b16 %v1895
    %v3253 = vunpack.c.h.b16 %v1895
    %v3254 = vunpack.c.l.b16 %v1896
    %v3255 = vunpack.c.h.b16 %v1896
    %v3256 = vunpack.c.l.b16 %v1897
    %v3257 = vunpack.c.h.b16 %v1897
    %v3258 = vunpack.c.l.b16 %v1898
    %v3259 = vunpack.c.h.b16 %v1898
    %v3260 = vunpack.c.l.b16 %v1899
    %v3261 = vunpack.c.h.b16 %v1899
    %v3262 = vunpack.c.l.b16 %v1900
    %v3263 = vunpack.c.h.b16 %v1900
    %v3264 = vunpack.c.l.b16 %v1901
    %v3265 = vunpack.c.h.b16 %v1901
    %v3266 = vunpack.c.l.b16 %v1902
    %v3267 = vunpack.c.h.b16 %v1902
    %v3268 = vunpack.c.l.b16 %v1903
    %v3269 = vunpack.c.h.b16 %v1903
    %v3270 = vunpack.c.l.b16 %v1904
    %v3271 = vunpack.c.h.b16 %v1904
    %v3272 = vunpack.c.l.b16 %v1905
    %v3273 = vunpack.c.h.b16 %v1905
    %v3274 = vunpack.c.l.b16 %v1906
    %v3275 = vunpack.c.h.b16 %v1906
    %v3276 = vunpack.c.l.b16 %v1907
    %v3277 = vunpack.c.h.b16 %v1907
    %v3278 = vunpack.c.l.b16 %v1908
    %v3279 = vunpack.c.h.b16 %v1908
    %v3280 = vunpack.c.l.b16 %v1909
    %v3281 = vunpack.c.h.b16 %v1909
    %v3282 = vunpack.c.l.b16 %v1910
    %v3283 = vunpack.c.h.b16 %v1910
    %v3284 = vunpack.c.l.b16 %v1911
    %v3285 = vunpack.c.h.b16 %v1911
    %v3286 = vunpack.c.l.b16 %v1912
    %v3287 = vunpack.c.h.b16 %v1912
    %v3288 = vunpack.c.l.b16 %v1913
    %v3289 = vunpack.c.h.b16 %v1913
    %v3290 = vunpack.c.l.b16 %v1914
    %v3291 = vunpack.c.h.b16 %v1914
    %v3292 = vunpack.c.l.b16 %v1915
    %v3293 = vunpack.c.h.b16 %v1915
    %v3294 = vunpack.c.l.b16 %v1916
    %v3295 = vunpack.c.h.b16 %v1916
    %v3296 = vunpack.c.l.b16 %v1917
    %v3297 = vunpack.c.h.b16 %v1917
    %v3298 = vunpack.c.l.b16 %v1918
    %v3299 = vunpack.c.h.b16 %v1918
    %v3300 = vunpack.c.l.b16 %v1919
    %v3301 = vunpack.c.h.b16 %v1919
    %v3302 = vunpack.c.l.b16 %v1920
    %v3303 = vunpack.c.h.b16 %v1920
    %v3304 = vunpack.c.l.b16 %v1921
    %v3305 = vunpack.c.h.b16 %v1921
    %v3306 = vunpack.c.l.b16 %v1922
    %v3307 = vunpack.c.h.b16 %v1922
    %v3308 = vunpack.c.l.b16 %v1923
    %v3309 = vunpack.c.h.b16 %v1923
    %v3310 = vunpack.c.l.b16 %v1924
    %v3311 = vunpack.c.h.b16 %v1924
    %v3312 = vunpack.c.l.b16 %v1925
    %v3313 = vunpack.c.h.b16 %v1925
    %v3314 = vunpack.c.l.b16 %v1926
    %v3315 = vunpack.c.h.b16 %v1926
    %v3316 = vunpack.c.l.b16 %v1927
    %v3317 = vunpack.c.h.b16 %v1927
    %v3318 = vunpack.c.l.b16 %v1928
    %v3319 = vunpack.c.h.b16 %v1928
    %v3320 = vunpack.c.l.b16 %v1929
    %v3321 = vunpack.c.h.b16 %v1929
    %v3322 = vunpack.c.l.b16 %v1930
    %v3323 = vunpack.c.h.b16 %v1930
    %v3324 = vunpack.c.l.b16 %v1931
    %v3325 = vunpack.c.h.b16 %v1931
    %v3326 = vunpack.c.l.b16 %v1932
    %v3327 = vunpack.c.h.b16 %v1932
    %v3328 = vunpack.c.l.b16 %v1933
    %v3329 = vunpack.c.h.b16 %v1933
    %v3330 = vunpack.c.l.b16 %v1934
    %v3331 = vunpack.c.h.b16 %v1934
    %v3332 = vunpack.c.l.b16 %v1935
    %v3333 = vunpack.c.h.b16 %v1935
    %v3334 = vunpack.c.l.b16 %v1936
    %v3335 = vunpack.c.h.b16 %v1936
    %v3336 = vunpack.c.l.b16 %v1937
    %v3337 = vunpack.c.h.b16 %v1937
    %v3338 = vunpack.c.l.b16 %v1938
    %v3339 = vunpack.c.h.b16 %v1938
    %v3340 = vunpack.c.l.b16 %v1939
    %v3341 = vunpack.c.h.b16 %v1939
    %v3342 = vunpack.c.l.b16 %v1940
    %v3343 = vunpack.c.h.b16 %v1940
    %v3344 = vunpack.c.l.b16 %v1941
    %v3345 = vunpack.c.h.b16 %v1941
    %v3346 = vunpack.c.l.b16 %v1942
    %v3347 = vunpack.c.h.b16 %v1942
    %v3348 = vunpack.c.l.b16 %v1943
    %v3349 = vunpack.c.h.b16 %v1943
    %v3350 = vunpack.c.l.b16 %v1944
    %v3351 = vunpack.c.h.b16 %v1944
    %v3352 = vunpack.c.l.b16 %v1945
    %v3353 = vunpack.c.h.b16 %v1945
    %v3354 = vunpack.c.l.b16 %v1946
    %v3355 = vunpack.c.h.b16 %v1946
    %v3356 = vunpack.c.l.b16 %v1947
    %v3357 = vunpack.c.h.b16 %v1947
    %v3358 = vunpack.c.l.b16 %v1948
    %v3359 = vunpack.c.h.b16 %v1948
    %v3360 = vunpack.c.l.b16 %v1949
    %v3361 = vunpack.c.h.b16 %v1949
    %v3362 = vunpack.c.l.b16 %v1950
    %v3363 = vunpack.c.h.b16 %v1950
    %v3364 = vunpack.c.l.b16 %v1951
    %v3365 = vunpack.c.h.b16 %v1951
    %v3366 = vunpack.c.l.b16 %v1952
    %v3367 = vunpack.c.h.b16 %v1952
    %v3368 = vunpack.c.l.b16 %v1953
    %v3369 = vunpack.c.h.b16 %v1953
    %v3370 = vunpack.c.l.b16 %v1954
    %v3371 = vunpack.c.h.b16 %v1954
    %v3372 = vunpack.c.l.b16 %v1955
    %v3373 = vunpack.c.h.b16 %v1955
    %v3374 = vunpack.c.l.b16 %v1956
    %v3375 = vunpack.c.h.b16 %v1956
    %v3376 = vunpack.c.l.b16 %v1957
    %v3377 = vunpack.c.h.b16 %v1957
    %v3378 = vunpack.c.l.b16 %v1958
    %v3379 = vunpack.c.h.b16 %v1958
    %v3380 = vunpack.c.l.b16 %v1959
    %v3381 = vunpack.c.h.b16 %v1959
    %v3382 = vunpack.c.l.b16 %v1960
    %v3383 = vunpack.c.h.b16 %v1960
    %v3384 = vunpack.c.l.b16 %v1961
    %v3385 = vunpack.c.h.b16 %v1961
    %v3386 = vunpack.c.l.b16 %v1962
    %v3387 = vunpack.c.h.b16 %v1962
    %v3388 = vunpack.c.l.b16 %v1963
    %v3389 = vunpack.c.h.b16 %v1963
    %v3390 = vunpack.c.l.b16 %v1964
    %v3391 = vunpack.c.h.b16 %v1964
    %v3392 = vunpack.c.l.b16 %v1965
    %v3393 = vunpack.c.h.b16 %v1965
    %v3394 = vunpack.c.l.b16 %v1966
    %v3395 = vunpack.c.h.b16 %v1966
    %v3396 = vunpack.c.l.b16 %v1967
    %v3397 = vunpack.c.h.b16 %v1967
    %v3398 = vunpack.c.l.b16 %v1968
    %v3399 = vunpack.c.h.b16 %v1968
    %v3400 = vunpack.c.l.b16 %v1969
    %v3401 = vunpack.c.h.b16 %v1969
    %v3402 = vunpack.c.l.b16 %v1970
    %v3403 = vunpack.c.h.b16 %v1970
    %v3404 = vunpack.c.l.b16 %v1971
    %v3405 = vunpack.c.h.b16 %v1971
    %v3406 = vunpack.c.l.b16 %v1972
    %v3407 = vunpack.c.h.b16 %v1972
    %v3408 = vunpack.c.l.b16 %v1973
    %v3409 = vunpack.c.h.b16 %v1973
    %v3410 = vunpack.c.l.b16 %v1974
    %v3411 = vunpack.c.h.b16 %v1974
    %v3412 = vunpack.c.l.b16 %v1975
    %v3413 = vunpack.c.h.b16 %v1975
    %v3414 = vunpack.c.l.b16 %v1976
    %v3415 = vunpack.c.h.b16 %v1976
    %v3416 = vunpack.c.l.b16 %v1977
    %v3417 = vunpack.c.h.b16 %v1977
    %v3418 = vunpack.c.l.b16 %v1978
    %v3419 = vunpack.c.h.b16 %v1978
    %v3420 = vunpack.c.l.b16 %v1979
    %v3421 = vunpack.c.h.b16 %v1979
    %v3422 = vunpack.c.l.b16 %v1980
    %v3423 = vunpack.c.h.b16 %v1980
    %v3424 = vunpack.c.l.b16 %v1981
    %v3425 = vunpack.c.h.b16 %v1981
    %v3426 = vunpack.c.l.b16 %v1982
    %v3427 = vunpack.c.h.b16 %v1982
    %v3428 = vunpack.c.l.b16 %v1983
    %v3429 = vunpack.c.h.b16 %v1983
    %v3430 = vunpack.c.l.b16 %v1984
    %v3431 = vunpack.c.h.b16 %v1984
    %v3432 = vunpack.c.l.b16 %v1985
    %v3433 = vunpack.c.h.b16 %v1985
    %v3434 = vunpack.c.l.b16 %v1986
    %v3435 = vunpack.c.h.b16 %v1986
    %v3436 = vunpack.c.l.b16 %v1987
    %v3437 = vunpack.c.h.b16 %v1987
    %v3438 = vunpack.c.l.b16 %v1988
    %v3439 = vunpack.c.h.b16 %v1988
    %v3440 = vunpack.c.l.b16 %v1989
    %v3441 = vunpack.c.h.b16 %v1989
    %v3442 = vunpack.c.l.b16 %v1990
    %v3443 = vunpack.c.h.b16 %v1990
    %v3444 = vunpack.c.l.b16 %v1991
    %v3445 = vunpack.c.h.b16 %v1991
    %v3446 = vunpack.c.l.b16 %v1992
    %v3447 = vunpack.c.h.b16 %v1992
    %v3448 = vunpack.c.l.b16 %v1993
    %v3449 = vunpack.c.h.b16 %v1993
    %v3450 = vunpack.c.l.b16 %v1994
    %v3451 = vunpack.c.h.b16 %v1994
    %v3452 = vunpack.c.l.b16 %v1995
    %v3453 = vunpack.c.h.b16 %v1995
    %v3454 = vunpack.c.l.b16 %v1996
    %v3455 = vunpack.c.h.b16 %v1996
    %v3456 = vunpack.c.l.b16 %v1997
    %v3457 = vunpack.c.h.b16 %v1997
    %v3458 = vunpack.c.l.b16 %v1998
    %v3459 = vunpack.c.h.b16 %v1998
    %v3460 = vunpack.c.l.b16 %v1999
    %v3461 = vunpack.c.h.b16 %v1999
    %v3462 = vunpack.c.l.b16 %v2000
    %v3463 = vunpack.c.h.b16 %v2000
    %v3464 = vunpack.c.l.b16 %v2001
    %v3465 = vunpack.c.h.b16 %v2001
    %v3466 = vunpack.c.l.b16 %v2002
    %v3467 = vunpack.c.h.b16 %v2002
    %v3468 = vunpack.c.l.b16 %v2003
    %v3469 = vunpack.c.h.b16 %v2003
    %v3470 = vunpack.c.l.b16 %v2004
    %v3471 = vunpack.c.h.b16 %v2004
    %v3472 = vunpack.c.l.b16 %v2005
    %v3473 = vunpack.c.h.b16 %v2005
    %v3474 = vunpack.c.l.b16 %v2006
    %v3475 = vunpack.c.h.b16 %v2006
    %v3476 = vunpack.c.l.b16 %v2007
    %v3477 = vunpack.c.h.b16 %v2007
    %v3478 = vunpack.c.l.b16 %v2008
    %v3479 = vunpack.c.h.b16 %v2008
    %v3480 = vunpack.c.l.b16 %v2009
    %v3481 = vunpack.c.h.b16 %v2009
    %v3482 = vunpack.c.l.b16 %v2010
    %v3483 = vunpack.c.h.b16 %v2010
    %v3484 = vunpack.c.l.b16 %v2011
    %v3485 = vunpack.c.h.b16 %v2011
    %v3486 = vunpack.c.l.b16 %v2012
    %v3487 = vunpack.c.h.b16 %v2012
    %v3488 = vunpack.c.l.b16 %v2013
    %v3489 = vunpack.c.h.b16 %v2013
    %v3490 = vunpack.c.l.b16 %v2014
    %v3491 = vunpack.c.h.b16 %v2014
    %v3492 = vunpack.c.l.b16 %v2015
    %v3493 = vunpack.c.h.b16 %v2015
    %v3494 = vunpack.c.l.b16 %v2016
    %v3495 = vunpack.c.h.b16 %v2016
    %v3496 = vunpack.c.l.b16 %v2017
    %v3497 = vunpack.c.h.b16 %v2017
    %v3498 = vunpack.c.l.b16 %v2018
    %v3499 = vunpack.c.h.b16 %v2018
    %v3500 = vunpack.c.l.b16 %v2019
    %v3501 = vunpack.c.h.b16 %v2019
    %v3502 = vunpack.c.l.b16 %v2020
    %v3503 = vunpack.c.h.b16 %v2020
    %v3504 = vunpack.c.l.b16 %v2021
    %v3505 = vunpack.c.h.b16 %v2021
    %v3506 = vunpack.c.l.b16 %v2022
    %v3507 = vunpack.c.h.b16 %v2022
    %v3508 = vunpack.c.l.b16 %v2023
    %v3509 = vunpack.c.h.b16 %v2023
    %v3510 = vunpack.c.l.b16 %v2024
    %v3511 = vunpack.c.h.b16 %v2024
    %v3512 = vunpack.c.l.b16 %v2025
    %v3513 = vunpack.c.h.b16 %v2025
    %v3514 = vunpack.c.l.b16 %v2026
    %v3515 = vunpack.c.h.b16 %v2026
    %v3516 = vunpack.c.l.b16 %v2027
    %v3517 = vunpack.c.h.b16 %v2027
    %v3518 = vunpack.c.l.b16 %v2028
    %v3519 = vunpack.c.h.b16 %v2028
    %v3520 = vunpack.c.l.b16 %v2029
    %v3521 = vunpack.c.h.b16 %v2029
    %v3522 = vunpack.c.l.b16 %v2030
    %v3523 = vunpack.c.h.b16 %v2030
    %v3524 = vunpack.c.l.b16 %v2031
    %v3525 = vunpack.c.h.b16 %v2031
    %v3526 = vunpack.c.l.b16 %v2032
    %v3527 = vunpack.c.h.b16 %v2032
    %v3528 = vunpack.c.l.b16 %v2033
    %v3529 = vunpack.c.h.b16 %v2033
    %v3530 = vunpack.c.l.b16 %v2034
    %v3531 = vunpack.c.h.b16 %v2034
    %v3532 = vunpack.c.l.b16 %v2035
    %v3533 = vunpack.c.h.b16 %v2035
    %v3534 = vunpack.c.l.b16 %v2036
    %v3535 = vunpack.c.h.b16 %v2036
    %v3536 = vunpack.c.l.b16 %v2037
    %v3537 = vunpack.c.h.b16 %v2037
    %v3538 = vunpack.c.l.b16 %v2038
    %v3539 = vunpack.c.h.b16 %v2038
    %v3540 = vunpack.c.l.b16 %v2039
    %v3541 = vunpack.c.h.b16 %v2039
    %v3542 = vunpack.c.l.b16 %v2040
    %v3543 = vunpack.c.h.b16 %v2040
    %v3544 = vunpack.c.l.b16 %v2041
    %v3545 = vunpack.c.h.b16 %v2041
    %v3546 = vunpack.c.l.b16 %v2042
    %v3547 = vunpack.c.h.b16 %v2042
    %v3548 = vunpack.c.l.b16 %v2043
    %v3549 = vunpack.c.h.b16 %v2043
    %v3550 = vunpack.c.l.b16 %v2044
    %v3551 = vunpack.c.h.b16 %v2044
    %v3552 = vunpack.c.l.b16 %v2045
    %v3553 = vunpack.c.h.b16 %v2045
    %v3554 = vunpack.c.l.b16 %v2046
    %v3555 = vunpack.c.h.b16 %v2046
    %v3556 = vunpack.c.l.b16 %v2047
    %v3557 = vunpack.c.h.b16 %v2047
    %v3558 = vunpack.c.l.b16 %v2048
    %v3559 = vunpack.c.h.b16 %v2048
    %v3560 = vunpack.c.l.b16 %v2049
    %v3561 = vunpack.c.h.b16 %v2049
    %v3562 = vunpack.c.l.b16 %v2050
    %v3563 = vunpack.c.h.b16 %v2050
    %v3564 = vunpack.c.l.b16 %v2051
    %v3565 = vunpack.c.h.b16 %v2051
    %v3566 = vunpack.c.l.b16 %v2052
    %v3567 = vunpack.c.h.b16 %v2052
    %v3568 = vunpack.c.l.b16 %v2053
    %v3569 = vunpack.c.h.b16 %v2053
    %v3570 = vunpack.c.l.b16 %v2054
    %v3571 = vunpack.c.h.b16 %v2054
    %v3572 = vunpack.c.l.b16 %v2055
    %v3573 = vunpack.c.h.b16 %v2055
    %v3574 = vunpack.c.l.b16 %v2056
    %v3575 = vunpack.c.h.b16 %v2056
    %v3576 = vunpack.c.l.b16 %v2057
    %v3577 = vunpack.c.h.b16 %v2057
    %v3578 = vunpack.c.l.b16 %v2058
    %v3579 = vunpack.c.h.b16 %v2058
    %v3580 = vunpack.c.l.b16 %v2059
    %v3581 = vunpack.c.h.b16 %v2059
    %v3582 = vunpack.c.l.b16 %v2060
    %v3583 = vunpack.c.h.b16 %v2060
    %v3584 = vunpack.c.l.b16 %v2061
    %v3585 = vunpack.c.h.b16 %v2061
    %v3586 = vunpack.c.l.b16 %v2062
    %v3587 = vunpack.c.h.b16 %v2062
    %v3588 = vunpack.c.l.b16 %v2063
    %v3589 = vunpack.c.h.b16 %v2063
    %v3590 = vunpack.c.l.b16 %v2064
    %v3591 = vunpack.c.h.b16 %v2064
    %v3592 = vunpack.c.l.b16 %v2065
    %v3593 = vunpack.c.h.b16 %v2065
    %v3594 = vunpack.c.l.b16 %v2066
    %v3595 = vunpack.c.h.b16 %v2066
    %v3596 = vunpack.c.l.b16 %v2067
    %v3597 = vunpack.c.h.b16 %v2067
    %v3598 = vunpack.c.l.b16 %v2068
    %v3599 = vunpack.c.h.b16 %v2068
    %v3600 = vunpack.c.l.b16 %v2069
    %v3601 = vunpack.c.h.b16 %v2069
    %v3602 = vunpack.c.l.b16 %v2070
    %v3603 = vunpack.c.h.b16 %v2070
    %v3604 = vunpack.c.l.b16 %v2071
    %v3605 = vunpack.c.h.b16 %v2071
    %v3606 = vunpack.c.l.b16 %v2072
    %v3607 = vunpack.c.h.b16 %v2072
    %v3608 = vunpack.c.l.b16 %v2073
    %v3609 = vunpack.c.h.b16 %v2073
    %v3610 = vunpack.c.l.b16 %v2074
    %v3611 = vunpack.c.h.b16 %v2074
    %v3612 = vunpack.c.l.b16 %v2075
    %v3613 = vunpack.c.h.b16 %v2075
    %v3614 = vunpack.c.l.b16 %v2076
    %v3615 = vunpack.c.h.b16 %v2076
    %v3616 = vunpack.c.l.b16 %v2077
    %v3617 = vunpack.c.h.b16 %v2077
    %v3618 = vunpack.c.l.b16 %v2078
    %v3619 = vunpack.c.h.b16 %v2078
    %v3620 = vunpack.c.l.b16 %v2079
    %v3621 = vunpack.c.h.b16 %v2079
    %v3622 = vunpack.c.l.b16 %v2080
    %v3623 = vunpack.c.h.b16 %v2080
    %v3624 = vunpack.c.l.b16 %v2081
    %v3625 = vunpack.c.h.b16 %v2081
    %v3626 = vunpack.c.l.b16 %v2082
    %v3627 = vunpack.c.h.b16 %v2082
    %v3628 = vunpack.c.l.b16 %v2083
    %v3629 = vunpack.c.h.b16 %v2083
    %v3630 = vunpack.c.l.b16 %v2084
    %v3631 = vunpack.c.h.b16 %v2084
    %v3632 = vunpack.c.l.b16 %v2085
    %v3633 = vunpack.c.h.b16 %v2085
    %v3634 = vunpack.c.l.b16 %v2086
    %v3635 = vunpack.c.h.b16 %v2086
    %v3636 = vunpack.c.l.b16 %v2087
    %v3637 = vunpack.c.h.b16 %v2087
    %v3638 = vunpack.c.l.b16 %v2088
    %v3639 = vunpack.c.h.b16 %v2088
    %v3640 = vunpack.c.l.b16 %v2089
    %v3641 = vunpack.c.h.b16 %v2089
    %v3642 = vunpack.c.l.b16 %v2090
    %v3643 = vunpack.c.h.b16 %v2090
    %v3644 = vunpack.c.l.b16 %v2091
    %v3645 = vunpack.c.h.b16 %v2091
    %v3646 = vunpack.c.l.b16 %v2092
    %v3647 = vunpack.c.h.b16 %v2092
    %v3648 = vunpack.c.l.b16 %v2093
    %v3649 = vunpack.c.h.b16 %v2093
    %v3650 = vunpack.c.l.b16 %v2094
    %v3651 = vunpack.c.h.b16 %v2094
    %v3652 = vunpack.c.l.b16 %v2095
    %v3653 = vunpack.c.h.b16 %v2095
    %v3654 = vunpack.c.l.b16 %v2096
    %v3655 = vunpack.c.h.b16 %v2096
    %v3656 = vunpack.c.l.b16 %v2097
    %v3657 = vunpack.c.h.b16 %v2097
    %v3658 = vunpack.c.l.b16 %v2098
    %v3659 = vunpack.c.h.b16 %v2098
    %v3660 = vunpack.c.l.b16 %v2099
    %v3661 = vunpack.c.h.b16 %v2099
    %v3662 = vunpack.c.l.b16 %v2100
    %v3663 = vunpack.c.h.b16 %v2100
    %v3664 = vunpack.c.l.b16 %v2101
    %v3665 = vunpack.c.h.b16 %v2101
    %v3666 = vunpack.c.l.b16 %v2102
    %v3667 = vunpack.c.h.b16 %v2102
    %v3668 = vunpack.c.l.b16 %v2103
    %v3669 = vunpack.c.h.b16 %v2103
    %v3670 = vunpack.c.l.b16 %v2104
    %v3671 = vunpack.c.h.b16 %v2104
    %v3672 = vunpack.c.l.b16 %v2105
    %v3673 = vunpack.c.h.b16 %v2105
    %v3674 = vunpack.c.l.b16 %v2106
    %v3675 = vunpack.c.h.b16 %v2106
    %v3676 = vunpack.c.l.b16 %v2107
    %v3677 = vunpack.c.h.b16 %v2107
    %v3678 = vunpack.c.l.b16 %v2108
    %v3679 = vunpack.c.h.b16 %v2108
    %v3680 = vunpack.c.l.b16 %v2109
    %v3681 = vunpack.c.h.b16 %v2109
    %v3682 = vunpack.c.l.b16 %v2110
    %v3683 = vunpack.c.h.b16 %v2110
    %v3684 = vunpack.c.l.b16 %v2111
    %v3685 = vunpack.c.h.b16 %v2111
    %v3686 = vunpack.c.l.b16 %v2112
    %v3687 = vunpack.c.h.b16 %v2112
    %v3688 = vunpack.c.l.b16 %v2113
    %v3689 = vunpack.c.h.b16 %v2113
    %v3690 = vunpack.c.l.b16 %v2114
    %v3691 = vunpack.c.h.b16 %v2114
    %v3692 = vunpack.c.l.b16 %v2115
    %v3693 = vunpack.c.h.b16 %v2115
    %v3694 = vpack.c.b16 %v2678, %v2670
    %v3695 = vpack.c.b16 %v2679, %v2671
    %v3696 = vpack.c.b16 %v2680, %v2672
    %v3697 = vpack.c.b16 %v2681, %v2673
    %v3698 = vpack.c.b16 %v2682, %v2674
    %v3699 = vpack.c.b16 %v2683, %v2675
    %v3700 = vpack.c.b16 %v2684, %v2676
    %v3701 = vpack.c.b16 %v2685, %v2677
    %v3702 = vpack.c.b16 %v2694, %v2686
    %v3703 = vpack.c.b16 %v2695, %v2687
    %v3704 = vpack.c.b16 %v2696, %v2688
    %v3705 = vpack.c.b16 %v2697, %v2689
    %v3706 = vpack.c.b16 %v2698, %v2690
    %v3707 = vpack.c.b16 %v2699, %v2691
    %v3708 = vpack.c.b16 %v2700, %v2692
    %v3709 = vpack.c.b16 %v2701, %v2693
    %v3710 = vpack.c.b16 %v2710, %v2702
    %v3711 = vpack.c.b16 %v2711, %v2703
    %v3712 = vpack.c.b16 %v2712, %v2704
    %v3713 = vpack.c.b16 %v2713, %v2705
    %v3714 = vpack.c.b16 %v2714, %v2706
    %v3715 = vpack.c.b16 %v2715, %v2707
    %v3716 = vpack.c.b16 %v2716, %v2708
    %v3717 = vpack.c.b16 %v2717, %v2709
    %v3718 = vpack.c.b16 %v2726, %v2718
    %v3719 = vpack.c.b16 %v2727, %v2719
    %v3720 = vpack.c.b16 %v2728, %v2720
    %v3721 = vpack.c.b16 %v2729, %v2721
    %v3722 = vpack.c.b16 %v2730, %v2722
    %v3723 = vpack.c.b16 %v2731, %v2723
    %v3724 = vpack.c.b16 %v2732, %v2724
    %v3725 = vpack.c.b16 %v2733, %v2725
    %v3726 = vpack.c.b16 %v2742, %v2734
    %v3727 = vpack.c.b16 %v2743, %v2735
    %v3728 = vpack.c.b16 %v2744, %v2736
    %v3729 = vpack.c.b16 %v2745, %v2737
    %v3730 = vpack.c.b16 %v2746, %v2738
    %v3731 = vpack.c.b16 %v2747, %v2739
    %v3732 = vpack.c.b16 %v2748, %v2740
    %v3733 = vpack.c.b16 %v2749, %v2741
    %v3734 = vpack.c.b16 %v2758, %v2750
    %v3735 = vpack.c.b16 %v2759, %v2751
    %v3736 = vpack.c.b16 %v2760, %v2752
    %v3737 = vpack.c.b16 %v2761, %v2753
    %v3738 = vpack.c.b16 %v2762, %v2754
    %v3739 = vpack.c.b16 %v2763, %v2755
    %v3740 = vpack.c.b16 %v2764, %v2756
    %v3741 = vpack.c.b16 %v2765, %v2757
    %v3742 = vpack.c.b16 %v2774, %v2766
    %v3743 = vpack.c.b16 %v2775, %v2767
    %v3744 = vpack.c.b16 %v2776, %v2768
    %v3745 = vpack.c.b16 %v2777, %v2769
    %v3746 = vpack.c.b16 %v2778, %v2770
    %v3747 = vpack.c.b16 %v2779, %v2771
    %v3748 = vpack.c.b16 %v2780, %v2772
    %v3749 = vpack.c.b16 %v2781, %v2773
    %v3750 = vpack.c.b16 %v2790, %v2782
    %v3751 = vpack.c.b16 %v2791, %v2783
    %v3752 = vpack.c.b16 %v2792, %v2784
    %v3753 = vpack.c.b16 %v2793, %v2785
    %v3754 = vpack.c.b16 %v2794, %v2786
    %v3755 = vpack.c.b16 %v2795, %v2787
    %v3756 = vpack.c.b16 %v2796, %v2788
    %v3757 = vpack.c.b16 %v2797, %v2789
    %v3758 = vpack.c.b16 %v2806, %v2798
    %v3759 = vpack.c.b16 %v2807, %v2799
    %v3760 = vpack.c.b16 %v2808, %v2800
    %v3761 = vpack.c.b16 %v2809, %v2801
    %v3762 = vpack.c.b16 %v2810, %v2802
    %v3763 = vpack.c.b16 %v2811, %v2803
    %v3764 = vpack.c.b16 %v2812, %v2804
    %v3765 = vpack.c.b16 %v2813, %v2805
    %v3766 = vpack.c.b16 %v2822, %v2814
    %v3767 = vpack.c.b16 %v2823, %v2815
    %v3768 = vpack.c.b16 %v2824, %v2816
    %v3769 = vpack.c.b16 %v2825, %v2817
    %v3770 = vpack.c.b16 %v2826, %v2818
    %v3771 = vpack.c.b16 %v2827, %v2819
    %v3772 = vpack.c.b16 %v2828, %v2820
    %v3773 = vpack.c.b16 %v2829, %v2821
    %v3774 = vpack.c.b16 %v2838, %v2830
    %v3775 = vpack.c.b16 %v2839, %v2831
    %v3776 = vpack.c.b16 %v2840, %v2832
    %v3777 = vpack.c.b16 %v2841, %v2833
    %v3778 = vpack.c.b16 %v2842, %v2834
    %v3779 = vpack.c.b16 %v2843, %v2835
    %v3780 = vpack.c.b16 %v2844, %v2836
    %v3781 = vpack.c.b16 %v2845, %v2837
    %v3782 = vpack.c.b16 %v2854, %v2846
    %v3783 = vpack.c.b16 %v2855, %v2847
    %v3784 = vpack.c.b16 %v2856, %v2848
    %v3785 = vpack.c.b16 %v2857, %v2849
    %v3786 = vpack.c.b16 %v2858, %v2850
    %v3787 = vpack.c.b16 %v2859, %v2851
    %v3788 = vpack.c.b16 %v2860, %v2852
    %v3789 = vpack.c.b16 %v2861, %v2853
    %v3790 = vpack.c.b16 %v2870, %v2862
    %v3791 = vpack.c.b16 %v2871, %v2863
    %v3792 = vpack.c.b16 %v2872, %v2864
    %v3793 = vpack.c.b16 %v2873, %v2865
    %v3794 = vpack.c.b16 %v2874, %v2866
    %v3795 = vpack.c.b16 %v2875, %v2867
    %v3796 = vpack.c.b16 %v2876, %v2868
    %v3797 = vpack.c.b16 %v2877, %v2869
    %v3798 = vpack.c.b16 %v2886, %v2878
    %v3799 = vpack.c.b16 %v2887, %v2879
    %v3800 = vpack.c.b16 %v2888, %v2880
    %v3801 = vpack.c.b16 %v2889, %v2881
    %v3802 = vpack.c.b16 %v2890, %v2882
    %v3803 = vpack.c.b16 %v2891, %v2883
    %v3804 = vpack.c.b16 %v2892, %v2884
    %v3805 = vpack.c.b16 %v2893, %v2885
    %v3806 = vpack.c.b16 %v2902, %v2894
    %v3807 = vpack.c.b16 %v2903, %v2895
    %v3808 = vpack.c.b16 %v2904, %v2896
    %v3809 = vpack.c.b16 %v2905, %v2897
    %v3810 = vpack.c.b16 %v2906, %v2898
    %v3811 = vpack.c.b16 %v2907, %v2899
    %v3812 = vpack.c.b16 %v2908, %v2900
    %v3813 = vpack.c.b16 %v2909, %v2901
    %v3814 = vpack.c.b16 %v2918, %v2910
    %v3815 = vpack.c.b16 %v2919, %v2911
    %v3816 = vpack.c.b16 %v2920, %v2912
    %v3817 = vpack.c.b16 %v2921, %v2913
    %v3818 = vpack.c.b16 %v2922, %v2914
    %v3819 = vpack.c.b16 %v2923, %v2915
    %v3820 = vpack.c.b16 %v2924, %v2916
    %v3821 = vpack.c.b16 %v2925, %v2917
    %v3822 = vpack.c.b16 %v2934, %v2926
    %v3823 = vpack.c.b16 %v2935, %v2927
    %v3824 = vpack.c.b16 %v2936, %v2928
    %v3825 = vpack.c.b16 %v2937, %v2929
    %v3826 = vpack.c.b16 %v2938, %v2930
    %v3827 = vpack.c.b16 %v2939, %v2931
    %v3828 = vpack.c.b16 %v2940, %v2932
    %v3829 = vpack.c.b16 %v2941, %v2933
    %v3830 = vpack.c.b16 %v2950, %v2942
    %v3831 = vpack.c.b16 %v2951, %v2943
    %v3832 = vpack.c.b16 %v2952, %v2944
    %v3833 = vpack.c.b16 %v2953, %v2945
    %v3834 = vpack.c.b16 %v2954, %v2946
    %v3835 = vpack.c.b16 %v2955, %v2947
    %v3836 = vpack.c.b16 %v2956, %v2948
    %v3837 = vpack.c.b16 %v2957, %v2949
    %v3838 = vpack.c.b16 %v2966, %v2958
    %v3839 = vpack.c.b16 %v2967, %v2959
    %v3840 = vpack.c.b16 %v2968, %v2960
    %v3841 = vpack.c.b16 %v2969, %v2961
    %v3842 = vpack.c.b16 %v2970, %v2962
    %v3843 = vpack.c.b16 %v2971, %v2963
    %v3844 = vpack.c.b16 %v2972, %v2964
    %v3845 = vpack.c.b16 %v2973, %v2965
    %v3846 = vpack.c.b16 %v2982, %v2974
    %v3847 = vpack.c.b16 %v2983, %v2975
    %v3848 = vpack.c.b16 %v2984, %v2976
    %v3849 = vpack.c.b16 %v2985, %v2977
    %v3850 = vpack.c.b16 %v2986, %v2978
    %v3851 = vpack.c.b16 %v2987, %v2979
    %v3852 = vpack.c.b16 %v2988, %v2980
    %v3853 = vpack.c.b16 %v2989, %v2981
    %v3854 = vpack.c.b16 %v2998, %v2990
    %v3855 = vpack.c.b16 %v2999, %v2991
    %v3856 = vpack.c.b16 %v3000, %v2992
    %v3857 = vpack.c.b16 %v3001, %v2993
    %v3858 = vpack.c.b16 %v3002, %v2994
    %v3859 = vpack.c.b16 %v3003, %v2995
    %v3860 = vpack.c.b16 %v3004, %v2996
    %v3861 = vpack.c.b16 %v3005, %v2997
    %v3862 = vpack.c.b16 %v3014, %v3006
    %v3863 = vpack.c.b16 %v3015, %v3007
    %v3864 = vpack.c.b16 %v3016, %v3008
    %v3865 = vpack.c.b16 %v3017, %v3009
    %v3866 = vpack.c.b16 %v3018, %v3010
    %v3867 = vpack.c.b16 %v3019, %v3011
    %v3868 = vpack.c.b16 %v3020, %v3012
    %v3869 = vpack.c.b16 %v3021, %v3013
    %v3870 = vpack.c.b16 %v3030, %v3022
    %v3871 = vpack.c.b16 %v3031, %v3023
    %v3872 = vpack.c.b16 %v3032, %v3024
    %v3873 = vpack.c.b16 %v3033, %v3025
    %v3874 = vpack.c.b16 %v3034, %v3026
    %v3875 = vpack.c.b16 %v3035, %v3027
    %v3876 = vpack.c.b16 %v3036, %v3028
    %v3877 = vpack.c.b16 %v3037, %v3029
    %v3878 = vpack.c.b16 %v3046, %v3038
    %v3879 = vpack.c.b16 %v3047, %v3039
    %v3880 = vpack.c.b16 %v3048, %v3040
    %v3881 = vpack.c.b16 %v3049, %v3041
    %v3882 = vpack.c.b16 %v3050, %v3042
    %v3883 = vpack.c.b16 %v3051, %v3043
    %v3884 = vpack.c.b16 %v3052, %v3044
    %v3885 = vpack.c.b16 %v3053, %v3045
    %v3886 = vpack.c.b16 %v3062, %v3054
    %v3887 = vpack.c.b16 %v3063, %v3055
    %v3888 = vpack.c.b16 %v3064, %v3056
    %v3889 = vpack.c.b16 %v3065, %v3057
    %v3890 = vpack.c.b16 %v3066, %v3058
    %v3891 = vpack.c.b16 %v3067, %v3059
    %v3892 = vpack.c.b16 %v3068, %v3060
    %v3893 = vpack.c.b16 %v3069, %v3061
    %v3894 = vpack.c.b16 %v3078, %v3070
    %v3895 = vpack.c.b16 %v3079, %v3071
    %v3896 = vpack.c.b16 %v3080, %v3072
    %v3897 = vpack.c.b16 %v3081, %v3073
    %v3898 = vpack.c.b16 %v3082, %v3074
    %v3899 = vpack.c.b16 %v3083, %v3075
    %v3900 = vpack.c.b16 %v3084, %v3076
    %v3901 = vpack.c.b16 %v3085, %v3077
    %v3902 = vpack.c.b16 %v3094, %v3086
    %v3903 = vpack.c.b16 %v3095, %v3087
    %v3904 = vpack.c.b16 %v3096, %v3088
    %v3905 = vpack.c.b16 %v3097, %v3089
    %v3906 = vpack.c.b16 %v3098, %v3090
    %v3907 = vpack.c.b16 %v3099, %v3091
    %v3908 = vpack.c.b16 %v3100, %v3092
    %v3909 = vpack.c.b16 %v3101, %v3093
    %v3910 = vpack.c.b16 %v3110, %v3102
    %v3911 = vpack.c.b16 %v3111, %v3103
    %v3912 = vpack.c.b16 %v3112, %v3104
    %v3913 = vpack.c.b16 %v3113, %v3105
    %v3914 = vpack.c.b16 %v3114, %v3106
    %v3915 = vpack.c.b16 %v3115, %v3107
    %v3916 = vpack.c.b16 %v3116, %v3108
    %v3917 = vpack.c.b16 %v3117, %v3109
    %v3918 = vpack.c.b16 %v3126, %v3118
    %v3919 = vpack.c.b16 %v3127, %v3119
    %v3920 = vpack.c.b16 %v3128, %v3120
    %v3921 = vpack.c.b16 %v3129, %v3121
    %v3922 = vpack.c.b16 %v3130, %v3122
    %v3923 = vpack.c.b16 %v3131, %v3123
    %v3924 = vpack.c.b16 %v3132, %v3124
    %v3925 = vpack.c.b16 %v3133, %v3125
    %v3926 = vpack.c.b16 %v3142, %v3134
    %v3927 = vpack.c.b16 %v3143, %v3135
    %v3928 = vpack.c.b16 %v3144, %v3136
    %v3929 = vpack.c.b16 %v3145, %v3137
    %v3930 = vpack.c.b16 %v3146, %v3138
    %v3931 = vpack.c.b16 %v3147, %v3139
    %v3932 = vpack.c.b16 %v3148, %v3140
    %v3933 = vpack.c.b16 %v3149, %v3141
    %v3934 = vpack.c.b16 %v3158, %v3150
    %v3935 = vpack.c.b16 %v3159, %v3151
    %v3936 = vpack.c.b16 %v3160, %v3152
    %v3937 = vpack.c.b16 %v3161, %v3153
    %v3938 = vpack.c.b16 %v3162, %v3154
    %v3939 = vpack.c.b16 %v3163, %v3155
    %v3940 = vpack.c.b16 %v3164, %v3156
    %v3941 = vpack.c.b16 %v3165, %v3157
    %v3942 = vpack.c.b16 %v3174, %v3166
    %v3943 = vpack.c.b16 %v3175, %v3167
    %v3944 = vpack.c.b16 %v3176, %v3168
    %v3945 = vpack.c.b16 %v3177, %v3169
    %v3946 = vpack.c.b16 %v3178, %v3170
    %v3947 = vpack.c.b16 %v3179, %v3171
    %v3948 = vpack.c.b16 %v3180, %v3172
    %v3949 = vpack.c.b16 %v3181, %v3173
    %v3950 = vpack.c.b16 %v3190, %v3182
    %v3951 = vpack.c.b16 %v3191, %v3183
    %v3952 = vpack.c.b16 %v3192, %v3184
    %v3953 = vpack.c.b16 %v3193, %v3185
    %v3954 = vpack.c.b16 %v3194, %v3186
    %v3955 = vpack.c.b16 %v3195, %v3187
    %v3956 = vpack.c.b16 %v3196, %v3188
    %v3957 = vpack.c.b16 %v3197, %v3189
    %v3958 = vpack.c.b16 %v3206, %v3198
    %v3959 = vpack.c.b16 %v3207, %v3199
    %v3960 = vpack.c.b16 %v3208, %v3200
    %v3961 = vpack.c.b16 %v3209, %v3201
    %v3962 = vpack.c.b16 %v3210, %v3202
    %v3963 = vpack.c.b16 %v3211, %v3203
    %v3964 = vpack.c.b16 %v3212, %v3204
    %v3965 = vpack.c.b16 %v3213, %v3205
    %v3966 = vpack.c.b16 %v3222, %v3214
    %v3967 = vpack.c.b16 %v3223, %v3215
    %v3968 = vpack.c.b16 %v3224, %v3216
    %v3969 = vpack.c.b16 %v3225, %v3217
    %v3970 = vpack.c.b16 %v3226, %v3218
    %v3971 = vpack.c.b16 %v3227, %v3219
    %v3972 = vpack.c.b16 %v3228, %v3220
    %v3973 = vpack.c.b16 %v3229, %v3221
    %v3974 = vpack.c.b16 %v3238, %v3230
    %v3975 = vpack.c.b16 %v3239, %v3231
    %v3976 = vpack.c.b16 %v3240, %v3232
    %v3977 = vpack.c.b16 %v3241, %v3233
    %v3978 = vpack.c.b16 %v3242, %v3234
    %v3979 = vpack.c.b16 %v3243, %v3235
    %v3980 = vpack.c.b16 %v3244, %v3236
    %v3981 = vpack.c.b16 %v3245, %v3237
    %v3982 = vpack.c.b16 %v3254, %v3246
    %v3983 = vpack.c.b16 %v3255, %v3247
    %v3984 = vpack.c.b16 %v3256, %v3248
    %v3985 = vpack.c.b16 %v3257, %v3249
    %v3986 = vpack.c.b16 %v3258, %v3250
    %v3987 = vpack.c.b16 %v3259, %v3251
    %v3988 = vpack.c.b16 %v3260, %v3252
    %v3989 = vpack.c.b16 %v3261, %v3253
    %v3990 = vpack.c.b16 %v3270, %v3262
    %v3991 = vpack.c.b16 %v3271, %v3263
    %v3992 = vpack.c.b16 %v3272, %v3264
    %v3993 = vpack.c.b16 %v3273, %v3265
    %v3994 = vpack.c.b16 %v3274, %v3266
    %v3995 = vpack.c.b16 %v3275, %v3267
    %v3996 = vpack.c.b16 %v3276, %v3268
    %v3997 = vpack.c.b16 %v3277, %v3269
    %v3998 = vpack.c.b16 %v3286, %v3278
    %v3999 = vpack.c.b16 %v3287, %v3279
    %v4000 = vpack.c.b16 %v3288, %v3280
    %v4001 = vpack.c.b16 %v3289, %v3281
    %v4002 = vpack.c.b16 %v3290, %v3282
    %v4003 = vpack.c.b16 %v3291, %v3283
    %v4004 = vpack.c.b16 %v3292, %v3284
    %v4005 = vpack.c.b16 %v3293, %v3285
    %v4006 = vpack.c.b16 %v3302, %v3294
    %v4007 = vpack.c.b16 %v3303, %v3295
    %v4008 = vpack.c.b16 %v3304, %v3296
    %v4009 = vpack.c.b16 %v3305, %v3297
    %v4010 = vpack.c.b16 %v3306, %v3298
    %v4011 = vpack.c.b16 %v3307, %v3299
    %v4012 = vpack.c.b16 %v3308, %v3300
    %v4013 = vpack.c.b16 %v3309, %v3301
    %v4014 = vpack.c.b16 %v3318, %v3310
    %v4015 = vpack.c.b16 %v3319, %v3311
    %v4016 = vpack.c.b16 %v3320, %v3312
    %v4017 = vpack.c.b16 %v3321, %v3313
    %v4018 = vpack.c.b16 %v3322, %v3314
    %v4019 = vpack.c.b16 %v3323, %v3315
    %v4020 = vpack.c.b16 %v3324, %v3316
    %v4021 = vpack.c.b16 %v3325, %v3317
    %v4022 = vpack.c.b16 %v3334, %v3326
    %v4023 = vpack.c.b16 %v3335, %v3327
    %v4024 = vpack.c.b16 %v3336, %v3328
    %v4025 = vpack.c.b16 %v3337, %v3329
    %v4026 = vpack.c.b16 %v3338, %v3330
    %v4027 = vpack.c.b16 %v3339, %v3331
    %v4028 = vpack.c.b16 %v3340, %v3332
    %v4029 = vpack.c.b16 %v3341, %v3333
    %v4030 = vpack.c.b16 %v3350, %v3342
    %v4031 = vpack.c.b16 %v3351, %v3343
    %v4032 = vpack.c.b16 %v3352, %v3344
    %v4033 = vpack.c.b16 %v3353, %v3345
    %v4034 = vpack.c.b16 %v3354, %v3346
    %v4035 = vpack.c.b16 %v3355, %v3347
    %v4036 = vpack.c.b16 %v3356, %v3348
    %v4037 = vpack.c.b16 %v3357, %v3349
    %v4038 = vpack.c.b16 %v3366, %v3358
    %v4039 = vpack.c.b16 %v3367, %v3359
    %v4040 = vpack.c.b16 %v3368, %v3360
    %v4041 = vpack.c.b16 %v3369, %v3361
    %v4042 = vpack.c.b16 %v3370, %v3362
    %v4043 = vpack.c.b16 %v3371, %v3363
    %v4044 = vpack.c.b16 %v3372, %v3364
    %v4045 = vpack.c.b16 %v3373, %v3365
    %v4046 = vpack.c.b16 %v3382, %v3374
    %v4047 = vpack.c.b16 %v3383, %v3375
    %v4048 = vpack.c.b16 %v3384, %v3376
    %v4049 = vpack.c.b16 %v3385, %v3377
    %v4050 = vpack.c.b16 %v3386, %v3378
    %v4051 = vpack.c.b16 %v3387, %v3379
    %v4052 = vpack.c.b16 %v3388, %v3380
    %v4053 = vpack.c.b16 %v3389, %v3381
    %v4054 = vpack.c.b16 %v3398, %v3390
    %v4055 = vpack.c.b16 %v3399, %v3391
    %v4056 = vpack.c.b16 %v3400, %v3392
    %v4057 = vpack.c.b16 %v3401, %v3393
    %v4058 = vpack.c.b16 %v3402, %v3394
    %v4059 = vpack.c.b16 %v3403, %v3395
    %v4060 = vpack.c.b16 %v3404, %v3396
    %v4061 = vpack.c.b16 %v3405, %v3397
    %v4062 = vpack.c.b16 %v3414, %v3406
    %v4063 = vpack.c.b16 %v3415, %v3407
    %v4064 = vpack.c.b16 %v3416, %v3408
    %v4065 = vpack.c.b16 %v3417, %v3409
    %v4066 = vpack.c.b16 %v3418, %v3410
    %v4067 = vpack.c.b16 %v3419, %v3411
    %v4068 = vpack.c.b16 %v3420, %v3412
    %v4069 = vpack.c.b16 %v3421, %v3413
    %v4070 = vpack.c.b16 %v3430, %v3422
    %v4071 = vpack.c.b16 %v3431, %v3423
    %v4072 = vpack.c.b16 %v3432, %v3424
    %v4073 = vpack.c.b16 %v3433, %v3425
    %v4074 = vpack.c.b16 %v3434, %v3426
    %v4075 = vpack.c.b16 %v3435, %v3427
    %v4076 = vpack.c.b16 %v3436, %v3428
    %v4077 = vpack.c.b16 %v3437, %v3429
    %v4078 = vpack.c.b16 %v3446, %v3438
    %v4079 = vpack.c.b16 %v3447, %v3439
    %v4080 = vpack.c.b16 %v3448, %v3440
    %v4081 = vpack.c.b16 %v3449, %v3441
    %v4082 = vpack.c.b16 %v3450, %v3442
    %v4083 = vpack.c.b16 %v3451, %v3443
    %v4084 = vpack.c.b16 %v3452, %v3444
    %v4085 = vpack.c.b16 %v3453, %v3445
    %v4086 = vpack.c.b16 %v3462, %v3454
    %v4087 = vpack.c.b16 %v3463, %v3455
    %v4088 = vpack.c.b16 %v3464, %v3456
    %v4089 = vpack.c.b16 %v3465, %v3457
    %v4090 = vpack.c.b16 %v3466, %v3458
    %v4091 = vpack.c.b16 %v3467, %v3459
    %v4092 = vpack.c.b16 %v3468, %v3460
    %v4093 = vpack.c.b16 %v3469, %v3461
    %v4094 = vpack.c.b16 %v3478, %v3470
    %v4095 = vpack.c.b16 %v3479, %v3471
    %v4096 = vpack.c.b16 %v3480, %v3472
    %v4097 = vpack.c.b16 %v3481, %v3473
    %v4098 = vpack.c.b16 %v3482, %v3474
    %v4099 = vpack.c.b16 %v3483, %v3475
    %v4100 = vpack.c.b16 %v3484, %v3476
    %v4101 = vpack.c.b16 %v3485, %v3477
    %v4102 = vpack.c.b16 %v3494, %v3486
    %v4103 = vpack.c.b16 %v3495, %v3487
    %v4104 = vpack.c.b16 %v3496, %v3488
    %v4105 = vpack.c.b16 %v3497, %v3489
    %v4106 = vpack.c.b16 %v3498, %v3490
    %v4107 = vpack.c.b16 %v3499, %v3491
    %v4108 = vpack.c.b16 %v3500, %v3492
    %v4109 = vpack.c.b16 %v3501, %v3493
    %v4110 = vpack.c.b16 %v3510, %v3502
    %v4111 = vpack.c.b16 %v3511, %v3503
    %v4112 = vpack.c.b16 %v3512, %v3504
    %v4113 = vpack.c.b16 %v3513, %v3505
    %v4114 = vpack.c.b16 %v3514, %v3506
    %v4115 = vpack.c.b16 %v3515, %v3507
    %v4116 = vpack.c.b16 %v3516, %v3508
    %v4117 = vpack.c.b16 %v3517, %v3509
    %v4118 = vpack.c.b16 %v3526, %v3518
    %v4119 = vpack.c.b16 %v3527, %v3519
    %v4120 = vpack.c.b16 %v3528, %v3520
    %v4121 = vpack.c.b16 %v3529, %v3521
    %v4122 = vpack.c.b16 %v3530, %v3522
    %v4123 = vpack.c.b16 %v3531, %v3523
    %v4124 = vpack.c.b16 %v3532, %v3524
    %v4125 = vpack.c.b16 %v3533, %v3525
    %v4126 = vpack.c.b16 %v3542, %v3534
    %v4127 = vpack.c.b16 %v3543, %v3535
    %v4128 = vpack.c.b16 %v3544, %v3536
    %v4129 = vpack.c.b16 %v3545, %v3537
    %v4130 = vpack.c.b16 %v3546, %v3538
    %v4131 = vpack.c.b16 %v3547, %v3539
    %v4132 = vpack.c.b16 %v3548, %v3540
    %v4133 = vpack.c.b16 %v3549, %v3541
    %v4134 = vpack.c.b16 %v3558, %v3550
    %v4135 = vpack.c.b16 %v3559, %v3551
    %v4136 = vpack.c.b16 %v3560, %v3552
    %v4137 = vpack.c.b16 %v3561, %v3553
    %v4138 = vpack.c.b16 %v3562, %v3554
    %v4139 = vpack.c.b16 %v3563, %v3555
    %v4140 = vpack.c.b16 %v3564, %v3556
    %v4141 = vpack.c.b16 %v3565, %v3557
    %v4142 = vpack.c.b16 %v3574, %v3566
    %v4143 = vpack.c.b16 %v3575, %v3567
    %v4144 = vpack.c.b16 %v3576, %v3568
    %v4145 = vpack.c.b16 %v3577, %v3569
    %v4146 = vpack.c.b16 %v3578, %v3570
    %v4147 = vpack.c.b16 %v3579, %v3571
    %v4148 = vpack.c.b16 %v3580, %v3572
    %v4149 = vpack.c.b16 %v3581, %v3573
    %v4150 = vpack.c.b16 %v3590, %v3582
    %v4151 = vpack.c.b16 %v3591, %v3583
    %v4152 = vpack.c.b16 %v3592, %v3584
    %v4153 = vpack.c.b16 %v3593, %v3585
    %v4154 = vpack.c.b16 %v3594, %v3586
    %v4155 = vpack.c.b16 %v3595, %v3587
    %v4156 = vpack.c.b16 %v3596, %v3588
    %v4157 = vpack.c.b16 %v3597, %v3589
    %v4158 = vpack.c.b16 %v3606, %v3598
    %v4159 = vpack.c.b16 %v3607, %v3599
    %v4160 = vpack.c.b16 %v3608, %v3600
    %v4161 = vpack.c.b16 %v3609, %v3601
    %v4162 = vpack.c.b16 %v3610, %v3602
    %v4163 = vpack.c.b16 %v3611, %v3603
    %v4164 = vpack.c.b16 %v3612, %v3604
    %v4165 = vpack.c.b16 %v3613, %v3605
    %v4166 = vpack.c.b16 %v3622, %v3614
    %v4167 = vpack.c.b16 %v3623, %v3615
    %v4168 = vpack.c.b16 %v3624, %v3616
    %v4169 = vpack.c.b16 %v3625, %v3617
    %v4170 = vpack.c.b16 %v3626, %v3618
    %v4171 = vpack.c.b16 %v3627, %v3619
    %v4172 = vpack.c.b16 %v3628, %v3620
    %v4173 = vpack.c.b16 %v3629, %v3621
    %v4174 = vpack.c.b16 %v3638, %v3630
    %v4175 = vpack.c.b16 %v3639, %v3631
    %v4176 = vpack.c.b16 %v3640, %v3632
    %v4177 = vpack.c.b16 %v3641, %v3633
    %v4178 = vpack.c.b16 %v3642, %v3634
    %v4179 = vpack.c.b16 %v3643, %v3635
    %v4180 = vpack.c.b16 %v3644, %v3636
    %v4181 = vpack.c.b16 %v3645, %v3637
    %v4182 = vpack.c.b16 %v3654, %v3646
    %v4183 = vpack.c.b16 %v3655, %v3647
    %v4184 = vpack.c.b16 %v3656, %v3648
    %v4185 = vpack.c.b16 %v3657, %v3649
    %v4186 = vpack.c.b16 %v3658, %v3650
    %v4187 = vpack.c.b16 %v3659, %v3651
    %v4188 = vpack.c.b16 %v3660, %v3652
    %v4189 = vpack.c.b16 %v3661, %v3653
    %v4190 = vpack.c.b16 %v3670, %v3662
    %v4191 = vpack.c.b16 %v3671, %v3663
    %v4192 = vpack.c.b16 %v3672, %v3664
    %v4193 = vpack.c.b16 %v3673, %v3665
    %v4194 = vpack.c.b16 %v3674, %v3666
    %v4195 = vpack.c.b16 %v3675, %v3667
    %v4196 = vpack.c.b16 %v3676, %v3668
    %v4197 = vpack.c.b16 %v3677, %v3669
    %v4198 = vpack.c.b16 %v3686, %v3678
    %v4199 = vpack.c.b16 %v3687, %v3679
    %v4200 = vpack.c.b16 %v3688, %v3680
    %v4201 = vpack.c.b16 %v3689, %v3681
    %v4202 = vpack.c.b16 %v3690, %v3682
    %v4203 = vpack.c.b16 %v3691, %v3683
    %v4204 = vpack.c.b16 %v3692, %v3684
    %v4205 = vpack.c.b16 %v3693, %v3685
    %4718 = vmatprep.subr.bf16.mxu0 %v3695
    %4719 = vmatpush1.bf16.msra.mxu0 %v3694
    %4720 = vmatprep.subr.bf16.mxu0 %v3703
    %4721 = vmatpush1.bf16.msra.mxu0 %v3702
    %4722 = vmatprep.subr.bf16.mxu0 %v3711
    %4723 = vmatpush1.bf16.msra.mxu0 %v3710
    %4724 = vmatprep.subr.bf16.mxu0 %v3719
    %4725 = vmatpush1.bf16.msra.mxu0 %v3718
    %4726 = vmatprep.subr.bf16.mxu0 %v3727
    %4727 = vmatpush1.bf16.msra.mxu0 %v3726
    %4728 = vmatprep.subr.bf16.mxu0 %v3735
    %4729 = vmatpush1.bf16.msra.mxu0 %v3734
    %4730 = vmatprep.subr.bf16.mxu0 %v3743
    %4731 = vmatpush1.bf16.msra.mxu0 %v3742
    %4732 = vmatprep.subr.bf16.mxu0 %v3751
    %4733 = vmatpush1.bf16.msra.mxu0 %v3750
    %4734 = vmatprep.subr.bf16.mxu0 %v3759
    %4735 = vmatpush1.bf16.msra.mxu0 %v3758
    %4736 = vmatprep.subr.bf16.mxu0 %v3767
    %4737 = vmatpush1.bf16.msra.mxu0 %v3766
    %4738 = vmatprep.subr.bf16.mxu0 %v3775
    %4739 = vmatpush1.bf16.msra.mxu0 %v3774
    %4740 = vmatprep.subr.bf16.mxu0 %v3783
    %4741 = vmatpush1.bf16.msra.mxu0 %v3782
    %4742 = vmatprep.subr.bf16.mxu0 %v3791
    %4743 = vmatpush1.bf16.msra.mxu0 %v3790
    %4744 = vmatprep.subr.bf16.mxu0 %v3799
    %4745 = vmatpush1.bf16.msra.mxu0 %v3798
    %4746 = vmatprep.subr.bf16.mxu0 %v3807
    %4747 = vmatpush1.bf16.msra.mxu0 %v3806
    %4748 = vmatprep.subr.bf16.mxu0 %v3815
    %4749 = vmatpush1.bf16.msra.mxu0 %v3814
    %4750 = vmatprep.mubr.bf16.mxu0 %v1597
    %4751 = vmatmul.mubr.bf16.gmra.mrb[0].mxu0 %v1596
    %v4752 = vpop.f32.mrb[0].mxu0
    %v4753 = vadd.f32 %v2121, %v4752
    %v4754 = vpop.f32.mrb[0].mxu0
    %v4755 = vadd.f32 %v2125, %v4754
    %v4756 = vpop.f32.mrb[0].mxu0
    %v4757 = vadd.f32 %v2121, %v4756
    %v4758 = vpop.f32.mrb[0].mxu0
    %v4759 = vadd.f32 %v2125, %v4758
    %4760 = vdwg.mxu0
    %4761 = vmatprep.subr.bf16.mxu0 %v3823
    %4762 = vmatpush1.bf16.msra.mxu0 %v3822
    %4763 = vmatprep.subr.bf16.mxu0 %v3831
    %4764 = vmatpush1.bf16.msra.mxu0 %v3830
    %4765 = vmatprep.subr.bf16.mxu0 %v3839
    %4766 = vmatpush1.bf16.msra.mxu0 %v3838
    %4767 = vmatprep.subr.bf16.mxu0 %v3847
    %4768 = vmatpush1.bf16.msra.mxu0 %v3846
    %4769 = vmatprep.subr.bf16.mxu0 %v3855
    %4770 = vmatpush1.bf16.msra.mxu0 %v3854
    %4771 = vmatprep.subr.bf16.mxu0 %v3863
    %4772 = vmatpush1.bf16.msra.mxu0 %v3862
    %4773 = vmatprep.subr.bf16.mxu0 %v3871
    %4774 = vmatpush1.bf16.msra.mxu0 %v3870
    %4775 = vmatprep.subr.bf16.mxu0 %v3879
    %4776 = vmatpush1.bf16.msra.mxu0 %v3878
    %4777 = vmatprep.subr.bf16.mxu0 %v3887
    %4778 = vmatpush1.bf16.msra.mxu0 %v3886
    %4779 = vmatprep.subr.bf16.mxu0 %v3895
    %4780 = vmatpush1.bf16.msra.mxu0 %v3894
    %4781 = vmatprep.subr.bf16.mxu0 %v3903
    %4782 = vmatpush1.bf16.msra.mxu0 %v3902
    %4783 = vmatprep.subr.bf16.mxu0 %v3911
    %4784 = vmatpush1.bf16.msra.mxu0 %v3910
    %4785 = vmatprep.subr.bf16.mxu0 %v3919
    %4786 = vmatpush1.bf16.msra.mxu0 %v3918
    %4787 = vmatprep.subr.bf16.mxu0 %v3927
    %4788 = vmatpush1.bf16.msra.mxu0 %v3926
    %4789 = vmatprep.subr.bf16.mxu0 %v3935
    %4790 = vmatpush1.bf16.msra.mxu0 %v3934
    %4791 = vmatprep.subr.bf16.mxu0 %v3943
    %4792 = vmatpush1.bf16.msra.mxu0 %v3942
    %4793 = vmatprep.mubr.bf16.mxu0 %v1599
    %4794 = vmatmul.mubr.bf16.gmra.mrb[0].mxu0 %v1598
    %v4795 = vpop.f32.mrb[0].mxu0
    %v4796 = vadd.f32 %v4753, %v4795
    %v4797 = vpop.f32.mrb[0].mxu0
    %v4798 = vadd.f32 %v4755, %v4797
    %v4799 = vpop.f32.mrb[0].mxu0
    %v4800 = vadd.f32 %v4757, %v4799
    %v4801 = vpop.f32.mrb[0].mxu0
    %v4802 = vadd.f32 %v4759, %v4801
    %4803 = vdwg.mxu0
    %4804 = vmatprep.subr.bf16.mxu0 %v3951
    %4805 = vmatpush1.bf16.msra.mxu0 %v3950
    %4806 = vmatprep.subr.bf16.mxu0 %v3959
    %4807 = vmatpush1.bf16.msra.mxu0 %v3958
    %4808 = vmatprep.subr.bf16.mxu0 %v3967
    %4809 = vmatpush1.bf16.msra.mxu0 %v3966
    %4810 = vmatprep.subr.bf16.mxu0 %v3975
    %4811 = vmatpush1.bf16.msra.mxu0 %v3974
    %4812 = vmatprep.subr.bf16.mxu0 %v3983
    %4813 = vmatpush1.bf16.msra.mxu0 %v3982
    %4814 = vmatprep.subr.bf16.mxu0 %v3991
    %4815 = vmatpush1.bf16.msra.mxu0 %v3990
    %4816 = vmatprep.subr.bf16.mxu0 %v3999
    %4817 = vmatpush1.bf16.msra.mxu0 %v3998
    %4818 = vmatprep.subr.bf16.mxu0 %v4007
    %4819 = vmatpush1.bf16.msra.mxu0 %v4006
    %4820 = vmatprep.subr.bf16.mxu0 %v4015
    %4821 = vmatpush1.bf16.msra.mxu0 %v4014
    %4822 = vmatprep.subr.bf16.mxu0 %v4023
    %4823 = vmatpush1.bf16.msra.mxu0 %v4022
    %4824 = vmatprep.subr.bf16.mxu0 %v4031
    %4825 = vmatpush1.bf16.msra.mxu0 %v4030
    %4826 = vmatprep.subr.bf16.mxu0 %v4039
    %4827 = vmatpush1.bf16.msra.mxu0 %v4038
    %4828 = vmatprep.subr.bf16.mxu0 %v4047
    %4829 = vmatpush1.bf16.msra.mxu0 %v4046
    %4830 = vmatprep.subr.bf16.mxu0 %v4055
    %4831 = vmatpush1.bf16.msra.mxu0 %v4054
    %4832 = vmatprep.subr.bf16.mxu0 %v4063
    %4833 = vmatpush1.bf16.msra.mxu0 %v4062
    %4834 = vmatprep.subr.bf16.mxu0 %v4071
    %4835 = vmatpush1.bf16.msra.mxu0 %v4070
    %4836 = vmatprep.mubr.bf16.mxu0 %v1601
    %4837 = vmatmul.mubr.bf16.gmra.mrb[0].mxu0 %v1600
    %v4838 = vpop.f32.mrb[0].mxu0
    %v4839 = vadd.f32 %v4796, %v4838
    %v4840 = vpop.f32.mrb[0].mxu0
    %v4841 = vadd.f32 %v4798, %v4840
    %v4842 = vpop.f32.mrb[0].mxu0
    %v4843 = vadd.f32 %v4800, %v4842
    %v4844 = vpop.f32.mrb[0].mxu0
    %v4845 = vadd.f32 %v4802, %v4844
    %4846 = vdwg.mxu0
    %4847 = vmatprep.subr.bf16.mxu0 %v4079
    %4848 = vmatpush1.bf16.msra.mxu0 %v4078
    %4849 = vmatprep.subr.bf16.mxu0 %v4087
    %4850 = vmatpush1.bf16.msra.mxu0 %v4086
    %4851 = vmatprep.subr.bf16.mxu0 %v4095
    %4852 = vmatpush1.bf16.msra.mxu0 %v4094
    %4853 = vmatprep.subr.bf16.mxu0 %v4103
    %4854 = vmatpush1.bf16.msra.mxu0 %v4102
    %4855 = vmatprep.subr.bf16.mxu0 %v4111
    %4856 = vmatpush1.bf16.msra.mxu0 %v4110
    %4857 = vmatprep.subr.bf16.mxu0 %v4119
    %4858 = vmatpush1.bf16.msra.mxu0 %v4118
    %4859 = vmatprep.subr.bf16.mxu0 %v4127
    %4860 = vmatpush1.bf16.msra.mxu0 %v4126
    %4861 = vmatprep.subr.bf16.mxu0 %v4135
    %4862 = vmatpush1.bf16.msra.mxu0 %v4134
    %4863 = vmatprep.subr.bf16.mxu0 %v4143
    %4864 = vmatpush1.bf16.msra.mxu0 %v4142
    %4865 = vmatprep.subr.bf16.mxu0 %v4151
    %4866 = vmatpush1.bf16.msra.mxu0 %v4150
    %4867 = vmatprep.subr.bf16.mxu0 %v4159
    %4868 = vmatpush1.bf16.msra.mxu0 %v4158
    %4869 = vmatprep.subr.bf16.mxu0 %v4167
    %4870 = vmatpush1.bf16.msra.mxu0 %v4166
    %4871 = vmatprep.subr.bf16.mxu0 %v4175
    %4872 = vmatpush1.bf16.msra.mxu0 %v4174
    %4873 = vmatprep.subr.bf16.mxu0 %v4183
    %4874 = vmatpush1.bf16.msra.mxu0 %v4182
    %4875 = vmatprep.subr.bf16.mxu0 %v4191
    %4876 = vmatpush1.bf16.msra.mxu0 %v4190
    %4877 = vmatprep.subr.bf16.mxu0 %v4199
    %4878 = vmatpush1.bf16.msra.mxu0 %v4198
    %4879 = vmatprep.mubr.bf16.mxu0 %v1603
    %4880 = vmatmul.mubr.bf16.gmra.mrb[0].mxu0 %v1602
    %v4881 = vpop.f32.mrb[0].mxu0
    %v4882 = vadd.f32 %v4839, %v4881
    %v4883 = vpop.f32.mrb[0].mxu0
    %v4884 = vadd.f32 %v4841, %v4883
    %v4885 = vpop.f32.mrb[0].mxu0
    %v4886 = vadd.f32 %v4843, %v4885
    %v4887 = vpop.f32.mrb[0].mxu0
    %v4888 = vadd.f32 %v4845, %v4887
    %4889 = vdwg.mxu0
    %4890 = vmatprep.subr.bf16.mxu0 %v3697
    %4891 = vmatpush1.bf16.msra.mxu0 %v3696
    %4892 = vmatprep.subr.bf16.mxu0 %v3705
    %4893 = vmatpush1.bf16.msra.mxu0 %v3704
    %4894 = vmatprep.subr.bf16.mxu0 %v3713
    %4895 = vmatpush1.bf16.msra.mxu0 %v3712
    %4896 = vmatprep.subr.bf16.mxu0 %v3721
    %4897 = vmatpush1.bf16.msra.mxu0 %v3720
    %4898 = vmatprep.subr.bf16.mxu0 %v3729
    %4899 = vmatpush1.bf16.msra.mxu0 %v3728
    %4900 = vmatprep.subr.bf16.mxu0 %v3737
    %4901 = vmatpush1.bf16.msra.mxu0 %v3736
    %4902 = vmatprep.subr.bf16.mxu0 %v3745
    %4903 = vmatpush1.bf16.msra.mxu0 %v3744
    %4904 = vmatprep.subr.bf16.mxu0 %v3753
    %4905 = vmatpush1.bf16.msra.mxu0 %v3752
    %4906 = vmatprep.subr.bf16.mxu0 %v3761
    %4907 = vmatpush1.bf16.msra.mxu0 %v3760
    %4908 = vmatprep.subr.bf16.mxu0 %v3769
    %4909 = vmatpush1.bf16.msra.mxu0 %v3768
    %4910 = vmatprep.subr.bf16.mxu0 %v3777
    %4911 = vmatpush1.bf16.msra.mxu0 %v3776
    %4912 = vmatprep.subr.bf16.mxu0 %v3785
    %4913 = vmatpush1.bf16.msra.mxu0 %v3784
    %4914 = vmatprep.subr.bf16.mxu0 %v3793
    %4915 = vmatpush1.bf16.msra.mxu0 %v3792
    %4916 = vmatprep.subr.bf16.mxu0 %v3801
    %4917 = vmatpush1.bf16.msra.mxu0 %v3800
    %4918 = vmatprep.subr.bf16.mxu0 %v3809
    %4919 = vmatpush1.bf16.msra.mxu0 %v3808
    %4920 = vmatprep.subr.bf16.mxu0 %v3817
    %4921 = vmatpush1.bf16.msra.mxu0 %v3816
    %4922 = vmatprep.mubr.bf16.mxu0 %v1597
    %4923 = vmatmul.mubr.bf16.gmra.mrb[0].mxu0 %v1596
    %v4924 = vpop.f32.mrb[0].mxu0
    %v4925 = vadd.f32 %v2129, %v4924
    %v4926 = vpop.f32.mrb[0].mxu0
    %v4927 = vadd.f32 %v2133, %v4926
    %v4928 = vpop.f32.mrb[0].mxu0
    %v4929 = vadd.f32 %v2129, %v4928
    %v4930 = vpop.f32.mrb[0].mxu0
    %v4931 = vadd.f32 %v2133, %v4930
    %4932 = vdwg.mxu0
    %4933 = vmatprep.subr.bf16.mxu0 %v3825
    %4934 = vmatpush1.bf16.msra.mxu0 %v3824
    %4935 = vmatprep.subr.bf16.mxu0 %v3833
    %4936 = vmatpush1.bf16.msra.mxu0 %v3832
    %4937 = vmatprep.subr.bf16.mxu0 %v3841
    %4938 = vmatpush1.bf16.msra.mxu0 %v3840
    %4939 = vmatprep.subr.bf16.mxu0 %v3849
    %4940 = vmatpush1.bf16.msra.mxu0 %v3848
    %4941 = vmatprep.subr.bf16.mxu0 %v3857
    %4942 = vmatpush1.bf16.msra.mxu0 %v3856
    %4943 = vmatprep.subr.bf16.mxu0 %v3865
    %4944 = vmatpush1.bf16.msra.mxu0 %v3864
    %4945 = vmatprep.subr.bf16.mxu0 %v3873
    %4946 = vmatpush1.bf16.msra.mxu0 %v3872
    %4947 = vmatprep.subr.bf16.mxu0 %v3881
    %4948 = vmatpush1.bf16.msra.mxu0 %v3880
    %4949 = vmatprep.subr.bf16.mxu0 %v3889
    %4950 = vmatpush1.bf16.msra.mxu0 %v3888
    %4951 = vmatprep.subr.bf16.mxu0 %v3897
    %4952 = vmatpush1.bf16.msra.mxu0 %v3896
    %4953 = vmatprep.subr.bf16.mxu0 %v3905
    %4954 = vmatpush1.bf16.msra.mxu0 %v3904
    %4955 = vmatprep.subr.bf16.mxu0 %v3913
    %4956 = vmatpush1.bf16.msra.mxu0 %v3912
    %4957 = vmatprep.subr.bf16.mxu0 %v3921
    %4958 = vmatpush1.bf16.msra.mxu0 %v3920
    %4959 = vmatprep.subr.bf16.mxu0 %v3929
    %4960 = vmatpush1.bf16.msra.mxu0 %v3928
    %4961 = vmatprep.subr.bf16.mxu0 %v3937
    %4962 = vmatpush1.bf16.msra.mxu0 %v3936
    %4963 = vmatprep.subr.bf16.mxu0 %v3945
    %4964 = vmatpush1.bf16.msra.mxu0 %v3944
    %4965 = vmatprep.mubr.bf16.mxu0 %v1599
    %4966 = vmatmul.mubr.bf16.gmra.mrb[0].mxu0 %v1598
    %v4967 = vpop.f32.mrb[0].mxu0
    %v4968 = vadd.f32 %v4925, %v4967
    %v4969 = vpop.f32.mrb[0].mxu0
    %v4970 = vadd.f32 %v4927, %v4969
    %v4971 = vpop.f32.mrb[0].mxu0
    %v4972 = vadd.f32 %v4929, %v4971
    %v4973 = vpop.f32.mrb[0].mxu0
    %v4974 = vadd.f32 %v4931, %v4973
    %4975 = vdwg.mxu0
    %4976 = vmatprep.subr.bf16.mxu0 %v3953
    %4977 = vmatpush1.bf16.msra.mxu0 %v3952
    %4978 = vmatprep.subr.bf16.mxu0 %v3961
    %4979 = vmatpush1.bf16.msra.mxu0 %v3960
    %4980 = vmatprep.subr.bf16.mxu0 %v3969
    %4981 = vmatpush1.bf16.msra.mxu0 %v3968
    %4982 = vmatprep.subr.bf16.mxu0 %v3977
    %4983 = vmatpush1.bf16.msra.mxu0 %v3976
    %4984 = vmatprep.subr.bf16.mxu0 %v3985
    %4985 = vmatpush1.bf16.msra.mxu0 %v3984
    %4986 = vmatprep.subr.bf16.mxu0 %v3993
    %4987 = vmatpush1.bf16.msra.mxu0 %v3992
    %4988 = vmatprep.subr.bf16.mxu0 %v4001
    %4989 = vmatpush1.bf16.msra.mxu0 %v4000
    %4990 = vmatprep.subr.bf16.mxu0 %v4009
    %4991 = vmatpush1.bf16.msra.mxu0 %v4008
    %4992 = vmatprep.subr.bf16.mxu0 %v4017
    %4993 = vmatpush1.bf16.msra.mxu0 %v4016
    %4994 = vmatprep.subr.bf16.mxu0 %v4025
    %4995 = vmatpush1.bf16.msra.mxu0 %v4024
    %4996 = vmatprep.subr.bf16.mxu0 %v4033
    %4997 = vmatpush1.bf16.msra.mxu0 %v4032
    %4998 = vmatprep.subr.bf16.mxu0 %v4041
    %4999 = vmatpush1.bf16.msra.mxu0 %v4040
    %5000 = vmatprep.subr.bf16.mxu0 %v4049
    %5001 = vmatpush1.bf16.msra.mxu0 %v4048
    %5002 = vmatprep.subr.bf16.mxu0 %v4057
    %5003 = vmatpush1.bf16.msra.mxu0 %v4056
    %5004 = vmatprep.subr.bf16.mxu0 %v4065
    %5005 = vmatpush1.bf16.msra.mxu0 %v4064
    %5006 = vmatprep.subr.bf16.mxu0 %v4073
    %5007 = vmatpush1.bf16.msra.mxu0 %v4072
    %5008 = vmatprep.mubr.bf16.mxu0 %v1601
    %5009 = vmatmul.mubr.bf16.gmra.mrb[0].mxu0 %v1600
    %v5010 = vpop.f32.mrb[0].mxu0
    %v5011 = vadd.f32 %v4968, %v5010
    %v5012 = vpop.f32.mrb[0].mxu0
    %v5013 = vadd.f32 %v4970, %v5012
    %v5014 = vpop.f32.mrb[0].mxu0
    %v5015 = vadd.f32 %v4972, %v5014
    %v5016 = vpop.f32.mrb[0].mxu0
    %v5017 = vadd.f32 %v4974, %v5016
    %5018 = vdwg.mxu0
    %5019 = vmatprep.subr.bf16.mxu0 %v4081
    %5020 = vmatpush1.bf16.msra.mxu0 %v4080
    %5021 = vmatprep.subr.bf16.mxu0 %v4089
    %5022 = vmatpush1.bf16.msra.mxu0 %v4088
    %5023 = vmatprep.subr.bf16.mxu0 %v4097
    %5024 = vmatpush1.bf16.msra.mxu0 %v4096
    %5025 = vmatprep.subr.bf16.mxu0 %v4105
    %5026 = vmatpush1.bf16.msra.mxu0 %v4104
    %5027 = vmatprep.subr.bf16.mxu0 %v4113
    %5028 = vmatpush1.bf16.msra.mxu0 %v4112
    %5029 = vmatprep.subr.bf16.mxu0 %v4121
    %5030 = vmatpush1.bf16.msra.mxu0 %v4120
    %5031 = vmatprep.subr.bf16.mxu0 %v4129
    %5032 = vmatpush1.bf16.msra.mxu0 %v4128
    %5033 = vmatprep.subr.bf16.mxu0 %v4137
    %5034 = vmatpush1.bf16.msra.mxu0 %v4136
    %5035 = vmatprep.subr.bf16.mxu0 %v4145
    %5036 = vmatpush1.bf16.msra.mxu0 %v4144
    %5037 = vmatprep.subr.bf16.mxu0 %v4153
    %5038 = vmatpush1.bf16.msra.mxu0 %v4152
    %5039 = vmatprep.subr.bf16.mxu0 %v4161
    %5040 = vmatpush1.bf16.msra.mxu0 %v4160
    %5041 = vmatprep.subr.bf16.mxu0 %v4169
    %5042 = vmatpush1.bf16.msra.mxu0 %v4168
    %5043 = vmatprep.subr.bf16.mxu0 %v4177
    %5044 = vmatpush1.bf16.msra.mxu0 %v4176
    %5045 = vmatprep.subr.bf16.mxu0 %v4185
    %5046 = vmatpush1.bf16.msra.mxu0 %v4184
    %5047 = vmatprep.subr.bf16.mxu0 %v4193
    %5048 = vmatpush1.bf16.msra.mxu0 %v4192
    %5049 = vmatprep.subr.bf16.mxu0 %v4201
    %5050 = vmatpush1.bf16.msra.mxu0 %v4200
    %5051 = vmatprep.mubr.bf16.mxu0 %v1603
    %5052 = vmatmul.mubr.bf16.gmra.mrb[0].mxu0 %v1602
    %v5053 = vpop.f32.mrb[0].mxu0
    %v5054 = vadd.f32 %v5011, %v5053
    %v5055 = vpop.f32.mrb[0].mxu0
    %v5056 = vadd.f32 %v5013, %v5055
    %v5057 = vpop.f32.mrb[0].mxu0
    %v5058 = vadd.f32 %v5015, %v5057
    %v5059 = vpop.f32.mrb[0].mxu0
    %v5060 = vadd.f32 %v5017, %v5059
    %5061 = vdwg.mxu0
    %5062 = vmatprep.subr.bf16.mxu0 %v3699
    %5063 = vmatpush1.bf16.msra.mxu0 %v3698
    %5064 = vmatprep.subr.bf16.mxu0 %v3707
    %5065 = vmatpush1.bf16.msra.mxu0 %v3706
    %5066 = vmatprep.subr.bf16.mxu0 %v3715
    %5067 = vmatpush1.bf16.msra.mxu0 %v3714
    %5068 = vmatprep.subr.bf16.mxu0 %v3723
    %5069 = vmatpush1.bf16.msra.mxu0 %v3722
    %5070 = vmatprep.subr.bf16.mxu0 %v3731
    %5071 = vmatpush1.bf16.msra.mxu0 %v3730
    %5072 = vmatprep.subr.bf16.mxu0 %v3739
    %5073 = vmatpush1.bf16.msra.mxu0 %v3738
    %5074 = vmatprep.subr.bf16.mxu0 %v3747
    %5075 = vmatpush1.bf16.msra.mxu0 %v3746
    %5076 = vmatprep.subr.bf16.mxu0 %v3755
    %5077 = vmatpush1.bf16.msra.mxu0 %v3754
    %5078 = vmatprep.subr.bf16.mxu0 %v3763
    %5079 = vmatpush1.bf16.msra.mxu0 %v3762
    %5080 = vmatprep.subr.bf16.mxu0 %v3771
    %5081 = vmatpush1.bf16.msra.mxu0 %v3770
    %5082 = vmatprep.subr.bf16.mxu0 %v3779
    %5083 = vmatpush1.bf16.msra.mxu0 %v3778
    %5084 = vmatprep.subr.bf16.mxu0 %v3787
    %5085 = vmatpush1.bf16.msra.mxu0 %v3786
    %5086 = vmatprep.subr.bf16.mxu0 %v3795
    %5087 = vmatpush1.bf16.msra.mxu0 %v3794
    %5088 = vmatprep.subr.bf16.mxu0 %v3803
    %5089 = vmatpush1.bf16.msra.mxu0 %v3802
    %5090 = vmatprep.subr.bf16.mxu0 %v3811
    %5091 = vmatpush1.bf16.msra.mxu0 %v3810
    %5092 = vmatprep.subr.bf16.mxu0 %v3819
    %5093 = vmatpush1.bf16.msra.mxu0 %v3818
    %5094 = vmatprep.mubr.bf16.mxu0 %v1597
    %5095 = vmatmul.mubr.bf16.gmra.mrb[0].mxu0 %v1596
    %v5096 = vpop.f32.mrb[0].mxu0
    %v5097 = vadd.f32 %v2137, %v5096
    %v5098 = vpop.f32.mrb[0].mxu0
    %v5099 = vadd.f32 %v2141, %v5098
    %v5100 = vpop.f32.mrb[0].mxu0
    %v5101 = vadd.f32 %v2137, %v5100
    %v5102 = vpop.f32.mrb[0].mxu0
    %v5103 = vadd.f32 %v2141, %v5102
    %5104 = vdwg.mxu0
    %5105 = vmatprep.subr.bf16.mxu0 %v3827
    %5106 = vmatpush1.bf16.msra.mxu0 %v3826
    %5107 = vmatprep.subr.bf16.mxu0 %v3835
    %5108 = vmatpush1.bf16.msra.mxu0 %v3834
    %5109 = vmatprep.subr.bf16.mxu0 %v3843
    %5110 = vmatpush1.bf16.msra.mxu0 %v3842
    %5111 = vmatprep.subr.bf16.mxu0 %v3851
    %5112 = vmatpush1.bf16.msra.mxu0 %v3850
    %5113 = vmatprep.subr.bf16.mxu0 %v3859
    %5114 = vmatpush1.bf16.msra.mxu0 %v3858
    %5115 = vmatprep.subr.bf16.mxu0 %v3867
    %5116 = vmatpush1.bf16.msra.mxu0 %v3866
    %5117 = vmatprep.subr.bf16.mxu0 %v3875
    %5118 = vmatpush1.bf16.msra.mxu0 %v3874
    %5119 = vmatprep.subr.bf16.mxu0 %v3883
    %5120 = vmatpush1.bf16.msra.mxu0 %v3882
    %5121 = vmatprep.subr.bf16.mxu0 %v3891
    %5122 = vmatpush1.bf16.msra.mxu0 %v3890
    %5123 = vmatprep.subr.bf16.mxu0 %v3899
    %5124 = vmatpush1.bf16.msra.mxu0 %v3898
    %5125 = vmatprep.subr.bf16.mxu0 %v3907
    %5126 = vmatpush1.bf16.msra.mxu0 %v3906
    %5127 = vmatprep.subr.bf16.mxu0 %v3915
    %5128 = vmatpush1.bf16.msra.mxu0 %v3914
    %5129 = vmatprep.subr.bf16.mxu0 %v3923
    %5130 = vmatpush1.bf16.msra.mxu0 %v3922
    %5131 = vmatprep.subr.bf16.mxu0 %v3931
    %5132 = vmatpush1.bf16.msra.mxu0 %v3930
    %5133 = vmatprep.subr.bf16.mxu0 %v3939
    %5134 = vmatpush1.bf16.msra.mxu0 %v3938
    %5135 = vmatprep.subr.bf16.mxu0 %v3947
    %5136 = vmatpush1.bf16.msra.mxu0 %v3946
    %5137 = vmatprep.mubr.bf16.mxu0 %v1599
    %5138 = vmatmul.mubr.bf16.gmra.mrb[0].mxu0 %v1598
    %v5139 = vpop.f32.mrb[0].mxu0
    %v5140 = vadd.f32 %v5097, %v5139
    %v5141 = vpop.f32.mrb[0].mxu0
    %v5142 = vadd.f32 %v5099, %v5141
    %v5143 = vpop.f32.mrb[0].mxu0
    %v5144 = vadd.f32 %v5101, %v5143
    %v5145 = vpop.f32.mrb[0].mxu0
    %v5146 = vadd.f32 %v5103, %v5145
    %5147 = vdwg.mxu0
    %5148 = vmatprep.subr.bf16.mxu0 %v3955
    %5149 = vmatpush1.bf16.msra.mxu0 %v3954
    %5150 = vmatprep.subr.bf16.mxu0 %v3963
    %5151 = vmatpush1.bf16.msra.mxu0 %v3962
    %5152 = vmatprep.subr.bf16.mxu0 %v3971
    %5153 = vmatpush1.bf16.msra.mxu0 %v3970
    %5154 = vmatprep.subr.bf16.mxu0 %v3979
    %5155 = vmatpush1.bf16.msra.mxu0 %v3978
    %5156 = vmatprep.subr.bf16.mxu0 %v3987
    %5157 = vmatpush1.bf16.msra.mxu0 %v3986
    %5158 = vmatprep.subr.bf16.mxu0 %v3995
    %5159 = vmatpush1.bf16.msra.mxu0 %v3994
    %5160 = vmatprep.subr.bf16.mxu0 %v4003
    %5161 = vmatpush1.bf16.msra.mxu0 %v4002
    %5162 = vmatprep.subr.bf16.mxu0 %v4011
    %5163 = vmatpush1.bf16.msra.mxu0 %v4010
    %5164 = vmatprep.subr.bf16.mxu0 %v4019
    %5165 = vmatpush1.bf16.msra.mxu0 %v4018
    %5166 = vmatprep.subr.bf16.mxu0 %v4027
    %5167 = vmatpush1.bf16.msra.mxu0 %v4026
    %5168 = vmatprep.subr.bf16.mxu0 %v4035
    %5169 = vmatpush1.bf16.msra.mxu0 %v4034
    %5170 = vmatprep.subr.bf16.mxu0 %v4043
    %5171 = vmatpush1.bf16.msra.mxu0 %v4042
    %5172 = vmatprep.subr.bf16.mxu0 %v4051
    %5173 = vmatpush1.bf16.msra.mxu0 %v4050
    %5174 = vmatprep.subr.bf16.mxu0 %v4059
    %5175 = vmatpush1.bf16.msra.mxu0 %v4058
    %5176 = vmatprep.subr.bf16.mxu0 %v4067
    %5177 = vmatpush1.bf16.msra.mxu0 %v4066
    %5178 = vmatprep.subr.bf16.mxu0 %v4075
    %5179 = vmatpush1.bf16.msra.mxu0 %v4074
    %5180 = vmatprep.mubr.bf16.mxu0 %v1601
    %5181 = vmatmul.mubr.bf16.gmra.mrb[0].mxu0 %v1600
    %v5182 = vpop.f32.mrb[0].mxu0
    %v5183 = vadd.f32 %v5140, %v5182
    %v5184 = vpop.f32.mrb[0].mxu0
    %v5185 = vadd.f32 %v5142, %v5184
    %v5186 = vpop.f32.mrb[0].mxu0
    %v5187 = vadd.f32 %v5144, %v5186
    %v5188 = vpop.f32.mrb[0].mxu0
    %v5189 = vadd.f32 %v5146, %v5188
    %5190 = vdwg.mxu0
    %5191 = vmatprep.subr.bf16.mxu0 %v4083
    %5192 = vmatpush1.bf16.msra.mxu0 %v4082
    %5193 = vmatprep.subr.bf16.mxu0 %v4091
    %5194 = vmatpush1.bf16.msra.mxu0 %v4090
    %5195 = vmatprep.subr.bf16.mxu0 %v4099
    %5196 = vmatpush1.bf16.msra.mxu0 %v4098
    %5197 = vmatprep.subr.bf16.mxu0 %v4107
    %5198 = vmatpush1.bf16.msra.mxu0 %v4106
    %5199 = vmatprep.subr.bf16.mxu0 %v4115
    %5200 = vmatpush1.bf16.msra.mxu0 %v4114
    %5201 = vmatprep.subr.bf16.mxu0 %v4123
    %5202 = vmatpush1.bf16.msra.mxu0 %v4122
    %5203 = vmatprep.subr.bf16.mxu0 %v4131
    %5204 = vmatpush1.bf16.msra.mxu0 %v4130
    %5205 = vmatprep.subr.bf16.mxu0 %v4139
    %5206 = vmatpush1.bf16.msra.mxu0 %v4138
    %5207 = vmatprep.subr.bf16.mxu0 %v4147
    %5208 = vmatpush1.bf16.msra.mxu0 %v4146
    %5209 = vmatprep.subr.bf16.mxu0 %v4155
    %5210 = vmatpush1.bf16.msra.mxu0 %v4154
    %5211 = vmatprep.subr.bf16.mxu0 %v4163
    %5212 = vmatpush1.bf16.msra.mxu0 %v4162
    %5213 = vmatprep.subr.bf16.mxu0 %v4171
    %5214 = vmatpush1.bf16.msra.mxu0 %v4170
    %5215 = vmatprep.subr.bf16.mxu0 %v4179
    %5216 = vmatpush1.bf16.msra.mxu0 %v4178
    %5217 = vmatprep.subr.bf16.mxu0 %v4187
    %5218 = vmatpush1.bf16.msra.mxu0 %v4186
    %5219 = vmatprep.subr.bf16.mxu0 %v4195
    %5220 = vmatpush1.bf16.msra.mxu0 %v4194
    %5221 = vmatprep.subr.bf16.mxu0 %v4203
    %5222 = vmatpush1.bf16.msra.mxu0 %v4202
    %5223 = vmatprep.mubr.bf16.mxu0 %v1603
    %5224 = vmatmul.mubr.bf16.gmra.mrb[0].mxu0 %v1602
    %v5225 = vpop.f32.mrb[0].mxu0
    %v5226 = vadd.f32 %v5183, %v5225
    %v5227 = vpop.f32.mrb[0].mxu0
    %v5228 = vadd.f32 %v5185, %v5227
    %v5229 = vpop.f32.mrb[0].mxu0
    %v5230 = vadd.f32 %v5187, %v5229
    %v5231 = vpop.f32.mrb[0].mxu0
    %v5232 = vadd.f32 %v5189, %v5231
    %5233 = vdwg.mxu0
    %5234 = vmatprep.subr.bf16.mxu0 %v3701
    %5235 = vmatpush1.bf16.msra.mxu0 %v3700
    %5236 = vmatprep.subr.bf16.mxu0 %v3709
    %5237 = vmatpush1.bf16.msra.mxu0 %v3708
    %5238 = vmatprep.subr.bf16.mxu0 %v3717
    %5239 = vmatpush1.bf16.msra.mxu0 %v3716
    %5240 = vmatprep.subr.bf16.mxu0 %v3725
    %5241 = vmatpush1.bf16.msra.mxu0 %v3724
    %5242 = vmatprep.subr.bf16.mxu0 %v3733
    %5243 = vmatpush1.bf16.msra.mxu0 %v3732
    %5244 = vmatprep.subr.bf16.mxu0 %v3741
    %5245 = vmatpush1.bf16.msra.mxu0 %v3740
    %5246 = vmatprep.subr.bf16.mxu0 %v3749
    %5247 = vmatpush1.bf16.msra.mxu0 %v3748
    %5248 = vmatprep.subr.bf16.mxu0 %v3757
    %5249 = vmatpush1.bf16.msra.mxu0 %v3756
    %5250 = vmatprep.subr.bf16.mxu0 %v3765
    %5251 = vmatpush1.bf16.msra.mxu0 %v3764
    %5252 = vmatprep.subr.bf16.mxu0 %v3773
    %5253 = vmatpush1.bf16.msra.mxu0 %v3772
    %5254 = vmatprep.subr.bf16.mxu0 %v3781
    %5255 = vmatpush1.bf16.msra.mxu0 %v3780
    %5256 = vmatprep.subr.bf16.mxu0 %v3789
    %5257 = vmatpush1.bf16.msra.mxu0 %v3788
    %5258 = vmatprep.subr.bf16.mxu0 %v3797
    %5259 = vmatpush1.bf16.msra.mxu0 %v3796
    %5260 = vmatprep.subr.bf16.mxu0 %v3805
    %5261 = vmatpush1.bf16.msra.mxu0 %v3804
    %5262 = vmatprep.subr.bf16.mxu0 %v3813
    %5263 = vmatpush1.bf16.msra.mxu0 %v3812
    %5264 = vmatprep.subr.bf16.mxu0 %v3821
    %5265 = vmatpush1.bf16.msra.mxu0 %v3820
    %5266 = vmatprep.mubr.bf16.mxu0 %v1597
    %5267 = vmatmul.mubr.bf16.gmra.mrb[0].mxu0 %v1596
    %v5268 = vpop.f32.mrb[0].mxu0
    %v5269 = vadd.f32 %v2145, %v5268
    %v5270 = vpop.f32.mrb[0].mxu0
    %v5271 = vadd.f32 %v2149, %v5270
    %v5272 = vpop.f32.mrb[0].mxu0
    %v5273 = vadd.f32 %v2145, %v5272
    %v5274 = vpop.f32.mrb[0].mxu0
    %v5275 = vadd.f32 %v2149, %v5274
    %5276 = vdwg.mxu0
    %5277 = vmatprep.subr.bf16.mxu0 %v3829
    %5278 = vmatpush1.bf16.msra.mxu0 %v3828
    %5279 = vmatprep.subr.bf16.mxu0 %v3837
    %5280 = vmatpush1.bf16.msra.mxu0 %v3836
    %5281 = vmatprep.subr.bf16.mxu0 %v3845
    %5282 = vmatpush1.bf16.msra.mxu0 %v3844
    %5283 = vmatprep.subr.bf16.mxu0 %v3853
    %5284 = vmatpush1.bf16.msra.mxu0 %v3852
    %5285 = vmatprep.subr.bf16.mxu0 %v3861
    %5286 = vmatpush1.bf16.msra.mxu0 %v3860
    %5287 = vmatprep.subr.bf16.mxu0 %v3869
    %5288 = vmatpush1.bf16.msra.mxu0 %v3868
    %5289 = vmatprep.subr.bf16.mxu0 %v3877
    %5290 = vmatpush1.bf16.msra.mxu0 %v3876
    %5291 = vmatprep.subr.bf16.mxu0 %v3885
    %5292 = vmatpush1.bf16.msra.mxu0 %v3884
    %5293 = vmatprep.subr.bf16.mxu0 %v3893
    %5294 = vmatpush1.bf16.msra.mxu0 %v3892
    %5295 = vmatprep.subr.bf16.mxu0 %v3901
    %5296 = vmatpush1.bf16.msra.mxu0 %v3900
    %5297 = vmatprep.subr.bf16.mxu0 %v3909
    %5298 = vmatpush1.bf16.msra.mxu0 %v3908
    %5299 = vmatprep.subr.bf16.mxu0 %v3917
    %5300 = vmatpush1.bf16.msra.mxu0 %v3916
    %5301 = vmatprep.subr.bf16.mxu0 %v3925
    %5302 = vmatpush1.bf16.msra.mxu0 %v3924
    %5303 = vmatprep.subr.bf16.mxu0 %v3933
    %5304 = vmatpush1.bf16.msra.mxu0 %v3932
    %5305 = vmatprep.subr.bf16.mxu0 %v3941
    %5306 = vmatpush1.bf16.msra.mxu0 %v3940
    %5307 = vmatprep.subr.bf16.mxu0 %v3949
    %5308 = vmatpush1.bf16.msra.mxu0 %v3948
    %5309 = vmatprep.mubr.bf16.mxu0 %v1599
    %5310 = vmatmul.mubr.bf16.gmra.mrb[0].mxu0 %v1598
    %v5311 = vpop.f32.mrb[0].mxu0
    %v5312 = vadd.f32 %v5269, %v5311
    %v5313 = vpop.f32.mrb[0].mxu0
    %v5314 = vadd.f32 %v5271, %v5313
    %v5315 = vpop.f32.mrb[0].mxu0
    %v5316 = vadd.f32 %v5273, %v5315
    %v5317 = vpop.f32.mrb[0].mxu0
    %v5318 = vadd.f32 %v5275, %v5317
    %5319 = vdwg.mxu0
    %5320 = vmatprep.subr.bf16.mxu0 %v3957
    %5321 = vmatpush1.bf16.msra.mxu0 %v3956
    %5322 = vmatprep.subr.bf16.mxu0 %v3965
    %5323 = vmatpush1.bf16.msra.mxu0 %v3964
    %5324 = vmatprep.subr.bf16.mxu0 %v3973
    %5325 = vmatpush1.bf16.msra.mxu0 %v3972
    %5326 = vmatprep.subr.bf16.mxu0 %v3981
    %5327 = vmatpush1.bf16.msra.mxu0 %v3980
    %5328 = vmatprep.subr.bf16.mxu0 %v3989
    %5329 = vmatpush1.bf16.msra.mxu0 %v3988
    %5330 = vmatprep.subr.bf16.mxu0 %v3997
    %5331 = vmatpush1.bf16.msra.mxu0 %v3996
    %5332 = vmatprep.subr.bf16.mxu0 %v4005
    %5333 = vmatpush1.bf16.msra.mxu0 %v4004
    %5334 = vmatprep.subr.bf16.mxu0 %v4013
    %5335 = vmatpush1.bf16.msra.mxu0 %v4012
    %5336 = vmatprep.subr.bf16.mxu0 %v4021
    %5337 = vmatpush1.bf16.msra.mxu0 %v4020
    %5338 = vmatprep.subr.bf16.mxu0 %v4029
    %5339 = vmatpush1.bf16.msra.mxu0 %v4028
    %5340 = vmatprep.subr.bf16.mxu0 %v4037
    %5341 = vmatpush1.bf16.msra.mxu0 %v4036
    %5342 = vmatprep.subr.bf16.mxu0 %v4045
    %5343 = vmatpush1.bf16.msra.mxu0 %v4044
    %5344 = vmatprep.subr.bf16.mxu0 %v4053
    %5345 = vmatpush1.bf16.msra.mxu0 %v4052
    %5346 = vmatprep.subr.bf16.mxu0 %v4061
    %5347 = vmatpush1.bf16.msra.mxu0 %v4060
    %5348 = vmatprep.subr.bf16.mxu0 %v4069
    %5349 = vmatpush1.bf16.msra.mxu0 %v4068
    %5350 = vmatprep.subr.bf16.mxu0 %v4077
    %5351 = vmatpush1.bf16.msra.mxu0 %v4076
    %5352 = vmatprep.mubr.bf16.mxu0 %v1601
    %5353 = vmatmul.mubr.bf16.gmra.mrb[0].mxu0 %v1600
    %v5354 = vpop.f32.mrb[0].mxu0
    %v5355 = vadd.f32 %v5312, %v5354
    %v5356 = vpop.f32.mrb[0].mxu0
    %v5357 = vadd.f32 %v5314, %v5356
    %v5358 = vpop.f32.mrb[0].mxu0
    %v5359 = vadd.f32 %v5316, %v5358
    %v5360 = vpop.f32.mrb[0].mxu0
    %v5361 = vadd.f32 %v5318, %v5360
    %5362 = vdwg.mxu0
    %5363 = vmatprep.subr.bf16.mxu0 %v4085
    %5364 = vmatpush1.bf16.msra.mxu0 %v4084
    %5365 = vmatprep.subr.bf16.mxu0 %v4093
    %5366 = vmatpush1.bf16.msra.mxu0 %v4092
    %5367 = vmatprep.subr.bf16.mxu0 %v4101
    %5368 = vmatpush1.bf16.msra.mxu0 %v4100
    %5369 = vmatprep.subr.bf16.mxu0 %v4109
    %5370 = vmatpush1.bf16.msra.mxu0 %v4108
    %5371 = vmatprep.subr.bf16.mxu0 %v4117
    %5372 = vmatpush1.bf16.msra.mxu0 %v4116
    %5373 = vmatprep.subr.bf16.mxu0 %v4125
    %5374 = vmatpush1.bf16.msra.mxu0 %v4124
    %5375 = vmatprep.subr.bf16.mxu0 %v4133
    %5376 = vmatpush1.bf16.msra.mxu0 %v4132
    %5377 = vmatprep.subr.bf16.mxu0 %v4141
    %5378 = vmatpush1.bf16.msra.mxu0 %v4140
    %5379 = vmatprep.subr.bf16.mxu0 %v4149
    %5380 = vmatpush1.bf16.msra.mxu0 %v4148
    %5381 = vmatprep.subr.bf16.mxu0 %v4157
    %5382 = vmatpush1.bf16.msra.mxu0 %v4156
    %5383 = vmatprep.subr.bf16.mxu0 %v4165
    %5384 = vmatpush1.bf16.msra.mxu0 %v4164
    %5385 = vmatprep.subr.bf16.mxu0 %v4173
    %5386 = vmatpush1.bf16.msra.mxu0 %v4172
    %5387 = vmatprep.subr.bf16.mxu0 %v4181
    %5388 = vmatpush1.bf16.msra.mxu0 %v4180
    %5389 = vmatprep.subr.bf16.mxu0 %v4189
    %5390 = vmatpush1.bf16.msra.mxu0 %v4188
    %5391 = vmatprep.subr.bf16.mxu0 %v4197
    %5392 = vmatpush1.bf16.msra.mxu0 %v4196
    %5393 = vmatprep.subr.bf16.mxu0 %v4205
    %5394 = vmatpush1.bf16.msra.mxu0 %v4204
    %5395 = vmatprep.mubr.bf16.mxu0 %v1603
    %5396 = vmatmul.mubr.bf16.gmra.mrb[0].mxu0 %v1602
    %v5397 = vpop.f32.mrb[0].mxu0
    %v5398 = vadd.f32 %v5355, %v5397
    %v5399 = vpop.f32.mrb[0].mxu0
    %v5400 = vadd.f32 %v5357, %v5399
    %v5401 = vpop.f32.mrb[0].mxu0
    %v5402 = vadd.f32 %v5359, %v5401
    %v5403 = vpop.f32.mrb[0].mxu0
    %v5404 = vadd.f32 %v5361, %v5403
    %5405 = vdwg.mxu0
    %v5406 = vmax.f32 %v4882, 0.0
    %v5407 = vmax.f32 %v4884, 0.0
    %v5408 = vmax.f32 %v5054, 0.0
    %v5409 = vmax.f32 %v5056, 0.0
    %v5410 = vmax.f32 %v5226, 0.0
    %v5411 = vmax.f32 %v5228, 0.0
    %v5412 = vmax.f32 %v5398, 0.0
    %v5413 = vmax.f32 %v5400, 0.0
    %v5414 = vmax.f32 %v4886, 0.0
    %v5415 = vmax.f32 %v4888, 0.0
    %v5416 = vmax.f32 %v5058, 0.0
    %v5417 = vmax.f32 %v5060, 0.0
    %v5418 = vmax.f32 %v5230, 0.0
    %v5419 = vmax.f32 %v5232, 0.0
    %v5420 = vmax.f32 %v5402, 0.0
    %v5421 = vmax.f32 %v5404, 0.0
    %v5422 = vpack.c.bf16 %v5414, %v5406
    %v5423 = vpack.c.bf16 %v5415, %v5407
    %v5424 = vpack.c.bf16 %v5416, %v5408
    %v5425 = vpack.c.bf16 %v5417, %v5409
    %v5426 = vpack.c.bf16 %v5418, %v5410
    %v5427 = vpack.c.bf16 %v5419, %v5411
    %v5428 = vpack.c.bf16 %v5420, %v5412
    %v5429 = vpack.c.bf16 %v5421, %v5413
    %v5430 = vld [vmem:[#allocation11] sm:$0xff]
    %v5431 = vld [vmem:[#allocation11 + $0x8] sm:$0xff]
    %v5432 = vld [vmem:[#allocation11 + $0x10] sm:$0xff]
    %v5433 = vld [vmem:[#allocation11 + $0x18] sm:$0xff]
    %v5434 = vld [vmem:[#allocation11 + $0x20] sm:$0xff]
    %v5435 = vld [vmem:[#allocation11 + $0x28] sm:$0xff]
    %v5436 = vld [vmem:[#allocation11 + $0x30] sm:$0xff]
    %v5437 = vld [vmem:[#allocation11 + $0x38] sm:$0xff]
    %v5438 = vld [vmem:[#allocation11 + $0x40] sm:$0xff]
    %v5439 = vld [vmem:[#allocation11 + $0x48] sm:$0xff]
    %v5440 = vld [vmem:[#allocation11 + $0x50] sm:$0xff]
    %v5441 = vld [vmem:[#allocation11 + $0x58] sm:$0xff]
    %v5442 = vld [vmem:[#allocation11 + $0x60] sm:$0xff]
    %v5443 = vld [vmem:[#allocation11 + $0x68] sm:$0xff]
    %v5444 = vld [vmem:[#allocation11 + $0x70] sm:$0xff]
    %v5445 = vld [vmem:[#allocation11 + $0x78] sm:$0xff]
    %v5446 = vld [vmem:[#allocation11 + $0x80] sm:$0xff]
    %v5447 = vld [vmem:[#allocation11 + $0x88] sm:$0xff]
    %v5448 = vld [vmem:[#allocation11 + $0x90] sm:$0xff]
    %v5449 = vld [vmem:[#allocation11 + $0x98] sm:$0xff]
    %v5450 = vld [vmem:[#allocation11 + $0xa0] sm:$0xff]
    %v5451 = vld [vmem:[#allocation11 + $0xa8] sm:$0xff]
    %v5452 = vld [vmem:[#allocation11 + $0xb0] sm:$0xff]
    %v5453 = vld [vmem:[#allocation11 + $0xb8] sm:$0xff]
    %v5454 = vld [vmem:[#allocation11 + $0xc0] sm:$0xff]
    %v5455 = vld [vmem:[#allocation11 + $0xc8] sm:$0xff]
    %v5456 = vld [vmem:[#allocation11 + $0xd0] sm:$0xff]
    %v5457 = vld [vmem:[#allocation11 + $0xd8] sm:$0xff]
    %v5458 = vld [vmem:[#allocation11 + $0xe0] sm:$0xff]
    %v5459 = vld [vmem:[#allocation11 + $0xe8] sm:$0xff]
    %v5460 = vld [vmem:[#allocation11 + $0xf0] sm:$0xff]
    %v5461 = vld [vmem:[#allocation11 + $0xf8] sm:$0xff]
    %v5462 = vld [vmem:[#allocation11 + $0x100] sm:$0xff]
    %v5463 = vld [vmem:[#allocation11 + $0x108] sm:$0xff]
    %v5464 = vld [vmem:[#allocation11 + $0x110] sm:$0xff]
    %v5465 = vld [vmem:[#allocation11 + $0x118] sm:$0xff]
    %v5466 = vld [vmem:[#allocation11 + $0x120] sm:$0xff]
    %v5467 = vld [vmem:[#allocation11 + $0x128] sm:$0xff]
    %v5468 = vld [vmem:[#allocation11 + $0x130] sm:$0xff]
    %v5469 = vld [vmem:[#allocation11 + $0x138] sm:$0xff]
    %v5470 = vld [vmem:[#allocation11 + $0x140] sm:$0xff]
    %v5471 = vld [vmem:[#allocation11 + $0x148] sm:$0xff]
    %v5472 = vld [vmem:[#allocation11 + $0x150] sm:$0xff]
    %v5473 = vld [vmem:[#allocation11 + $0x158] sm:$0xff]
    %v5474 = vld [vmem:[#allocation11 + $0x160] sm:$0xff]
    %v5475 = vld [vmem:[#allocation11 + $0x168] sm:$0xff]
    %v5476 = vld [vmem:[#allocation11 + $0x170] sm:$0xff]
    %v5477 = vld [vmem:[#allocation11 + $0x178] sm:$0xff]
    %v5478 = vld [vmem:[#allocation11 + $0x180] sm:$0xff]
    %v5479 = vld [vmem:[#allocation11 + $0x188] sm:$0xff]
    %v5480 = vld [vmem:[#allocation11 + $0x190] sm:$0xff]
    %v5481 = vld [vmem:[#allocation11 + $0x198] sm:$0xff]
    %v5482 = vld [vmem:[#allocation11 + $0x1a0] sm:$0xff]
    %v5483 = vld [vmem:[#allocation11 + $0x1a8] sm:$0xff]
    %v5484 = vld [vmem:[#allocation11 + $0x1b0] sm:$0xff]
    %v5485 = vld [vmem:[#allocation11 + $0x1b8] sm:$0xff]
    %v5486 = vld [vmem:[#allocation11 + $0x1c0] sm:$0xff]
    %v5487 = vld [vmem:[#allocation11 + $0x1c8] sm:$0xff]
    %v5488 = vld [vmem:[#allocation11 + $0x1d0] sm:$0xff]
    %v5489 = vld [vmem:[#allocation11 + $0x1d8] sm:$0xff]
    %v5490 = vld [vmem:[#allocation11 + $0x1e0] sm:$0xff]
    %v5491 = vld [vmem:[#allocation11 + $0x1e8] sm:$0xff]
    %v5492 = vld [vmem:[#allocation11 + $0x1f0] sm:$0xff]
    %v5493 = vld [vmem:[#allocation11 + $0x1f8] sm:$0xff]
    %v5494 = vld [vmem:[#allocation11 + $0x200] sm:$0xff]
    %v5495 = vld [vmem:[#allocation11 + $0x208] sm:$0xff]
    %v5496 = vld [vmem:[#allocation11 + $0x210] sm:$0xff]
    %v5497 = vld [vmem:[#allocation11 + $0x218] sm:$0xff]
    %v5498 = vld [vmem:[#allocation11 + $0x220] sm:$0xff]
    %v5499 = vld [vmem:[#allocation11 + $0x228] sm:$0xff]
    %v5500 = vld [vmem:[#allocation11 + $0x230] sm:$0xff]
    %v5501 = vld [vmem:[#allocation11 + $0x238] sm:$0xff]
    %v5502 = vld [vmem:[#allocation11 + $0x240] sm:$0xff]
    %v5503 = vld [vmem:[#allocation11 + $0x248] sm:$0xff]
    %v5504 = vld [vmem:[#allocation11 + $0x250] sm:$0xff]
    %v5505 = vld [vmem:[#allocation11 + $0x258] sm:$0xff]
    %v5506 = vld [vmem:[#allocation11 + $0x260] sm:$0xff]
    %v5507 = vld [vmem:[#allocation11 + $0x268] sm:$0xff]
    %v5508 = vld [vmem:[#allocation11 + $0x270] sm:$0xff]
    %v5509 = vld [vmem:[#allocation11 + $0x278] sm:$0xff]
    %v5510 = vld [vmem:[#allocation11 + $0x280] sm:$0xff]
    %v5511 = vld [vmem:[#allocation11 + $0x288] sm:$0xff]
    %v5512 = vld [vmem:[#allocation11 + $0x290] sm:$0xff]
    %v5513 = vld [vmem:[#allocation11 + $0x298] sm:$0xff]
    %v5514 = vld [vmem:[#allocation11 + $0x2a0] sm:$0xff]
    %v5515 = vld [vmem:[#allocation11 + $0x2a8] sm:$0xff]
    %v5516 = vld [vmem:[#allocation11 + $0x2b0] sm:$0xff]
    %v5517 = vld [vmem:[#allocation11 + $0x2b8] sm:$0xff]
    %v5518 = vld [vmem:[#allocation11 + $0x2c0] sm:$0xff]
    %v5519 = vld [vmem:[#allocation11 + $0x2c8] sm:$0xff]
    %v5520 = vld [vmem:[#allocation11 + $0x2d0] sm:$0xff]
    %v5521 = vld [vmem:[#allocation11 + $0x2d8] sm:$0xff]
    %v5522 = vld [vmem:[#allocation11 + $0x2e0] sm:$0xff]
    %v5523 = vld [vmem:[#allocation11 + $0x2e8] sm:$0xff]
    %v5524 = vld [vmem:[#allocation11 + $0x2f0] sm:$0xff]
    %v5525 = vld [vmem:[#allocation11 + $0x2f8] sm:$0xff]
    %v5526 = vld [vmem:[#allocation11 + $0x300] sm:$0xff]
    %v5527 = vld [vmem:[#allocation11 + $0x308] sm:$0xff]
    %v5528 = vld [vmem:[#allocation11 + $0x310] sm:$0xff]
    %v5529 = vld [vmem:[#allocation11 + $0x318] sm:$0xff]
    %v5530 = vld [vmem:[#allocation11 + $0x320] sm:$0xff]
    %v5531 = vld [vmem:[#allocation11 + $0x328] sm:$0xff]
    %v5532 = vld [vmem:[#allocation11 + $0x330] sm:$0xff]
    %v5533 = vld [vmem:[#allocation11 + $0x338] sm:$0xff]
    %v5534 = vld [vmem:[#allocation11 + $0x340] sm:$0xff]
    %v5535 = vld [vmem:[#allocation11 + $0x348] sm:$0xff]
    %v5536 = vld [vmem:[#allocation11 + $0x350] sm:$0xff]
    %v5537 = vld [vmem:[#allocation11 + $0x358] sm:$0xff]
    %v5538 = vld [vmem:[#allocation11 + $0x360] sm:$0xff]
    %v5539 = vld [vmem:[#allocation11 + $0x368] sm:$0xff]
    %v5540 = vld [vmem:[#allocation11 + $0x370] sm:$0xff]
    %v5541 = vld [vmem:[#allocation11 + $0x378] sm:$0xff]
    %v5542 = vld [vmem:[#allocation11 + $0x380] sm:$0xff]
    %v5543 = vld [vmem:[#allocation11 + $0x388] sm:$0xff]
    %v5544 = vld [vmem:[#allocation11 + $0x390] sm:$0xff]
    %v5545 = vld [vmem:[#allocation11 + $0x398] sm:$0xff]
    %v5546 = vld [vmem:[#allocation11 + $0x3a0] sm:$0xff]
    %v5547 = vld [vmem:[#allocation11 + $0x3a8] sm:$0xff]
    %v5548 = vld [vmem:[#allocation11 + $0x3b0] sm:$0xff]
    %v5549 = vld [vmem:[#allocation11 + $0x3b8] sm:$0xff]
    %v5550 = vld [vmem:[#allocation11 + $0x3c0] sm:$0xff]
    %v5551 = vld [vmem:[#allocation11 + $0x3c8] sm:$0xff]
    %v5552 = vld [vmem:[#allocation11 + $0x3d0] sm:$0xff]
    %v5553 = vld [vmem:[#allocation11 + $0x3d8] sm:$0xff]
    %v5554 = vld [vmem:[#allocation11 + $0x3e0] sm:$0xff]
    %v5555 = vld [vmem:[#allocation11 + $0x3e8] sm:$0xff]
    %v5556 = vld [vmem:[#allocation11 + $0x3f0] sm:$0xff]
    %v5557 = vld [vmem:[#allocation11 + $0x3f8] sm:$0xff]
    %v5558 = vld [vmem:[#allocation11 + $0x400] sm:$0xff]
    %v5559 = vld [vmem:[#allocation11 + $0x408] sm:$0xff]
    %v5560 = vld [vmem:[#allocation11 + $0x410] sm:$0xff]
    %v5561 = vld [vmem:[#allocation11 + $0x418] sm:$0xff]
    %v5562 = vld [vmem:[#allocation11 + $0x420] sm:$0xff]
    %v5563 = vld [vmem:[#allocation11 + $0x428] sm:$0xff]
    %v5564 = vld [vmem:[#allocation11 + $0x430] sm:$0xff]
    %v5565 = vld [vmem:[#allocation11 + $0x438] sm:$0xff]
    %v5566 = vld [vmem:[#allocation11 + $0x440] sm:$0xff]
    %v5567 = vld [vmem:[#allocation11 + $0x448] sm:$0xff]
    %v5568 = vld [vmem:[#allocation11 + $0x450] sm:$0xff]
    %v5569 = vld [vmem:[#allocation11 + $0x458] sm:$0xff]
    %v5570 = vld [vmem:[#allocation11 + $0x460] sm:$0xff]
    %v5571 = vld [vmem:[#allocation11 + $0x468] sm:$0xff]
    %v5572 = vld [vmem:[#allocation11 + $0x470] sm:$0xff]
    %v5573 = vld [vmem:[#allocation11 + $0x478] sm:$0xff]
    %v5574 = vld [vmem:[#allocation11 + $0x480] sm:$0xff]
    %v5575 = vld [vmem:[#allocation11 + $0x488] sm:$0xff]
    %v5576 = vld [vmem:[#allocation11 + $0x490] sm:$0xff]
    %v5577 = vld [vmem:[#allocation11 + $0x498] sm:$0xff]
    %v5578 = vld [vmem:[#allocation11 + $0x4a0] sm:$0xff]
    %v5579 = vld [vmem:[#allocation11 + $0x4a8] sm:$0xff]
    %v5580 = vld [vmem:[#allocation11 + $0x4b0] sm:$0xff]
    %v5581 = vld [vmem:[#allocation11 + $0x4b8] sm:$0xff]
    %v5582 = vld [vmem:[#allocation11 + $0x4c0] sm:$0xff]
    %v5583 = vld [vmem:[#allocation11 + $0x4c8] sm:$0xff]
    %v5584 = vld [vmem:[#allocation11 + $0x4d0] sm:$0xff]
    %v5585 = vld [vmem:[#allocation11 + $0x4d8] sm:$0xff]
    %v5586 = vld [vmem:[#allocation11 + $0x4e0] sm:$0xff]
    %v5587 = vld [vmem:[#allocation11 + $0x4e8] sm:$0xff]
    %v5588 = vld [vmem:[#allocation11 + $0x4f0] sm:$0xff]
    %v5589 = vld [vmem:[#allocation11 + $0x4f8] sm:$0xff]
    %v5590 = vld [vmem:[#allocation11 + $0x500] sm:$0xff]
    %v5591 = vld [vmem:[#allocation11 + $0x508] sm:$0xff]
    %v5592 = vld [vmem:[#allocation11 + $0x510] sm:$0xff]
    %v5593 = vld [vmem:[#allocation11 + $0x518] sm:$0xff]
    %v5594 = vld [vmem:[#allocation11 + $0x520] sm:$0xff]
    %v5595 = vld [vmem:[#allocation11 + $0x528] sm:$0xff]
    %v5596 = vld [vmem:[#allocation11 + $0x530] sm:$0xff]
    %v5597 = vld [vmem:[#allocation11 + $0x538] sm:$0xff]
    %v5598 = vld [vmem:[#allocation11 + $0x540] sm:$0xff]
    %v5599 = vld [vmem:[#allocation11 + $0x548] sm:$0xff]
    %v5600 = vld [vmem:[#allocation11 + $0x550] sm:$0xff]
    %v5601 = vld [vmem:[#allocation11 + $0x558] sm:$0xff]
    %v5602 = vld [vmem:[#allocation11 + $0x560] sm:$0xff]
    %v5603 = vld [vmem:[#allocation11 + $0x568] sm:$0xff]
    %v5604 = vld [vmem:[#allocation11 + $0x570] sm:$0xff]
    %v5605 = vld [vmem:[#allocation11 + $0x578] sm:$0xff]
    %v5606 = vld [vmem:[#allocation11 + $0x580] sm:$0xff]
    %v5607 = vld [vmem:[#allocation11 + $0x588] sm:$0xff]
    %v5608 = vld [vmem:[#allocation11 + $0x590] sm:$0xff]
    %v5609 = vld [vmem:[#allocation11 + $0x598] sm:$0xff]
    %v5610 = vld [vmem:[#allocation11 + $0x5a0] sm:$0xff]
    %v5611 = vld [vmem:[#allocation11 + $0x5a8] sm:$0xff]
    %v5612 = vld [vmem:[#allocation11 + $0x5b0] sm:$0xff]
    %v5613 = vld [vmem:[#allocation11 + $0x5b8] sm:$0xff]
    %v5614 = vld [vmem:[#allocation11 + $0x5c0] sm:$0xff]
    %v5615 = vld [vmem:[#allocation11 + $0x5c8] sm:$0xff]
    %v5616 = vld [vmem:[#allocation11 + $0x5d0] sm:$0xff]
    %v5617 = vld [vmem:[#allocation11 + $0x5d8] sm:$0xff]
    %v5618 = vld [vmem:[#allocation11 + $0x5e0] sm:$0xff]
    %v5619 = vld [vmem:[#allocation11 + $0x5e8] sm:$0xff]
    %v5620 = vld [vmem:[#allocation11 + $0x5f0] sm:$0xff]
    %v5621 = vld [vmem:[#allocation11 + $0x5f8] sm:$0xff]
    %v5622 = vld [vmem:[#allocation11 + $0x600] sm:$0xff]
    %v5623 = vld [vmem:[#allocation11 + $0x608] sm:$0xff]
    %v5624 = vld [vmem:[#allocation11 + $0x610] sm:$0xff]
    %v5625 = vld [vmem:[#allocation11 + $0x618] sm:$0xff]
    %v5626 = vld [vmem:[#allocation11 + $0x620] sm:$0xff]
    %v5627 = vld [vmem:[#allocation11 + $0x628] sm:$0xff]
    %v5628 = vld [vmem:[#allocation11 + $0x630] sm:$0xff]
    %v5629 = vld [vmem:[#allocation11 + $0x638] sm:$0xff]
    %v5630 = vld [vmem:[#allocation11 + $0x640] sm:$0xff]
    %v5631 = vld [vmem:[#allocation11 + $0x648] sm:$0xff]
    %v5632 = vld [vmem:[#allocation11 + $0x650] sm:$0xff]
    %v5633 = vld [vmem:[#allocation11 + $0x658] sm:$0xff]
    %v5634 = vld [vmem:[#allocation11 + $0x660] sm:$0xff]
    %v5635 = vld [vmem:[#allocation11 + $0x668] sm:$0xff]
    %v5636 = vld [vmem:[#allocation11 + $0x670] sm:$0xff]
    %v5637 = vld [vmem:[#allocation11 + $0x678] sm:$0xff]
    %v5638 = vld [vmem:[#allocation11 + $0x680] sm:$0xff]
    %v5639 = vld [vmem:[#allocation11 + $0x688] sm:$0xff]
    %v5640 = vld [vmem:[#allocation11 + $0x690] sm:$0xff]
    %v5641 = vld [vmem:[#allocation11 + $0x698] sm:$0xff]
    %v5642 = vld [vmem:[#allocation11 + $0x6a0] sm:$0xff]
    %v5643 = vld [vmem:[#allocation11 + $0x6a8] sm:$0xff]
    %v5644 = vld [vmem:[#allocation11 + $0x6b0] sm:$0xff]
    %v5645 = vld [vmem:[#allocation11 + $0x6b8] sm:$0xff]
    %v5646 = vld [vmem:[#allocation11 + $0x6c0] sm:$0xff]
    %v5647 = vld [vmem:[#allocation11 + $0x6c8] sm:$0xff]
    %v5648 = vld [vmem:[#allocation11 + $0x6d0] sm:$0xff]
    %v5649 = vld [vmem:[#allocation11 + $0x6d8] sm:$0xff]
    %v5650 = vld [vmem:[#allocation11 + $0x6e0] sm:$0xff]
    %v5651 = vld [vmem:[#allocation11 + $0x6e8] sm:$0xff]
    %v5652 = vld [vmem:[#allocation11 + $0x6f0] sm:$0xff]
    %v5653 = vld [vmem:[#allocation11 + $0x6f8] sm:$0xff]
    %v5654 = vld [vmem:[#allocation11 + $0x700] sm:$0xff]
    %v5655 = vld [vmem:[#allocation11 + $0x708] sm:$0xff]
    %v5656 = vld [vmem:[#allocation11 + $0x710] sm:$0xff]
    %v5657 = vld [vmem:[#allocation11 + $0x718] sm:$0xff]
    %v5658 = vld [vmem:[#allocation11 + $0x720] sm:$0xff]
    %v5659 = vld [vmem:[#allocation11 + $0x728] sm:$0xff]
    %v5660 = vld [vmem:[#allocation11 + $0x730] sm:$0xff]
    %v5661 = vld [vmem:[#allocation11 + $0x738] sm:$0xff]
    %v5662 = vld [vmem:[#allocation11 + $0x740] sm:$0xff]
    %v5663 = vld [vmem:[#allocation11 + $0x748] sm:$0xff]
    %v5664 = vld [vmem:[#allocation11 + $0x750] sm:$0xff]
    %v5665 = vld [vmem:[#allocation11 + $0x758] sm:$0xff]
    %v5666 = vld [vmem:[#allocation11 + $0x760] sm:$0xff]
    %v5667 = vld [vmem:[#allocation11 + $0x768] sm:$0xff]
    %v5668 = vld [vmem:[#allocation11 + $0x770] sm:$0xff]
    %v5669 = vld [vmem:[#allocation11 + $0x778] sm:$0xff]
    %v5670 = vld [vmem:[#allocation11 + $0x780] sm:$0xff]
    %v5671 = vld [vmem:[#allocation11 + $0x788] sm:$0xff]
    %v5672 = vld [vmem:[#allocation11 + $0x790] sm:$0xff]
    %v5673 = vld [vmem:[#allocation11 + $0x798] sm:$0xff]
    %v5674 = vld [vmem:[#allocation11 + $0x7a0] sm:$0xff]
    %v5675 = vld [vmem:[#allocation11 + $0x7a8] sm:$0xff]
    %v5676 = vld [vmem:[#allocation11 + $0x7b0] sm:$0xff]
    %v5677 = vld [vmem:[#allocation11 + $0x7b8] sm:$0xff]
    %v5678 = vld [vmem:[#allocation11 + $0x7c0] sm:$0xff]
    %v5679 = vld [vmem:[#allocation11 + $0x7c8] sm:$0xff]
    %v5680 = vld [vmem:[#allocation11 + $0x7d0] sm:$0xff]
    %v5681 = vld [vmem:[#allocation11 + $0x7d8] sm:$0xff]
    %v5682 = vld [vmem:[#allocation11 + $0x7e0] sm:$0xff]
    %v5683 = vld [vmem:[#allocation11 + $0x7e8] sm:$0xff]
    %v5684 = vld [vmem:[#allocation11 + $0x7f0] sm:$0xff]
    %v5685 = vld [vmem:[#allocation11 + $0x7f8] sm:$0xff]
    %v5686 = vld [vmem:[#allocation13] sm:$0xf]
    %v5688 = vlaneseq
    %v5689 = vshrl.u32 %v5688, 7
    %v5690 = vsub.s32 0, %v5689
    %v5691 = vrot.slane %v5686, %v5690
    %v5692 = vlaneseq
    %v5693 = vshrl.u32 %v5692, 7
    %v5694 = vsub.s32 1, %v5693
    %v5695 = vrot.slane %v5686, %v5694
    %v5696 = vlaneseq
    %v5697 = vshrl.u32 %v5696, 7
    %v5698 = vsub.s32 2, %v5697
    %v5699 = vrot.slane %v5686, %v5698
    %v5700 = vlaneseq
    %v5701 = vshrl.u32 %v5700, 7
    %v5702 = vsub.s32 3, %v5701
    %v5703 = vrot.slane %v5686, %v5702
    %v5964 = vunpack.c.l.b16 %v5430
    %v5965 = vunpack.c.h.b16 %v5430
    %v5966 = vunpack.c.l.b16 %v5431
    %v5967 = vunpack.c.h.b16 %v5431
    %v5968 = vunpack.c.l.b16 %v5432
    %v5969 = vunpack.c.h.b16 %v5432
    %v5970 = vunpack.c.l.b16 %v5433
    %v5971 = vunpack.c.h.b16 %v5433
    %v5972 = vunpack.c.l.b16 %v5434
    %v5973 = vunpack.c.h.b16 %v5434
    %v5974 = vunpack.c.l.b16 %v5435
    %v5975 = vunpack.c.h.b16 %v5435
    %v5976 = vunpack.c.l.b16 %v5436
    %v5977 = vunpack.c.h.b16 %v5436
    %v5978 = vunpack.c.l.b16 %v5437
    %v5979 = vunpack.c.h.b16 %v5437
    %v5980 = vunpack.c.l.b16 %v5438
    %v5981 = vunpack.c.h.b16 %v5438
    %v5982 = vunpack.c.l.b16 %v5439
    %v5983 = vunpack.c.h.b16 %v5439
    %v5984 = vunpack.c.l.b16 %v5440
    %v5985 = vunpack.c.h.b16 %v5440
    %v5986 = vunpack.c.l.b16 %v5441
    %v5987 = vunpack.c.h.b16 %v5441
    %v5988 = vunpack.c.l.b16 %v5442
    %v5989 = vunpack.c.h.b16 %v5442
    %v5990 = vunpack.c.l.b16 %v5443
    %v5991 = vunpack.c.h.b16 %v5443
    %v5992 = vunpack.c.l.b16 %v5444
    %v5993 = vunpack.c.h.b16 %v5444
    %v5994 = vunpack.c.l.b16 %v5445
    %v5995 = vunpack.c.h.b16 %v5445
    %v5996 = vunpack.c.l.b16 %v5446
    %v5997 = vunpack.c.h.b16 %v5446
    %v5998 = vunpack.c.l.b16 %v5447
    %v5999 = vunpack.c.h.b16 %v5447
    %v6000 = vunpack.c.l.b16 %v5448
    %v6001 = vunpack.c.h.b16 %v5448
    %v6002 = vunpack.c.l.b16 %v5449
    %v6003 = vunpack.c.h.b16 %v5449
    %v6004 = vunpack.c.l.b16 %v5450
    %v6005 = vunpack.c.h.b16 %v5450
    %v6006 = vunpack.c.l.b16 %v5451
    %v6007 = vunpack.c.h.b16 %v5451
    %v6008 = vunpack.c.l.b16 %v5452
    %v6009 = vunpack.c.h.b16 %v5452
    %v6010 = vunpack.c.l.b16 %v5453
    %v6011 = vunpack.c.h.b16 %v5453
    %v6012 = vunpack.c.l.b16 %v5454
    %v6013 = vunpack.c.h.b16 %v5454
    %v6014 = vunpack.c.l.b16 %v5455
    %v6015 = vunpack.c.h.b16 %v5455
    %v6016 = vunpack.c.l.b16 %v5456
    %v6017 = vunpack.c.h.b16 %v5456
    %v6018 = vunpack.c.l.b16 %v5457
    %v6019 = vunpack.c.h.b16 %v5457
    %v6020 = vunpack.c.l.b16 %v5458
    %v6021 = vunpack.c.h.b16 %v5458
    %v6022 = vunpack.c.l.b16 %v5459
    %v6023 = vunpack.c.h.b16 %v5459
    %v6024 = vunpack.c.l.b16 %v5460
    %v6025 = vunpack.c.h.b16 %v5460
    %v6026 = vunpack.c.l.b16 %v5461
    %v6027 = vunpack.c.h.b16 %v5461
    %v6028 = vunpack.c.l.b16 %v5462
    %v6029 = vunpack.c.h.b16 %v5462
    %v6030 = vunpack.c.l.b16 %v5463
    %v6031 = vunpack.c.h.b16 %v5463
    %v6032 = vunpack.c.l.b16 %v5464
    %v6033 = vunpack.c.h.b16 %v5464
    %v6034 = vunpack.c.l.b16 %v5465
    %v6035 = vunpack.c.h.b16 %v5465
    %v6036 = vunpack.c.l.b16 %v5466
    %v6037 = vunpack.c.h.b16 %v5466
    %v6038 = vunpack.c.l.b16 %v5467
    %v6039 = vunpack.c.h.b16 %v5467
    %v6040 = vunpack.c.l.b16 %v5468
    %v6041 = vunpack.c.h.b16 %v5468
    %v6042 = vunpack.c.l.b16 %v5469
    %v6043 = vunpack.c.h.b16 %v5469
    %v6044 = vunpack.c.l.b16 %v5470
    %v6045 = vunpack.c.h.b16 %v5470
    %v6046 = vunpack.c.l.b16 %v5471
    %v6047 = vunpack.c.h.b16 %v5471
    %v6048 = vunpack.c.l.b16 %v5472
    %v6049 = vunpack.c.h.b16 %v5472
    %v6050 = vunpack.c.l.b16 %v5473
    %v6051 = vunpack.c.h.b16 %v5473
    %v6052 = vunpack.c.l.b16 %v5474
    %v6053 = vunpack.c.h.b16 %v5474
    %v6054 = vunpack.c.l.b16 %v5475
    %v6055 = vunpack.c.h.b16 %v5475
    %v6056 = vunpack.c.l.b16 %v5476
    %v6057 = vunpack.c.h.b16 %v5476
    %v6058 = vunpack.c.l.b16 %v5477
    %v6059 = vunpack.c.h.b16 %v5477
    %v6060 = vunpack.c.l.b16 %v5478
    %v6061 = vunpack.c.h.b16 %v5478
    %v6062 = vunpack.c.l.b16 %v5479
    %v6063 = vunpack.c.h.b16 %v5479
    %v6064 = vunpack.c.l.b16 %v5480
    %v6065 = vunpack.c.h.b16 %v5480
    %v6066 = vunpack.c.l.b16 %v5481
    %v6067 = vunpack.c.h.b16 %v5481
    %v6068 = vunpack.c.l.b16 %v5482
    %v6069 = vunpack.c.h.b16 %v5482
    %v6070 = vunpack.c.l.b16 %v5483
    %v6071 = vunpack.c.h.b16 %v5483
    %v6072 = vunpack.c.l.b16 %v5484
    %v6073 = vunpack.c.h.b16 %v5484
    %v6074 = vunpack.c.l.b16 %v5485
    %v6075 = vunpack.c.h.b16 %v5485
    %v6076 = vunpack.c.l.b16 %v5486
    %v6077 = vunpack.c.h.b16 %v5486
    %v6078 = vunpack.c.l.b16 %v5487
    %v6079 = vunpack.c.h.b16 %v5487
    %v6080 = vunpack.c.l.b16 %v5488
    %v6081 = vunpack.c.h.b16 %v5488
    %v6082 = vunpack.c.l.b16 %v5489
    %v6083 = vunpack.c.h.b16 %v5489
    %v6084 = vunpack.c.l.b16 %v5490
    %v6085 = vunpack.c.h.b16 %v5490
    %v6086 = vunpack.c.l.b16 %v5491
    %v6087 = vunpack.c.h.b16 %v5491
    %v6088 = vunpack.c.l.b16 %v5492
    %v6089 = vunpack.c.h.b16 %v5492
    %v6090 = vunpack.c.l.b16 %v5493
    %v6091 = vunpack.c.h.b16 %v5493
    %v6092 = vunpack.c.l.b16 %v5494
    %v6093 = vunpack.c.h.b16 %v5494
    %v6094 = vunpack.c.l.b16 %v5495
    %v6095 = vunpack.c.h.b16 %v5495
    %v6096 = vunpack.c.l.b16 %v5496
    %v6097 = vunpack.c.h.b16 %v5496
    %v6098 = vunpack.c.l.b16 %v5497
    %v6099 = vunpack.c.h.b16 %v5497
    %v6100 = vunpack.c.l.b16 %v5498
    %v6101 = vunpack.c.h.b16 %v5498
    %v6102 = vunpack.c.l.b16 %v5499
    %v6103 = vunpack.c.h.b16 %v5499
    %v6104 = vunpack.c.l.b16 %v5500
    %v6105 = vunpack.c.h.b16 %v5500
    %v6106 = vunpack.c.l.b16 %v5501
    %v6107 = vunpack.c.h.b16 %v5501
    %v6108 = vunpack.c.l.b16 %v5502
    %v6109 = vunpack.c.h.b16 %v5502
    %v6110 = vunpack.c.l.b16 %v5503
    %v6111 = vunpack.c.h.b16 %v5503
    %v6112 = vunpack.c.l.b16 %v5504
    %v6113 = vunpack.c.h.b16 %v5504
    %v6114 = vunpack.c.l.b16 %v5505
    %v6115 = vunpack.c.h.b16 %v5505
    %v6116 = vunpack.c.l.b16 %v5506
    %v6117 = vunpack.c.h.b16 %v5506
    %v6118 = vunpack.c.l.b16 %v5507
    %v6119 = vunpack.c.h.b16 %v5507
    %v6120 = vunpack.c.l.b16 %v5508
    %v6121 = vunpack.c.h.b16 %v5508
    %v6122 = vunpack.c.l.b16 %v5509
    %v6123 = vunpack.c.h.b16 %v5509
    %v6124 = vunpack.c.l.b16 %v5510
    %v6125 = vunpack.c.h.b16 %v5510
    %v6126 = vunpack.c.l.b16 %v5511
    %v6127 = vunpack.c.h.b16 %v5511
    %v6128 = vunpack.c.l.b16 %v5512
    %v6129 = vunpack.c.h.b16 %v5512
    %v6130 = vunpack.c.l.b16 %v5513
    %v6131 = vunpack.c.h.b16 %v5513
    %v6132 = vunpack.c.l.b16 %v5514
    %v6133 = vunpack.c.h.b16 %v5514
    %v6134 = vunpack.c.l.b16 %v5515
    %v6135 = vunpack.c.h.b16 %v5515
    %v6136 = vunpack.c.l.b16 %v5516
    %v6137 = vunpack.c.h.b16 %v5516
    %v6138 = vunpack.c.l.b16 %v5517
    %v6139 = vunpack.c.h.b16 %v5517
    %v6140 = vunpack.c.l.b16 %v5518
    %v6141 = vunpack.c.h.b16 %v5518
    %v6142 = vunpack.c.l.b16 %v5519
    %v6143 = vunpack.c.h.b16 %v5519
    %v6144 = vunpack.c.l.b16 %v5520
    %v6145 = vunpack.c.h.b16 %v5520
    %v6146 = vunpack.c.l.b16 %v5521
    %v6147 = vunpack.c.h.b16 %v5521
    %v6148 = vunpack.c.l.b16 %v5522
    %v6149 = vunpack.c.h.b16 %v5522
    %v6150 = vunpack.c.l.b16 %v5523
    %v6151 = vunpack.c.h.b16 %v5523
    %v6152 = vunpack.c.l.b16 %v5524
    %v6153 = vunpack.c.h.b16 %v5524
    %v6154 = vunpack.c.l.b16 %v5525
    %v6155 = vunpack.c.h.b16 %v5525
    %v6156 = vunpack.c.l.b16 %v5526
    %v6157 = vunpack.c.h.b16 %v5526
    %v6158 = vunpack.c.l.b16 %v5527
    %v6159 = vunpack.c.h.b16 %v5527
    %v6160 = vunpack.c.l.b16 %v5528
    %v6161 = vunpack.c.h.b16 %v5528
    %v6162 = vunpack.c.l.b16 %v5529
    %v6163 = vunpack.c.h.b16 %v5529
    %v6164 = vunpack.c.l.b16 %v5530
    %v6165 = vunpack.c.h.b16 %v5530
    %v6166 = vunpack.c.l.b16 %v5531
    %v6167 = vunpack.c.h.b16 %v5531
    %v6168 = vunpack.c.l.b16 %v5532
    %v6169 = vunpack.c.h.b16 %v5532
    %v6170 = vunpack.c.l.b16 %v5533
    %v6171 = vunpack.c.h.b16 %v5533
    %v6172 = vunpack.c.l.b16 %v5534
    %v6173 = vunpack.c.h.b16 %v5534
    %v6174 = vunpack.c.l.b16 %v5535
    %v6175 = vunpack.c.h.b16 %v5535
    %v6176 = vunpack.c.l.b16 %v5536
    %v6177 = vunpack.c.h.b16 %v5536
    %v6178 = vunpack.c.l.b16 %v5537
    %v6179 = vunpack.c.h.b16 %v5537
    %v6180 = vunpack.c.l.b16 %v5538
    %v6181 = vunpack.c.h.b16 %v5538
    %v6182 = vunpack.c.l.b16 %v5539
    %v6183 = vunpack.c.h.b16 %v5539
    %v6184 = vunpack.c.l.b16 %v5540
    %v6185 = vunpack.c.h.b16 %v5540
    %v6186 = vunpack.c.l.b16 %v5541
    %v6187 = vunpack.c.h.b16 %v5541
    %v6188 = vunpack.c.l.b16 %v5542
    %v6189 = vunpack.c.h.b16 %v5542
    %v6190 = vunpack.c.l.b16 %v5543
    %v6191 = vunpack.c.h.b16 %v5543
    %v6192 = vunpack.c.l.b16 %v5544
    %v6193 = vunpack.c.h.b16 %v5544
    %v6194 = vunpack.c.l.b16 %v5545
    %v6195 = vunpack.c.h.b16 %v5545
    %v6196 = vunpack.c.l.b16 %v5546
    %v6197 = vunpack.c.h.b16 %v5546
    %v6198 = vunpack.c.l.b16 %v5547
    %v6199 = vunpack.c.h.b16 %v5547
    %v6200 = vunpack.c.l.b16 %v5548
    %v6201 = vunpack.c.h.b16 %v5548
    %v6202 = vunpack.c.l.b16 %v5549
    %v6203 = vunpack.c.h.b16 %v5549
    %v6204 = vunpack.c.l.b16 %v5550
    %v6205 = vunpack.c.h.b16 %v5550
    %v6206 = vunpack.c.l.b16 %v5551
    %v6207 = vunpack.c.h.b16 %v5551
    %v6208 = vunpack.c.l.b16 %v5552
    %v6209 = vunpack.c.h.b16 %v5552
    %v6210 = vunpack.c.l.b16 %v5553
    %v6211 = vunpack.c.h.b16 %v5553
    %v6212 = vunpack.c.l.b16 %v5554
    %v6213 = vunpack.c.h.b16 %v5554
    %v6214 = vunpack.c.l.b16 %v5555
    %v6215 = vunpack.c.h.b16 %v5555
    %v6216 = vunpack.c.l.b16 %v5556
    %v6217 = vunpack.c.h.b16 %v5556
    %v6218 = vunpack.c.l.b16 %v5557
    %v6219 = vunpack.c.h.b16 %v5557
    %v6220 = vunpack.c.l.b16 %v5558
    %v6221 = vunpack.c.h.b16 %v5558
    %v6222 = vunpack.c.l.b16 %v5559
    %v6223 = vunpack.c.h.b16 %v5559
    %v6224 = vunpack.c.l.b16 %v5560
    %v6225 = vunpack.c.h.b16 %v5560
    %v6226 = vunpack.c.l.b16 %v5561
    %v6227 = vunpack.c.h.b16 %v5561
    %v6228 = vunpack.c.l.b16 %v5562
    %v6229 = vunpack.c.h.b16 %v5562
    %v6230 = vunpack.c.l.b16 %v5563
    %v6231 = vunpack.c.h.b16 %v5563
    %v6232 = vunpack.c.l.b16 %v5564
    %v6233 = vunpack.c.h.b16 %v5564
    %v6234 = vunpack.c.l.b16 %v5565
    %v6235 = vunpack.c.h.b16 %v5565
    %v6236 = vunpack.c.l.b16 %v5566
    %v6237 = vunpack.c.h.b16 %v5566
    %v6238 = vunpack.c.l.b16 %v5567
    %v6239 = vunpack.c.h.b16 %v5567
    %v6240 = vunpack.c.l.b16 %v5568
    %v6241 = vunpack.c.h.b16 %v5568
    %v6242 = vunpack.c.l.b16 %v5569
    %v6243 = vunpack.c.h.b16 %v5569
    %v6244 = vunpack.c.l.b16 %v5570
    %v6245 = vunpack.c.h.b16 %v5570
    %v6246 = vunpack.c.l.b16 %v5571
    %v6247 = vunpack.c.h.b16 %v5571
    %v6248 = vunpack.c.l.b16 %v5572
    %v6249 = vunpack.c.h.b16 %v5572
    %v6250 = vunpack.c.l.b16 %v5573
    %v6251 = vunpack.c.h.b16 %v5573
    %v6252 = vunpack.c.l.b16 %v5574
    %v6253 = vunpack.c.h.b16 %v5574
    %v6254 = vunpack.c.l.b16 %v5575
    %v6255 = vunpack.c.h.b16 %v5575
    %v6256 = vunpack.c.l.b16 %v5576
    %v6257 = vunpack.c.h.b16 %v5576
    %v6258 = vunpack.c.l.b16 %v5577
    %v6259 = vunpack.c.h.b16 %v5577
    %v6260 = vunpack.c.l.b16 %v5578
    %v6261 = vunpack.c.h.b16 %v5578
    %v6262 = vunpack.c.l.b16 %v5579
    %v6263 = vunpack.c.h.b16 %v5579
    %v6264 = vunpack.c.l.b16 %v5580
    %v6265 = vunpack.c.h.b16 %v5580
    %v6266 = vunpack.c.l.b16 %v5581
    %v6267 = vunpack.c.h.b16 %v5581
    %v6268 = vunpack.c.l.b16 %v5582
    %v6269 = vunpack.c.h.b16 %v5582
    %v6270 = vunpack.c.l.b16 %v5583
    %v6271 = vunpack.c.h.b16 %v5583
    %v6272 = vunpack.c.l.b16 %v5584
    %v6273 = vunpack.c.h.b16 %v5584
    %v6274 = vunpack.c.l.b16 %v5585
    %v6275 = vunpack.c.h.b16 %v5585
    %v6276 = vunpack.c.l.b16 %v5586
    %v6277 = vunpack.c.h.b16 %v5586
    %v6278 = vunpack.c.l.b16 %v5587
    %v6279 = vunpack.c.h.b16 %v5587
    %v6280 = vunpack.c.l.b16 %v5588
    %v6281 = vunpack.c.h.b16 %v5588
    %v6282 = vunpack.c.l.b16 %v5589
    %v6283 = vunpack.c.h.b16 %v5589
    %v6284 = vunpack.c.l.b16 %v5590
    %v6285 = vunpack.c.h.b16 %v5590
    %v6286 = vunpack.c.l.b16 %v5591
    %v6287 = vunpack.c.h.b16 %v5591
    %v6288 = vunpack.c.l.b16 %v5592
    %v6289 = vunpack.c.h.b16 %v5592
    %v6290 = vunpack.c.l.b16 %v5593
    %v6291 = vunpack.c.h.b16 %v5593
    %v6292 = vunpack.c.l.b16 %v5594
    %v6293 = vunpack.c.h.b16 %v5594
    %v6294 = vunpack.c.l.b16 %v5595
    %v6295 = vunpack.c.h.b16 %v5595
    %v6296 = vunpack.c.l.b16 %v5596
    %v6297 = vunpack.c.h.b16 %v5596
    %v6298 = vunpack.c.l.b16 %v5597
    %v6299 = vunpack.c.h.b16 %v5597
    %v6300 = vunpack.c.l.b16 %v5598
    %v6301 = vunpack.c.h.b16 %v5598
    %v6302 = vunpack.c.l.b16 %v5599
    %v6303 = vunpack.c.h.b16 %v5599
    %v6304 = vunpack.c.l.b16 %v5600
    %v6305 = vunpack.c.h.b16 %v5600
    %v6306 = vunpack.c.l.b16 %v5601
    %v6307 = vunpack.c.h.b16 %v5601
    %v6308 = vunpack.c.l.b16 %v5602
    %v6309 = vunpack.c.h.b16 %v5602
    %v6310 = vunpack.c.l.b16 %v5603
    %v6311 = vunpack.c.h.b16 %v5603
    %v6312 = vunpack.c.l.b16 %v5604
    %v6313 = vunpack.c.h.b16 %v5604
    %v6314 = vunpack.c.l.b16 %v5605
    %v6315 = vunpack.c.h.b16 %v5605
    %v6316 = vunpack.c.l.b16 %v5606
    %v6317 = vunpack.c.h.b16 %v5606
    %v6318 = vunpack.c.l.b16 %v5607
    %v6319 = vunpack.c.h.b16 %v5607
    %v6320 = vunpack.c.l.b16 %v5608
    %v6321 = vunpack.c.h.b16 %v5608
    %v6322 = vunpack.c.l.b16 %v5609
    %v6323 = vunpack.c.h.b16 %v5609
    %v6324 = vunpack.c.l.b16 %v5610
    %v6325 = vunpack.c.h.b16 %v5610
    %v6326 = vunpack.c.l.b16 %v5611
    %v6327 = vunpack.c.h.b16 %v5611
    %v6328 = vunpack.c.l.b16 %v5612
    %v6329 = vunpack.c.h.b16 %v5612
    %v6330 = vunpack.c.l.b16 %v5613
    %v6331 = vunpack.c.h.b16 %v5613
    %v6332 = vunpack.c.l.b16 %v5614
    %v6333 = vunpack.c.h.b16 %v5614
    %v6334 = vunpack.c.l.b16 %v5615
    %v6335 = vunpack.c.h.b16 %v5615
    %v6336 = vunpack.c.l.b16 %v5616
    %v6337 = vunpack.c.h.b16 %v5616
    %v6338 = vunpack.c.l.b16 %v5617
    %v6339 = vunpack.c.h.b16 %v5617
    %v6340 = vunpack.c.l.b16 %v5618
    %v6341 = vunpack.c.h.b16 %v5618
    %v6342 = vunpack.c.l.b16 %v5619
    %v6343 = vunpack.c.h.b16 %v5619
    %v6344 = vunpack.c.l.b16 %v5620
    %v6345 = vunpack.c.h.b16 %v5620
    %v6346 = vunpack.c.l.b16 %v5621
    %v6347 = vunpack.c.h.b16 %v5621
    %v6348 = vunpack.c.l.b16 %v5622
    %v6349 = vunpack.c.h.b16 %v5622
    %v6350 = vunpack.c.l.b16 %v5623
    %v6351 = vunpack.c.h.b16 %v5623
    %v6352 = vunpack.c.l.b16 %v5624
    %v6353 = vunpack.c.h.b16 %v5624
    %v6354 = vunpack.c.l.b16 %v5625
    %v6355 = vunpack.c.h.b16 %v5625
    %v6356 = vunpack.c.l.b16 %v5626
    %v6357 = vunpack.c.h.b16 %v5626
    %v6358 = vunpack.c.l.b16 %v5627
    %v6359 = vunpack.c.h.b16 %v5627
    %v6360 = vunpack.c.l.b16 %v5628
    %v6361 = vunpack.c.h.b16 %v5628
    %v6362 = vunpack.c.l.b16 %v5629
    %v6363 = vunpack.c.h.b16 %v5629
    %v6364 = vunpack.c.l.b16 %v5630
    %v6365 = vunpack.c.h.b16 %v5630
    %v6366 = vunpack.c.l.b16 %v5631
    %v6367 = vunpack.c.h.b16 %v5631
    %v6368 = vunpack.c.l.b16 %v5632
    %v6369 = vunpack.c.h.b16 %v5632
    %v6370 = vunpack.c.l.b16 %v5633
    %v6371 = vunpack.c.h.b16 %v5633
    %v6372 = vunpack.c.l.b16 %v5634
    %v6373 = vunpack.c.h.b16 %v5634
    %v6374 = vunpack.c.l.b16 %v5635
    %v6375 = vunpack.c.h.b16 %v5635
    %v6376 = vunpack.c.l.b16 %v5636
    %v6377 = vunpack.c.h.b16 %v5636
    %v6378 = vunpack.c.l.b16 %v5637
    %v6379 = vunpack.c.h.b16 %v5637
    %v6380 = vunpack.c.l.b16 %v5638
    %v6381 = vunpack.c.h.b16 %v5638
    %v6382 = vunpack.c.l.b16 %v5639
    %v6383 = vunpack.c.h.b16 %v5639
    %v6384 = vunpack.c.l.b16 %v5640
    %v6385 = vunpack.c.h.b16 %v5640
    %v6386 = vunpack.c.l.b16 %v5641
    %v6387 = vunpack.c.h.b16 %v5641
    %v6388 = vunpack.c.l.b16 %v5642
    %v6389 = vunpack.c.h.b16 %v5642
    %v6390 = vunpack.c.l.b16 %v5643
    %v6391 = vunpack.c.h.b16 %v5643
    %v6392 = vunpack.c.l.b16 %v5644
    %v6393 = vunpack.c.h.b16 %v5644
    %v6394 = vunpack.c.l.b16 %v5645
    %v6395 = vunpack.c.h.b16 %v5645
    %v6396 = vunpack.c.l.b16 %v5646
    %v6397 = vunpack.c.h.b16 %v5646
    %v6398 = vunpack.c.l.b16 %v5647
    %v6399 = vunpack.c.h.b16 %v5647
    %v6400 = vunpack.c.l.b16 %v5648
    %v6401 = vunpack.c.h.b16 %v5648
    %v6402 = vunpack.c.l.b16 %v5649
    %v6403 = vunpack.c.h.b16 %v5649
    %v6404 = vunpack.c.l.b16 %v5650
    %v6405 = vunpack.c.h.b16 %v5650
    %v6406 = vunpack.c.l.b16 %v5651
    %v6407 = vunpack.c.h.b16 %v5651
    %v6408 = vunpack.c.l.b16 %v5652
    %v6409 = vunpack.c.h.b16 %v5652
    %v6410 = vunpack.c.l.b16 %v5653
    %v6411 = vunpack.c.h.b16 %v5653
    %v6412 = vunpack.c.l.b16 %v5654
    %v6413 = vunpack.c.h.b16 %v5654
    %v6414 = vunpack.c.l.b16 %v5655
    %v6415 = vunpack.c.h.b16 %v5655
    %v6416 = vunpack.c.l.b16 %v5656
    %v6417 = vunpack.c.h.b16 %v5656
    %v6418 = vunpack.c.l.b16 %v5657
    %v6419 = vunpack.c.h.b16 %v5657
    %v6420 = vunpack.c.l.b16 %v5658
    %v6421 = vunpack.c.h.b16 %v5658
    %v6422 = vunpack.c.l.b16 %v5659
    %v6423 = vunpack.c.h.b16 %v5659
    %v6424 = vunpack.c.l.b16 %v5660
    %v6425 = vunpack.c.h.b16 %v5660
    %v6426 = vunpack.c.l.b16 %v5661
    %v6427 = vunpack.c.h.b16 %v5661
    %v6428 = vunpack.c.l.b16 %v5662
    %v6429 = vunpack.c.h.b16 %v5662
    %v6430 = vunpack.c.l.b16 %v5663
    %v6431 = vunpack.c.h.b16 %v5663
    %v6432 = vunpack.c.l.b16 %v5664
    %v6433 = vunpack.c.h.b16 %v5664
    %v6434 = vunpack.c.l.b16 %v5665
    %v6435 = vunpack.c.h.b16 %v5665
    %v6436 = vunpack.c.l.b16 %v5666
    %v6437 = vunpack.c.h.b16 %v5666
    %v6438 = vunpack.c.l.b16 %v5667
    %v6439 = vunpack.c.h.b16 %v5667
    %v6440 = vunpack.c.l.b16 %v5668
    %v6441 = vunpack.c.h.b16 %v5668
    %v6442 = vunpack.c.l.b16 %v5669
    %v6443 = vunpack.c.h.b16 %v5669
    %v6444 = vunpack.c.l.b16 %v5670
    %v6445 = vunpack.c.h.b16 %v5670
    %v6446 = vunpack.c.l.b16 %v5671
    %v6447 = vunpack.c.h.b16 %v5671
    %v6448 = vunpack.c.l.b16 %v5672
    %v6449 = vunpack.c.h.b16 %v5672
    %v6450 = vunpack.c.l.b16 %v5673
    %v6451 = vunpack.c.h.b16 %v5673
    %v6452 = vunpack.c.l.b16 %v5674
    %v6453 = vunpack.c.h.b16 %v5674
    %v6454 = vunpack.c.l.b16 %v5675
    %v6455 = vunpack.c.h.b16 %v5675
    %v6456 = vunpack.c.l.b16 %v5676
    %v6457 = vunpack.c.h.b16 %v5676
    %v6458 = vunpack.c.l.b16 %v5677
    %v6459 = vunpack.c.h.b16 %v5677
    %v6460 = vunpack.c.l.b16 %v5678
    %v6461 = vunpack.c.h.b16 %v5678
    %v6462 = vunpack.c.l.b16 %v5679
    %v6463 = vunpack.c.h.b16 %v5679
    %v6464 = vunpack.c.l.b16 %v5680
    %v6465 = vunpack.c.h.b16 %v5680
    %v6466 = vunpack.c.l.b16 %v5681
    %v6467 = vunpack.c.h.b16 %v5681
    %v6468 = vunpack.c.l.b16 %v5682
    %v6469 = vunpack.c.h.b16 %v5682
    %v6470 = vunpack.c.l.b16 %v5683
    %v6471 = vunpack.c.h.b16 %v5683
    %v6472 = vunpack.c.l.b16 %v5684
    %v6473 = vunpack.c.h.b16 %v5684
    %v6474 = vunpack.c.l.b16 %v5685
    %v6475 = vunpack.c.h.b16 %v5685
    %v6476 = vpack.c.b16 %v5968, %v5964
    %v6477 = vpack.c.b16 %v5969, %v5965
    %v6478 = vpack.c.b16 %v5970, %v5966
    %v6479 = vpack.c.b16 %v5971, %v5967
    %v6480 = vpack.c.b16 %v5976, %v5972
    %v6481 = vpack.c.b16 %v5977, %v5973
    %v6482 = vpack.c.b16 %v5978, %v5974
    %v6483 = vpack.c.b16 %v5979, %v5975
    %v6484 = vpack.c.b16 %v5984, %v5980
    %v6485 = vpack.c.b16 %v5985, %v5981
    %v6486 = vpack.c.b16 %v5986, %v5982
    %v6487 = vpack.c.b16 %v5987, %v5983
    %v6488 = vpack.c.b16 %v5992, %v5988
    %v6489 = vpack.c.b16 %v5993, %v5989
    %v6490 = vpack.c.b16 %v5994, %v5990
    %v6491 = vpack.c.b16 %v5995, %v5991
    %v6492 = vpack.c.b16 %v6000, %v5996
    %v6493 = vpack.c.b16 %v6001, %v5997
    %v6494 = vpack.c.b16 %v6002, %v5998
    %v6495 = vpack.c.b16 %v6003, %v5999
    %v6496 = vpack.c.b16 %v6008, %v6004
    %v6497 = vpack.c.b16 %v6009, %v6005
    %v6498 = vpack.c.b16 %v6010, %v6006
    %v6499 = vpack.c.b16 %v6011, %v6007
    %v6500 = vpack.c.b16 %v6016, %v6012
    %v6501 = vpack.c.b16 %v6017, %v6013
    %v6502 = vpack.c.b16 %v6018, %v6014
    %v6503 = vpack.c.b16 %v6019, %v6015
    %v6504 = vpack.c.b16 %v6024, %v6020
    %v6505 = vpack.c.b16 %v6025, %v6021
    %v6506 = vpack.c.b16 %v6026, %v6022
    %v6507 = vpack.c.b16 %v6027, %v6023
    %v6508 = vpack.c.b16 %v6032, %v6028
    %v6509 = vpack.c.b16 %v6033, %v6029
    %v6510 = vpack.c.b16 %v6034, %v6030
    %v6511 = vpack.c.b16 %v6035, %v6031
    %v6512 = vpack.c.b16 %v6040, %v6036
    %v6513 = vpack.c.b16 %v6041, %v6037
    %v6514 = vpack.c.b16 %v6042, %v6038
    %v6515 = vpack.c.b16 %v6043, %v6039
    %v6516 = vpack.c.b16 %v6048, %v6044
    %v6517 = vpack.c.b16 %v6049, %v6045
    %v6518 = vpack.c.b16 %v6050, %v6046
    %v6519 = vpack.c.b16 %v6051, %v6047
    %v6520 = vpack.c.b16 %v6056, %v6052
    %v6521 = vpack.c.b16 %v6057, %v6053
    %v6522 = vpack.c.b16 %v6058, %v6054
    %v6523 = vpack.c.b16 %v6059, %v6055
    %v6524 = vpack.c.b16 %v6064, %v6060
    %v6525 = vpack.c.b16 %v6065, %v6061
    %v6526 = vpack.c.b16 %v6066, %v6062
    %v6527 = vpack.c.b16 %v6067, %v6063
    %v6528 = vpack.c.b16 %v6072, %v6068
    %v6529 = vpack.c.b16 %v6073, %v6069
    %v6530 = vpack.c.b16 %v6074, %v6070
    %v6531 = vpack.c.b16 %v6075, %v6071
    %v6532 = vpack.c.b16 %v6080, %v6076
    %v6533 = vpack.c.b16 %v6081, %v6077
    %v6534 = vpack.c.b16 %v6082, %v6078
    %v6535 = vpack.c.b16 %v6083, %v6079
    %v6536 = vpack.c.b16 %v6088, %v6084
    %v6537 = vpack.c.b16 %v6089, %v6085
    %v6538 = vpack.c.b16 %v6090, %v6086
    %v6539 = vpack.c.b16 %v6091, %v6087
    %v6540 = vpack.c.b16 %v6096, %v6092
    %v6541 = vpack.c.b16 %v6097, %v6093
    %v6542 = vpack.c.b16 %v6098, %v6094
    %v6543 = vpack.c.b16 %v6099, %v6095
    %v6544 = vpack.c.b16 %v6104, %v6100
    %v6545 = vpack.c.b16 %v6105, %v6101
    %v6546 = vpack.c.b16 %v6106, %v6102
    %v6547 = vpack.c.b16 %v6107, %v6103
    %v6548 = vpack.c.b16 %v6112, %v6108
    %v6549 = vpack.c.b16 %v6113, %v6109
    %v6550 = vpack.c.b16 %v6114, %v6110
    %v6551 = vpack.c.b16 %v6115, %v6111
    %v6552 = vpack.c.b16 %v6120, %v6116
    %v6553 = vpack.c.b16 %v6121, %v6117
    %v6554 = vpack.c.b16 %v6122, %v6118
    %v6555 = vpack.c.b16 %v6123, %v6119
    %v6556 = vpack.c.b16 %v6128, %v6124
    %v6557 = vpack.c.b16 %v6129, %v6125
    %v6558 = vpack.c.b16 %v6130, %v6126
    %v6559 = vpack.c.b16 %v6131, %v6127
    %v6560 = vpack.c.b16 %v6136, %v6132
    %v6561 = vpack.c.b16 %v6137, %v6133
    %v6562 = vpack.c.b16 %v6138, %v6134
    %v6563 = vpack.c.b16 %v6139, %v6135
    %v6564 = vpack.c.b16 %v6144, %v6140
    %v6565 = vpack.c.b16 %v6145, %v6141
    %v6566 = vpack.c.b16 %v6146, %v6142
    %v6567 = vpack.c.b16 %v6147, %v6143
    %v6568 = vpack.c.b16 %v6152, %v6148
    %v6569 = vpack.c.b16 %v6153, %v6149
    %v6570 = vpack.c.b16 %v6154, %v6150
    %v6571 = vpack.c.b16 %v6155, %v6151
    %v6572 = vpack.c.b16 %v6160, %v6156
    %v6573 = vpack.c.b16 %v6161, %v6157
    %v6574 = vpack.c.b16 %v6162, %v6158
    %v6575 = vpack.c.b16 %v6163, %v6159
    %v6576 = vpack.c.b16 %v6168, %v6164
    %v6577 = vpack.c.b16 %v6169, %v6165
    %v6578 = vpack.c.b16 %v6170, %v6166
    %v6579 = vpack.c.b16 %v6171, %v6167
    %v6580 = vpack.c.b16 %v6176, %v6172
    %v6581 = vpack.c.b16 %v6177, %v6173
    %v6582 = vpack.c.b16 %v6178, %v6174
    %v6583 = vpack.c.b16 %v6179, %v6175
    %v6584 = vpack.c.b16 %v6184, %v6180
    %v6585 = vpack.c.b16 %v6185, %v6181
    %v6586 = vpack.c.b16 %v6186, %v6182
    %v6587 = vpack.c.b16 %v6187, %v6183
    %v6588 = vpack.c.b16 %v6192, %v6188
    %v6589 = vpack.c.b16 %v6193, %v6189
    %v6590 = vpack.c.b16 %v6194, %v6190
    %v6591 = vpack.c.b16 %v6195, %v6191
    %v6592 = vpack.c.b16 %v6200, %v6196
    %v6593 = vpack.c.b16 %v6201, %v6197
    %v6594 = vpack.c.b16 %v6202, %v6198
    %v6595 = vpack.c.b16 %v6203, %v6199
    %v6596 = vpack.c.b16 %v6208, %v6204
    %v6597 = vpack.c.b16 %v6209, %v6205
    %v6598 = vpack.c.b16 %v6210, %v6206
    %v6599 = vpack.c.b16 %v6211, %v6207
    %v6600 = vpack.c.b16 %v6216, %v6212
    %v6601 = vpack.c.b16 %v6217, %v6213
    %v6602 = vpack.c.b16 %v6218, %v6214
    %v6603 = vpack.c.b16 %v6219, %v6215
    %v6604 = vpack.c.b16 %v6224, %v6220
    %v6605 = vpack.c.b16 %v6225, %v6221
    %v6606 = vpack.c.b16 %v6226, %v6222
    %v6607 = vpack.c.b16 %v6227, %v6223
    %v6608 = vpack.c.b16 %v6232, %v6228
    %v6609 = vpack.c.b16 %v6233, %v6229
    %v6610 = vpack.c.b16 %v6234, %v6230
    %v6611 = vpack.c.b16 %v6235, %v6231
    %v6612 = vpack.c.b16 %v6240, %v6236
    %v6613 = vpack.c.b16 %v6241, %v6237
    %v6614 = vpack.c.b16 %v6242, %v6238
    %v6615 = vpack.c.b16 %v6243, %v6239
    %v6616 = vpack.c.b16 %v6248, %v6244
    %v6617 = vpack.c.b16 %v6249, %v6245
    %v6618 = vpack.c.b16 %v6250, %v6246
    %v6619 = vpack.c.b16 %v6251, %v6247
    %v6620 = vpack.c.b16 %v6256, %v6252
    %v6621 = vpack.c.b16 %v6257, %v6253
    %v6622 = vpack.c.b16 %v6258, %v6254
    %v6623 = vpack.c.b16 %v6259, %v6255
    %v6624 = vpack.c.b16 %v6264, %v6260
    %v6625 = vpack.c.b16 %v6265, %v6261
    %v6626 = vpack.c.b16 %v6266, %v6262
    %v6627 = vpack.c.b16 %v6267, %v6263
    %v6628 = vpack.c.b16 %v6272, %v6268
    %v6629 = vpack.c.b16 %v6273, %v6269
    %v6630 = vpack.c.b16 %v6274, %v6270
    %v6631 = vpack.c.b16 %v6275, %v6271
    %v6632 = vpack.c.b16 %v6280, %v6276
    %v6633 = vpack.c.b16 %v6281, %v6277
    %v6634 = vpack.c.b16 %v6282, %v6278
    %v6635 = vpack.c.b16 %v6283, %v6279
    %v6636 = vpack.c.b16 %v6288, %v6284
    %v6637 = vpack.c.b16 %v6289, %v6285
    %v6638 = vpack.c.b16 %v6290, %v6286
    %v6639 = vpack.c.b16 %v6291, %v6287
    %v6640 = vpack.c.b16 %v6296, %v6292
    %v6641 = vpack.c.b16 %v6297, %v6293
    %v6642 = vpack.c.b16 %v6298, %v6294
    %v6643 = vpack.c.b16 %v6299, %v6295
    %v6644 = vpack.c.b16 %v6304, %v6300
    %v6645 = vpack.c.b16 %v6305, %v6301
    %v6646 = vpack.c.b16 %v6306, %v6302
    %v6647 = vpack.c.b16 %v6307, %v6303
    %v6648 = vpack.c.b16 %v6312, %v6308
    %v6649 = vpack.c.b16 %v6313, %v6309
    %v6650 = vpack.c.b16 %v6314, %v6310
    %v6651 = vpack.c.b16 %v6315, %v6311
    %v6652 = vpack.c.b16 %v6320, %v6316
    %v6653 = vpack.c.b16 %v6321, %v6317
    %v6654 = vpack.c.b16 %v6322, %v6318
    %v6655 = vpack.c.b16 %v6323, %v6319
    %v6656 = vpack.c.b16 %v6328, %v6324
    %v6657 = vpack.c.b16 %v6329, %v6325
    %v6658 = vpack.c.b16 %v6330, %v6326
    %v6659 = vpack.c.b16 %v6331, %v6327
    %v6660 = vpack.c.b16 %v6336, %v6332
    %v6661 = vpack.c.b16 %v6337, %v6333
    %v6662 = vpack.c.b16 %v6338, %v6334
    %v6663 = vpack.c.b16 %v6339, %v6335
    %v6664 = vpack.c.b16 %v6344, %v6340
    %v6665 = vpack.c.b16 %v6345, %v6341
    %v6666 = vpack.c.b16 %v6346, %v6342
    %v6667 = vpack.c.b16 %v6347, %v6343
    %v6668 = vpack.c.b16 %v6352, %v6348
    %v6669 = vpack.c.b16 %v6353, %v6349
    %v6670 = vpack.c.b16 %v6354, %v6350
    %v6671 = vpack.c.b16 %v6355, %v6351
    %v6672 = vpack.c.b16 %v6360, %v6356
    %v6673 = vpack.c.b16 %v6361, %v6357
    %v6674 = vpack.c.b16 %v6362, %v6358
    %v6675 = vpack.c.b16 %v6363, %v6359
    %v6676 = vpack.c.b16 %v6368, %v6364
    %v6677 = vpack.c.b16 %v6369, %v6365
    %v6678 = vpack.c.b16 %v6370, %v6366
    %v6679 = vpack.c.b16 %v6371, %v6367
    %v6680 = vpack.c.b16 %v6376, %v6372
    %v6681 = vpack.c.b16 %v6377, %v6373
    %v6682 = vpack.c.b16 %v6378, %v6374
    %v6683 = vpack.c.b16 %v6379, %v6375
    %v6684 = vpack.c.b16 %v6384, %v6380
    %v6685 = vpack.c.b16 %v6385, %v6381
    %v6686 = vpack.c.b16 %v6386, %v6382
    %v6687 = vpack.c.b16 %v6387, %v6383
    %v6688 = vpack.c.b16 %v6392, %v6388
    %v6689 = vpack.c.b16 %v6393, %v6389
    %v6690 = vpack.c.b16 %v6394, %v6390
    %v6691 = vpack.c.b16 %v6395, %v6391
    %v6692 = vpack.c.b16 %v6400, %v6396
    %v6693 = vpack.c.b16 %v6401, %v6397
    %v6694 = vpack.c.b16 %v6402, %v6398
    %v6695 = vpack.c.b16 %v6403, %v6399
    %v6696 = vpack.c.b16 %v6408, %v6404
    %v6697 = vpack.c.b16 %v6409, %v6405
    %v6698 = vpack.c.b16 %v6410, %v6406
    %v6699 = vpack.c.b16 %v6411, %v6407
    %v6700 = vpack.c.b16 %v6416, %v6412
    %v6701 = vpack.c.b16 %v6417, %v6413
    %v6702 = vpack.c.b16 %v6418, %v6414
    %v6703 = vpack.c.b16 %v6419, %v6415
    %v6704 = vpack.c.b16 %v6424, %v6420
    %v6705 = vpack.c.b16 %v6425, %v6421
    %v6706 = vpack.c.b16 %v6426, %v6422
    %v6707 = vpack.c.b16 %v6427, %v6423
    %v6708 = vpack.c.b16 %v6432, %v6428
    %v6709 = vpack.c.b16 %v6433, %v6429
    %v6710 = vpack.c.b16 %v6434, %v6430
    %v6711 = vpack.c.b16 %v6435, %v6431
    %v6712 = vpack.c.b16 %v6440, %v6436
    %v6713 = vpack.c.b16 %v6441, %v6437
    %v6714 = vpack.c.b16 %v6442, %v6438
    %v6715 = vpack.c.b16 %v6443, %v6439
    %v6716 = vpack.c.b16 %v6448, %v6444
    %v6717 = vpack.c.b16 %v6449, %v6445
    %v6718 = vpack.c.b16 %v6450, %v6446
    %v6719 = vpack.c.b16 %v6451, %v6447
    %v6720 = vpack.c.b16 %v6456, %v6452
    %v6721 = vpack.c.b16 %v6457, %v6453
    %v6722 = vpack.c.b16 %v6458, %v6454
    %v6723 = vpack.c.b16 %v6459, %v6455
    %v6724 = vpack.c.b16 %v6464, %v6460
    %v6725 = vpack.c.b16 %v6465, %v6461
    %v6726 = vpack.c.b16 %v6466, %v6462
    %v6727 = vpack.c.b16 %v6467, %v6463
    %v6728 = vpack.c.b16 %v6472, %v6468
    %v6729 = vpack.c.b16 %v6473, %v6469
    %v6730 = vpack.c.b16 %v6474, %v6470
    %v6731 = vpack.c.b16 %v6475, %v6471
    %6988 = vmatprep.subr.bf16.mxu0 %v6477
    %6989 = vmatpush1.bf16.msra.mxu0 %v6476
    %6990 = vmatprep.subr.bf16.mxu0 %v6481
    %6991 = vmatpush1.bf16.msra.mxu0 %v6480
    %6992 = vmatprep.subr.bf16.mxu0 %v6485
    %6993 = vmatpush1.bf16.msra.mxu0 %v6484
    %6994 = vmatprep.subr.bf16.mxu0 %v6489
    %6995 = vmatpush1.bf16.msra.mxu0 %v6488
    %6996 = vmatprep.subr.bf16.mxu0 %v6493
    %6997 = vmatpush1.bf16.msra.mxu0 %v6492
    %6998 = vmatprep.subr.bf16.mxu0 %v6497
    %6999 = vmatpush1.bf16.msra.mxu0 %v6496
    %7000 = vmatprep.subr.bf16.mxu0 %v6501
    %7001 = vmatpush1.bf16.msra.mxu0 %v6500
    %7002 = vmatprep.subr.bf16.mxu0 %v6505
    %7003 = vmatpush1.bf16.msra.mxu0 %v6504
    %7004 = vmatprep.subr.bf16.mxu0 %v6509
    %7005 = vmatpush1.bf16.msra.mxu0 %v6508
    %7006 = vmatprep.subr.bf16.mxu0 %v6513
    %7007 = vmatpush1.bf16.msra.mxu0 %v6512
    %7008 = vmatprep.subr.bf16.mxu0 %v6517
    %7009 = vmatpush1.bf16.msra.mxu0 %v6516
    %7010 = vmatprep.subr.bf16.mxu0 %v6521
    %7011 = vmatpush1.bf16.msra.mxu0 %v6520
    %7012 = vmatprep.subr.bf16.mxu0 %v6525
    %7013 = vmatpush1.bf16.msra.mxu0 %v6524
    %7014 = vmatprep.subr.bf16.mxu0 %v6529
    %7015 = vmatpush1.bf16.msra.mxu0 %v6528
    %7016 = vmatprep.subr.bf16.mxu0 %v6533
    %7017 = vmatpush1.bf16.msra.mxu0 %v6532
    %7018 = vmatprep.subr.bf16.mxu0 %v6537
    %7019 = vmatpush1.bf16.msra.mxu0 %v6536
    %7020 = vmatprep.mubr.bf16.mxu0 %v5423
    %7021 = vmatmul.mubr.bf16.gmra.mrb[0].mxu0 %v5422
    %v7022 = vpop.f32.mrb[0].mxu0
    %v7023 = vadd.f32 %v5691, %v7022
    %v7024 = vpop.f32.mrb[0].mxu0
    %v7025 = vadd.f32 %v5695, %v7024
    %v7026 = vpop.f32.mrb[0].mxu0
    %v7027 = vadd.f32 %v5691, %v7026
    %v7028 = vpop.f32.mrb[0].mxu0
    %v7029 = vadd.f32 %v5695, %v7028
    %7030 = vdwg.mxu0
    %7031 = vmatprep.subr.bf16.mxu0 %v6541
    %7032 = vmatpush1.bf16.msra.mxu0 %v6540
    %7033 = vmatprep.subr.bf16.mxu0 %v6545
    %7034 = vmatpush1.bf16.msra.mxu0 %v6544
    %7035 = vmatprep.subr.bf16.mxu0 %v6549
    %7036 = vmatpush1.bf16.msra.mxu0 %v6548
    %7037 = vmatprep.subr.bf16.mxu0 %v6553
    %7038 = vmatpush1.bf16.msra.mxu0 %v6552
    %7039 = vmatprep.subr.bf16.mxu0 %v6557
    %7040 = vmatpush1.bf16.msra.mxu0 %v6556
    %7041 = vmatprep.subr.bf16.mxu0 %v6561
    %7042 = vmatpush1.bf16.msra.mxu0 %v6560
    %7043 = vmatprep.subr.bf16.mxu0 %v6565
    %7044 = vmatpush1.bf16.msra.mxu0 %v6564
    %7045 = vmatprep.subr.bf16.mxu0 %v6569
    %7046 = vmatpush1.bf16.msra.mxu0 %v6568
    %7047 = vmatprep.subr.bf16.mxu0 %v6573
    %7048 = vmatpush1.bf16.msra.mxu0 %v6572
    %7049 = vmatprep.subr.bf16.mxu0 %v6577
    %7050 = vmatpush1.bf16.msra.mxu0 %v6576
    %7051 = vmatprep.subr.bf16.mxu0 %v6581
    %7052 = vmatpush1.bf16.msra.mxu0 %v6580
    %7053 = vmatprep.subr.bf16.mxu0 %v6585
    %7054 = vmatpush1.bf16.msra.mxu0 %v6584
    %7055 = vmatprep.subr.bf16.mxu0 %v6589
    %7056 = vmatpush1.bf16.msra.mxu0 %v6588
    %7057 = vmatprep.subr.bf16.mxu0 %v6593
    %7058 = vmatpush1.bf16.msra.mxu0 %v6592
    %7059 = vmatprep.subr.bf16.mxu0 %v6597
    %7060 = vmatpush1.bf16.msra.mxu0 %v6596
    %7061 = vmatprep.subr.bf16.mxu0 %v6601
    %7062 = vmatpush1.bf16.msra.mxu0 %v6600
    %7063 = vmatprep.mubr.bf16.mxu0 %v5425
    %7064 = vmatmul.mubr.bf16.gmra.mrb[0].mxu0 %v5424
    %v7065 = vpop.f32.mrb[0].mxu0
    %v7066 = vadd.f32 %v7023, %v7065
    %v7067 = vpop.f32.mrb[0].mxu0
    %v7068 = vadd.f32 %v7025, %v7067
    %v7069 = vpop.f32.mrb[0].mxu0
    %v7070 = vadd.f32 %v7027, %v7069
    %v7071 = vpop.f32.mrb[0].mxu0
    %v7072 = vadd.f32 %v7029, %v7071
    %7073 = vdwg.mxu0
    %7074 = vmatprep.subr.bf16.mxu0 %v6605
    %7075 = vmatpush1.bf16.msra.mxu0 %v6604
    %7076 = vmatprep.subr.bf16.mxu0 %v6609
    %7077 = vmatpush1.bf16.msra.mxu0 %v6608
    %7078 = vmatprep.subr.bf16.mxu0 %v6613
    %7079 = vmatpush1.bf16.msra.mxu0 %v6612
    %7080 = vmatprep.subr.bf16.mxu0 %v6617
    %7081 = vmatpush1.bf16.msra.mxu0 %v6616
    %7082 = vmatprep.subr.bf16.mxu0 %v6621
    %7083 = vmatpush1.bf16.msra.mxu0 %v6620
    %7084 = vmatprep.subr.bf16.mxu0 %v6625
    %7085 = vmatpush1.bf16.msra.mxu0 %v6624
    %7086 = vmatprep.subr.bf16.mxu0 %v6629
    %7087 = vmatpush1.bf16.msra.mxu0 %v6628
    %7088 = vmatprep.subr.bf16.mxu0 %v6633
    %7089 = vmatpush1.bf16.msra.mxu0 %v6632
    %7090 = vmatprep.subr.bf16.mxu0 %v6637
    %7091 = vmatpush1.bf16.msra.mxu0 %v6636
    %7092 = vmatprep.subr.bf16.mxu0 %v6641
    %7093 = vmatpush1.bf16.msra.mxu0 %v6640
    %7094 = vmatprep.subr.bf16.mxu0 %v6645
    %7095 = vmatpush1.bf16.msra.mxu0 %v6644
    %7096 = vmatprep.subr.bf16.mxu0 %v6649
    %7097 = vmatpush1.bf16.msra.mxu0 %v6648
    %7098 = vmatprep.subr.bf16.mxu0 %v6653
    %7099 = vmatpush1.bf16.msra.mxu0 %v6652
    %7100 = vmatprep.subr.bf16.mxu0 %v6657
    %7101 = vmatpush1.bf16.msra.mxu0 %v6656
    %7102 = vmatprep.subr.bf16.mxu0 %v6661
    %7103 = vmatpush1.bf16.msra.mxu0 %v6660
    %7104 = vmatprep.subr.bf16.mxu0 %v6665
    %7105 = vmatpush1.bf16.msra.mxu0 %v6664
    %7106 = vmatprep.mubr.bf16.mxu0 %v5427
    %7107 = vmatmul.mubr.bf16.gmra.mrb[0].mxu0 %v5426
    %v7108 = vpop.f32.mrb[0].mxu0
    %v7109 = vadd.f32 %v7066, %v7108
    %v7110 = vpop.f32.mrb[0].mxu0
    %v7111 = vadd.f32 %v7068, %v7110
    %v7112 = vpop.f32.mrb[0].mxu0
    %v7113 = vadd.f32 %v7070, %v7112
    %v7114 = vpop.f32.mrb[0].mxu0
    %v7115 = vadd.f32 %v7072, %v7114
    %7116 = vdwg.mxu0
    %7117 = vmatprep.subr.bf16.mxu0 %v6669
    %7118 = vmatpush1.bf16.msra.mxu0 %v6668
    %7119 = vmatprep.subr.bf16.mxu0 %v6673
    %7120 = vmatpush1.bf16.msra.mxu0 %v6672
    %7121 = vmatprep.subr.bf16.mxu0 %v6677
    %7122 = vmatpush1.bf16.msra.mxu0 %v6676
    %7123 = vmatprep.subr.bf16.mxu0 %v6681
    %7124 = vmatpush1.bf16.msra.mxu0 %v6680
    %7125 = vmatprep.subr.bf16.mxu0 %v6685
    %7126 = vmatpush1.bf16.msra.mxu0 %v6684
    %7127 = vmatprep.subr.bf16.mxu0 %v6689
    %7128 = vmatpush1.bf16.msra.mxu0 %v6688
    %7129 = vmatprep.subr.bf16.mxu0 %v6693
    %7130 = vmatpush1.bf16.msra.mxu0 %v6692
    %7131 = vmatprep.subr.bf16.mxu0 %v6697
    %7132 = vmatpush1.bf16.msra.mxu0 %v6696
    %7133 = vmatprep.subr.bf16.mxu0 %v6701
    %7134 = vmatpush1.bf16.msra.mxu0 %v6700
    %7135 = vmatprep.subr.bf16.mxu0 %v6705
    %7136 = vmatpush1.bf16.msra.mxu0 %v6704
    %7137 = vmatprep.subr.bf16.mxu0 %v6709
    %7138 = vmatpush1.bf16.msra.mxu0 %v6708
    %7139 = vmatprep.subr.bf16.mxu0 %v6713
    %7140 = vmatpush1.bf16.msra.mxu0 %v6712
    %7141 = vmatprep.subr.bf16.mxu0 %v6717
    %7142 = vmatpush1.bf16.msra.mxu0 %v6716
    %7143 = vmatprep.subr.bf16.mxu0 %v6721
    %7144 = vmatpush1.bf16.msra.mxu0 %v6720
    %7145 = vmatprep.subr.bf16.mxu0 %v6725
    %7146 = vmatpush1.bf16.msra.mxu0 %v6724
    %7147 = vmatprep.subr.bf16.mxu0 %v6729
    %7148 = vmatpush1.bf16.msra.mxu0 %v6728
    %7149 = vmatprep.mubr.bf16.mxu0 %v5429
    %7150 = vmatmul.mubr.bf16.gmra.mrb[0].mxu0 %v5428
    %v7151 = vpop.f32.mrb[0].mxu0
    %v7152 = vadd.f32 %v7109, %v7151
    %v7153 = vpop.f32.mrb[0].mxu0
    %v7154 = vadd.f32 %v7111, %v7153
    %v7155 = vpop.f32.mrb[0].mxu0
    %v7156 = vadd.f32 %v7113, %v7155
    %v7157 = vpop.f32.mrb[0].mxu0
    %v7158 = vadd.f32 %v7115, %v7157
    %7159 = vdwg.mxu0
    %7160 = vmatprep.subr.bf16.mxu0 %v6479
    %7161 = vmatpush1.bf16.msra.mxu0 %v6478
    %7162 = vmatprep.subr.bf16.mxu0 %v6483
    %7163 = vmatpush1.bf16.msra.mxu0 %v6482
    %7164 = vmatprep.subr.bf16.mxu0 %v6487
    %7165 = vmatpush1.bf16.msra.mxu0 %v6486
    %7166 = vmatprep.subr.bf16.mxu0 %v6491
    %7167 = vmatpush1.bf16.msra.mxu0 %v6490
    %7168 = vmatprep.subr.bf16.mxu0 %v6495
    %7169 = vmatpush1.bf16.msra.mxu0 %v6494
    %7170 = vmatprep.subr.bf16.mxu0 %v6499
    %7171 = vmatpush1.bf16.msra.mxu0 %v6498
    %7172 = vmatprep.subr.bf16.mxu0 %v6503
    %7173 = vmatpush1.bf16.msra.mxu0 %v6502
    %7174 = vmatprep.subr.bf16.mxu0 %v6507
    %7175 = vmatpush1.bf16.msra.mxu0 %v6506
    %7176 = vmatprep.subr.bf16.mxu0 %v6511
    %7177 = vmatpush1.bf16.msra.mxu0 %v6510
    %7178 = vmatprep.subr.bf16.mxu0 %v6515
    %7179 = vmatpush1.bf16.msra.mxu0 %v6514
    %7180 = vmatprep.subr.bf16.mxu0 %v6519
    %7181 = vmatpush1.bf16.msra.mxu0 %v6518
    %7182 = vmatprep.subr.bf16.mxu0 %v6523
    %7183 = vmatpush1.bf16.msra.mxu0 %v6522
    %7184 = vmatprep.subr.bf16.mxu0 %v6527
    %7185 = vmatpush1.bf16.msra.mxu0 %v6526
    %7186 = vmatprep.subr.bf16.mxu0 %v6531
    %7187 = vmatpush1.bf16.msra.mxu0 %v6530
    %7188 = vmatprep.subr.bf16.mxu0 %v6535
    %7189 = vmatpush1.bf16.msra.mxu0 %v6534
    %7190 = vmatprep.subr.bf16.mxu0 %v6539
    %7191 = vmatpush1.bf16.msra.mxu0 %v6538
    %7192 = vmatprep.mubr.bf16.mxu0 %v5423
    %7193 = vmatmul.mubr.bf16.gmra.mrb[0].mxu0 %v5422
    %v7194 = vpop.f32.mrb[0].mxu0
    %v7195 = vadd.f32 %v5699, %v7194
    %v7196 = vpop.f32.mrb[0].mxu0
    %v7197 = vadd.f32 %v5703, %v7196
    %v7198 = vpop.f32.mrb[0].mxu0
    %v7199 = vadd.f32 %v5699, %v7198
    %v7200 = vpop.f32.mrb[0].mxu0
    %v7201 = vadd.f32 %v5703, %v7200
    %7202 = vdwg.mxu0
    %7203 = vmatprep.subr.bf16.mxu0 %v6543
    %7204 = vmatpush1.bf16.msra.mxu0 %v6542
    %7205 = vmatprep.subr.bf16.mxu0 %v6547
    %7206 = vmatpush1.bf16.msra.mxu0 %v6546
    %7207 = vmatprep.subr.bf16.mxu0 %v6551
    %7208 = vmatpush1.bf16.msra.mxu0 %v6550
    %7209 = vmatprep.subr.bf16.mxu0 %v6555
    %7210 = vmatpush1.bf16.msra.mxu0 %v6554
    %7211 = vmatprep.subr.bf16.mxu0 %v6559
    %7212 = vmatpush1.bf16.msra.mxu0 %v6558
    %7213 = vmatprep.subr.bf16.mxu0 %v6563
    %7214 = vmatpush1.bf16.msra.mxu0 %v6562
    %7215 = vmatprep.subr.bf16.mxu0 %v6567
    %7216 = vmatpush1.bf16.msra.mxu0 %v6566
    %7217 = vmatprep.subr.bf16.mxu0 %v6571
    %7218 = vmatpush1.bf16.msra.mxu0 %v6570
    %7219 = vmatprep.subr.bf16.mxu0 %v6575
    %7220 = vmatpush1.bf16.msra.mxu0 %v6574
    %7221 = vmatprep.subr.bf16.mxu0 %v6579
    %7222 = vmatpush1.bf16.msra.mxu0 %v6578
    %7223 = vmatprep.subr.bf16.mxu0 %v6583
    %7224 = vmatpush1.bf16.msra.mxu0 %v6582
    %7225 = vmatprep.subr.bf16.mxu0 %v6587
    %7226 = vmatpush1.bf16.msra.mxu0 %v6586
    %7227 = vmatprep.subr.bf16.mxu0 %v6591
    %7228 = vmatpush1.bf16.msra.mxu0 %v6590
    %7229 = vmatprep.subr.bf16.mxu0 %v6595
    %7230 = vmatpush1.bf16.msra.mxu0 %v6594
    %7231 = vmatprep.subr.bf16.mxu0 %v6599
    %7232 = vmatpush1.bf16.msra.mxu0 %v6598
    %7233 = vmatprep.subr.bf16.mxu0 %v6603
    %7234 = vmatpush1.bf16.msra.mxu0 %v6602
    %7235 = vmatprep.mubr.bf16.mxu0 %v5425
    %7236 = vmatmul.mubr.bf16.gmra.mrb[0].mxu0 %v5424
    %v7237 = vpop.f32.mrb[0].mxu0
    %v7238 = vadd.f32 %v7195, %v7237
    %v7239 = vpop.f32.mrb[0].mxu0
    %v7240 = vadd.f32 %v7197, %v7239
    %v7241 = vpop.f32.mrb[0].mxu0
    %v7242 = vadd.f32 %v7199, %v7241
    %v7243 = vpop.f32.mrb[0].mxu0
    %v7244 = vadd.f32 %v7201, %v7243
    %7245 = vdwg.mxu0
    %7246 = vmatprep.subr.bf16.mxu0 %v6607
    %7247 = vmatpush1.bf16.msra.mxu0 %v6606
    %7248 = vmatprep.subr.bf16.mxu0 %v6611
    %7249 = vmatpush1.bf16.msra.mxu0 %v6610
    %7250 = vmatprep.subr.bf16.mxu0 %v6615
    %7251 = vmatpush1.bf16.msra.mxu0 %v6614
    %7252 = vmatprep.subr.bf16.mxu0 %v6619
    %7253 = vmatpush1.bf16.msra.mxu0 %v6618
    %7254 = vmatprep.subr.bf16.mxu0 %v6623
    %7255 = vmatpush1.bf16.msra.mxu0 %v6622
    %7256 = vmatprep.subr.bf16.mxu0 %v6627
    %7257 = vmatpush1.bf16.msra.mxu0 %v6626
    %7258 = vmatprep.subr.bf16.mxu0 %v6631
    %7259 = vmatpush1.bf16.msra.mxu0 %v6630
    %7260 = vmatprep.subr.bf16.mxu0 %v6635
    %7261 = vmatpush1.bf16.msra.mxu0 %v6634
    %7262 = vmatprep.subr.bf16.mxu0 %v6639
    %7263 = vmatpush1.bf16.msra.mxu0 %v6638
    %7264 = vmatprep.subr.bf16.mxu0 %v6643
    %7265 = vmatpush1.bf16.msra.mxu0 %v6642
    %7266 = vmatprep.subr.bf16.mxu0 %v6647
    %7267 = vmatpush1.bf16.msra.mxu0 %v6646
    %7268 = vmatprep.subr.bf16.mxu0 %v6651
    %7269 = vmatpush1.bf16.msra.mxu0 %v6650
    %7270 = vmatprep.subr.bf16.mxu0 %v6655
    %7271 = vmatpush1.bf16.msra.mxu0 %v6654
    %7272 = vmatprep.subr.bf16.mxu0 %v6659
    %7273 = vmatpush1.bf16.msra.mxu0 %v6658
    %7274 = vmatprep.subr.bf16.mxu0 %v6663
    %7275 = vmatpush1.bf16.msra.mxu0 %v6662
    %7276 = vmatprep.subr.bf16.mxu0 %v6667
    %7277 = vmatpush1.bf16.msra.mxu0 %v6666
    %7278 = vmatprep.mubr.bf16.mxu0 %v5427
    %7279 = vmatmul.mubr.bf16.gmra.mrb[0].mxu0 %v5426
    %v7280 = vpop.f32.mrb[0].mxu0
    %v7281 = vadd.f32 %v7238, %v7280
    %v7282 = vpop.f32.mrb[0].mxu0
    %v7283 = vadd.f32 %v7240, %v7282
    %v7284 = vpop.f32.mrb[0].mxu0
    %v7285 = vadd.f32 %v7242, %v7284
    %v7286 = vpop.f32.mrb[0].mxu0
    %v7287 = vadd.f32 %v7244, %v7286
    %7288 = vdwg.mxu0
    %7289 = vmatprep.subr.bf16.mxu0 %v6671
    %7290 = vmatpush1.bf16.msra.mxu0 %v6670
    %7291 = vmatprep.subr.bf16.mxu0 %v6675
    %7292 = vmatpush1.bf16.msra.mxu0 %v6674
    %7293 = vmatprep.subr.bf16.mxu0 %v6679
    %7294 = vmatpush1.bf16.msra.mxu0 %v6678
    %7295 = vmatprep.subr.bf16.mxu0 %v6683
    %7296 = vmatpush1.bf16.msra.mxu0 %v6682
    %7297 = vmatprep.subr.bf16.mxu0 %v6687
    %7298 = vmatpush1.bf16.msra.mxu0 %v6686
    %7299 = vmatprep.subr.bf16.mxu0 %v6691
    %7300 = vmatpush1.bf16.msra.mxu0 %v6690
    %7301 = vmatprep.subr.bf16.mxu0 %v6695
    %7302 = vmatpush1.bf16.msra.mxu0 %v6694
    %7303 = vmatprep.subr.bf16.mxu0 %v6699
    %7304 = vmatpush1.bf16.msra.mxu0 %v6698
    %7305 = vmatprep.subr.bf16.mxu0 %v6703
    %7306 = vmatpush1.bf16.msra.mxu0 %v6702
    %7307 = vmatprep.subr.bf16.mxu0 %v6707
    %7308 = vmatpush1.bf16.msra.mxu0 %v6706
    %7309 = vmatprep.subr.bf16.mxu0 %v6711
    %7310 = vmatpush1.bf16.msra.mxu0 %v6710
    %7311 = vmatprep.subr.bf16.mxu0 %v6715
    %7312 = vmatpush1.bf16.msra.mxu0 %v6714
    %7313 = vmatprep.subr.bf16.mxu0 %v6719
    %7314 = vmatpush1.bf16.msra.mxu0 %v6718
    %7315 = vmatprep.subr.bf16.mxu0 %v6723
    %7316 = vmatpush1.bf16.msra.mxu0 %v6722
    %7317 = vmatprep.subr.bf16.mxu0 %v6727
    %7318 = vmatpush1.bf16.msra.mxu0 %v6726
    %7319 = vmatprep.subr.bf16.mxu0 %v6731
    %7320 = vmatpush1.bf16.msra.mxu0 %v6730
    %7321 = vmatprep.mubr.bf16.mxu0 %v5429
    %7322 = vmatmul.mubr.bf16.gmra.mrb[0].mxu0 %v5428
    %v7323 = vpop.f32.mrb[0].mxu0
    %v7324 = vadd.f32 %v7281, %v7323
    %v7325 = vpop.f32.mrb[0].mxu0
    %v7326 = vadd.f32 %v7283, %v7325
    %v7327 = vpop.f32.mrb[0].mxu0
    %v7328 = vadd.f32 %v7285, %v7327
    %v7329 = vpop.f32.mrb[0].mxu0
    %v7330 = vadd.f32 %v7287, %v7329
    %7331 = vdwg.mxu0
    %v7332 = vmax.f32 %v7152, 0.0
    %v7333 = vmax.f32 %v7154, 0.0
    %v7334 = vmax.f32 %v7324, 0.0
    %v7335 = vmax.f32 %v7326, 0.0
    %v7336 = vmax.f32 %v7156, 0.0
    %v7337 = vmax.f32 %v7158, 0.0
    %v7338 = vmax.f32 %v7328, 0.0
    %v7339 = vmax.f32 %v7330, 0.0
    %v7340 = vld [vmem:[#allocation14] sm:$0xf]
    %v7341 = vunpack.c.l.bf16 %v7340
    %v7343 = vlaneseq
    %v7344 = vshrl.u32 %v7343, 7
    %v7345 = vsub.s32 0, %v7344
    %v7346 = vrot.slane %v7341, %v7345
    %v7347 = vlaneseq
    %v7348 = vshrl.u32 %v7347, 7
    %v7349 = vsub.s32 2, %v7348
    %v7350 = vrot.slane %v7341, %v7349
    %v7351 = vlaneseq
    %v7352 = vshrl.u32 %v7351, 7
    %v7353 = vsub.s32 4, %v7352
    %v7354 = vrot.slane %v7341, %v7353
    %v7355 = vlaneseq
    %v7356 = vshrl.u32 %v7355, 7
    %v7357 = vsub.s32 6, %v7356
    %v7358 = vrot.slane %v7341, %v7357
    %v7363 = vlaneseq
    %v7364 = vshrl.u32 %v7363, 7
    %v7365 = vsub.s32 0, %v7364
    %v7366 = vrot.slane %v7346, %v7365
    %v7367 = vlaneseq
    %v7368 = vshrl.u32 %v7367, 7
    %v7369 = vsub.s32 0, %v7368
    %v7370 = vrot.slane %v7350, %v7369
    %v7371 = vlaneseq
    %v7372 = vshrl.u32 %v7371, 7
    %v7373 = vsub.s32 0, %v7372
    %v7374 = vrot.slane %v7354, %v7373
    %v7375 = vlaneseq
    %v7376 = vshrl.u32 %v7375, 7
    %v7377 = vsub.s32 0, %v7376
    %v7378 = vrot.slane %v7358, %v7377
    %v7379 = vmul.f32 %v7332, %v7366
    %v7380 = vmul.f32 %v7333, %v7370
    %v7381 = vmul.f32 %v7334, %v7374
    %v7382 = vmul.f32 %v7335, %v7378
    %v7383 = vmul.f32 %v7336, %v7366
    %v7384 = vmul.f32 %v7337, %v7370
    %v7385 = vmul.f32 %v7338, %v7374
    %v7386 = vmul.f32 %v7339, %v7378
    %v7387 = vadd.f32 %v7379, %v7380
    %v7388 = vadd.f32 %v7387, %v7381
    %v7389 = vadd.f32 %v7388, %v7382
    %7390 = vadd.xlane.f32.xlu0 %v7389
    %v7391 = vpop.xlane.xlu0 %7390
    %v7392 = vadd.f32 %v7383, %v7384
    %v7393 = vadd.f32 %v7392, %v7385
    %v7394 = vadd.f32 %v7393, %v7386
    %7395 = vadd.xlane.f32.xlu0 %v7394
    %v7396 = vpop.xlane.xlu0 %7395
    %v7397 = vld [vmem:[#allocation2] sm:$0x1]
    %v7399 = vlaneseq
    %v7400 = vshrl.u32 %v7399, 7
    %v7401 = vsub.s32 0, %v7400
    %v7402 = vrot.slane %v7397, %v7401
    %v7404 = vadd.f32 %v7391, %v7402
    %v7405 = vadd.f32 %v7396, %v7402
    %v7406 = vmax.f32 %v7404, 0.0
    %v7407 = vmax.f32 %v7405, 0.0
    %vm7408 = vcmask 7168
    %7409 = vst.msk [vmem:[%s11] sm:$0xff] %vm7408, %v7406
    %7410 = vst.msk [vmem:[%s11 + $0x8] sm:$0xff] %vm7408, %v7407
    %v7411 = vxor.u32 %v7404, 2147483648
    %v7412 = vxor.u32 %v7405, 2147483648
    %v7413 = vmul.f32 %v7411, 1.442695
    %v7414 = vpow.pop %v7413
    %v7415 = vmul.f32 %v7412, 1.442695
    %v7416 = vpow.pop %v7415
    %v7417 = vadd.f32 %v7414, 1.0
    %v7418 = vadd.f32 %v7416, 1.0
    %v7419 = vrcp.pop %v7417
    %v7420 = vmul.f32 1.0, %v7419
    %v7421 = vrcp.pop %v7418
    %v7422 = vmul.f32 1.0, %v7421
    %7423 = vst.msk [vmem:[%s12] sm:$0xff] %vm7408, %v7420
    %7424 = vst.msk [vmem:[%s12 + $0x8] sm:$0xff] %vm7408, %v7422
    // Predicated region
    $region78: #{pcnet_rdkit_forward.1} parent=1 // pred_check
      _
    $region79: #{pcnet_rdkit_forward.1} parent=1 // pred_check_branch
      %7426 = sbr.rel (0) target = $region81
    $region80: #{pcnet_rdkit_forward.1} parent=1 // pred_region
      _
    $region81: #{pcnet_rdkit_forward.1} parent=1 // pred_fallthru
      _
    // Predicated region
    $region82: #{pcnet_rdkit_forward.1} parent=1 // pred_check
      _
    $region83: #{pcnet_rdkit_forward.1} parent=1 // pred_check_branch
      %7428 = sbr.rel (0) target = $region85
    $region84: #{pcnet_rdkit_forward.1} parent=1 // pred_region
      _
    $region85: #{pcnet_rdkit_forward.1} parent=1 // pred_fallthru
      _
    // Predicated region
    $region86: #{pcnet_rdkit_forward.1} parent=1 // pred_check
      _
    $region87: #{pcnet_rdkit_forward.1} parent=1 // pred_check_branch
      %7430 = sbr.rel (0) target = $region89
    $region88: #{pcnet_rdkit_forward.1} parent=1 // pred_region
      _
    $region89: #{pcnet_rdkit_forward.1} parent=1 // pred_fallthru
      _
    // Predicated region
    $region90: #{pcnet_rdkit_forward.1} parent=1 // pred_check
      _
    $region91: #{pcnet_rdkit_forward.1} parent=1 // pred_check_branch
      %7432 = sbr.rel (0) target = $region93
    $region92: #{pcnet_rdkit_forward.1} parent=1 // pred_region
      _
    $region93: #{pcnet_rdkit_forward.1} parent=1 // pred_fallthru
      _
    %7433 = vsyncpa [#allocation4], 1
    %7434 = vsyncpa [#allocation6], 1
    %7435 = vsyncpa [#allocation9], 1
    %7436 = vsyncpa [#allocation12], 1
    %7437 = vsyncpa [#allocation15], 1

</llo_original>
